<compile_context>
chip_gen: v7x
topology: tpu7x:2x2x1
jax: 0.10.0
libtpu: 0.0.40
codegen_flags: <defaults>
</compile_context>

<pallas_src>
from collections import OrderedDict

import jax
import jax.numpy as jnp
from jax.experimental import pallas as pl
from jax.experimental.pallas import tpu as pltpu

# ----------------------------- dimensions -----------------------------------
D = 128            # hidden / stream dim
F_PAD = 384        # padded flattened state-feature dim (multiple of 128)
N_ACTION_TYPES = 3
N_MOVES = 4
N_SWITCHES = 6
N_FLAGS = 5        # normal / mega / zmove / max / tera
N_CORE_BLOCKS = 2
TB = 128           # batch tile (multiple of 16 for bf16; use 256 on v7x)

STATE_FLOAT_FIELDS = [
    "sides", "boosts", "volatiles", "side_conditions", "pseudoweathers",
    "weather", "wisher", "scalars", "hist", "choices_done",
]

# lane layout of the packed logits / mask / log-policy slabs
AT_OFF, FLAG_OFF, SWITCH_OFF, MOVE_OFF = 0, 3, 8, 14
SEGMENTS = ((AT_OFF, N_ACTION_TYPES), (FLAG_OFF, N_FLAGS),
            (SWITCH_OFF, N_SWITCHES), (MOVE_OFF, N_MOVES))

# column layout of the fused (D, W_D_N) bf16 weight slab
CORE_W = 0                                # 2*N_CORE_BLOCKS x (D, D)
WA = CORE_W + 2 * N_CORE_BLOCKS * D       # [sat_w_eff | atv_w1]
WB = WA + 2 * D                           # [sfe_w_eff | flv_w1 | swv_w1]
WC = WB + 3 * D                           # [mvv_w1]
WLOG_STATE = WC + D                       # at_w at lanes [AT_OFF:)
WLOG_SAT = WLOG_STATE + D                 # flag_w / switch_w at their lanes
WLOG_SFE = WLOG_SAT + D                   # move_w at its lanes
WVAL_AT = WLOG_SFE + D                    # atv_w2 -> lane 0
WVAL_FL = WVAL_AT + D                     # flv_w2 -> lane 1
WVAL_MV = WVAL_FL + D                     # mvv_w2 -> lane 2
WVAL_SW = WVAL_MV + D                     # swv_w2 -> lane 3
W_D_N = WVAL_SW + D                       # 2176

# column layout of the fused (1, BIAS_N) f32 bias slab
ENC_B = 0
CORE_B = ENC_B + D
BA = CORE_B + 2 * N_CORE_BLOCKS * D
BB = BA + 2 * D
BC = BB + 3 * D
BLOG = BC + D
BVAL = BLOG + D
BIAS_N = BVAL + D                         # 1664

# column layout of the packed (B, OUT_N) f32 output slab
OUT_LOGITS = 0
OUT_LOGPOL = OUT_LOGITS + D
OUT_VALUES = OUT_LOGPOL + D
OUT_SAT = OUT_VALUES + D
OUT_SFE = OUT_SAT + D
OUT_N = OUT_SFE + D                       # 640


# ----------------------------- parameters -----------------------------------
def _param_shapes():
    shapes = [("enc_w", (F_PAD, D)), ("enc_b", (1, D))]
    for i in range(N_CORE_BLOCKS):
        shapes += [
            (f"core{i}_w1", (D, D)), (f"core{i}_b1", (1, D)),
            (f"core{i}_w2", (D, D)), (f"core{i}_b2", (1, D)),
        ]
    shapes += [
        ("at_w", (D, N_ACTION_TYPES)), ("at_b", (1, N_ACTION_TYPES)),
        ("sat_w", (D, D)), ("sat_we", (N_ACTION_TYPES, D)), ("sat_b", (1, D)),
        ("flag_w", (D, N_FLAGS)), ("flag_b", (1, N_FLAGS)),
        ("sfe_w", (D, D)), ("sfe_we", (N_FLAGS, D)), ("sfe_b", (1, D)),
        ("move_w", (D, N_MOVES)), ("move_b", (1, N_MOVES)),
        ("switch_w", (D, N_SWITCHES)), ("switch_b", (1, N_SWITCHES)),
    ]
    for head in ("atv", "flv", "mvv", "swv"):   # 4 ValueHeads
        shapes += [
            (f"{head}_w1", (D, D)), (f"{head}_b1", (1, D)),
            (f"{head}_w2", (D, 1)), (f"{head}_b2", (1, 1)),
        ]
    return shapes


def init_params(key):
    params = {}
    shapes = _param_shapes()
    keys = jax.random.split(key, len(shapes))
    for k, (name, shape) in zip(keys, shapes):
        if "_b" in name:  # biases
            params[name] = jnp.zeros(shape, jnp.float32)
        else:
            fan_in = shape[0]
            params[name] = (
                jax.random.normal(k, shape, jnp.float32) / jnp.sqrt(float(fan_in))
            )
    return params


def pack_params(params):
    """Pack the ~40 raw parameter arrays into 3 lane-dense kernel inputs."""
    f32 = jnp.float32
    # Fold the tiny K=3 / K=5 "logit feedback" matmuls into the preceding
    # linear layer (exact algebra: dot(at_logits, sat_we) ==
    # state_emb @ (at_w @ sat_we) + at_b @ sat_we).
    sat_w_eff = params["sat_w"] + params["at_w"] @ params["sat_we"]
    sat_b_eff = params["sat_b"] + params["at_b"] @ params["sat_we"]
    sfe_w_eff = params["sfe_w"] + params["flag_w"] @ params["sfe_we"]
    sfe_b_eff = params["sfe_b"] + params["flag_b"] @ params["sfe_we"]

    w_pieces, b_pieces = [], [(params["enc_b"], ENC_B)]
    for i in range(N_CORE_BLOCKS):
        w_pieces += [(params[f"core{i}_w1"], CORE_W + (2 * i) * D),
                     (params[f"core{i}_w2"], CORE_W + (2 * i + 1) * D)]
        b_pieces += [(params[f"core{i}_b1"], CORE_B + (2 * i) * D),
                     (params[f"core{i}_b2"], CORE_B + (2 * i + 1) * D)]
    w_pieces += [
        (sat_w_eff, WA), (params["atv_w1"], WA + D),
        (sfe_w_eff, WB), (params["flv_w1"], WB + D), (params["swv_w1"], WB + 2 * D),
        (params["mvv_w1"], WC),
        (params["at_w"], WLOG_STATE + AT_OFF),
        (params["flag_w"], WLOG_SAT + FLAG_OFF),
        (params["switch_w"], WLOG_SAT + SWITCH_OFF),
        (params["move_w"], WLOG_SFE + MOVE_OFF),
        (params["atv_w2"], WVAL_AT + 0),
        (params["flv_w2"], WVAL_FL + 1),
        (params["mvv_w2"], WVAL_MV + 2),
        (params["swv_w2"], WVAL_SW + 3),
    ]
    b_pieces += [
        (sat_b_eff, BA), (params["atv_b1"], BA + D),
        (sfe_b_eff, BB), (params["flv_b1"], BB + D), (params["swv_b1"], BB + 2 * D),
        (params["mvv_b1"], BC),
        (params["at_b"], BLOG + AT_OFF),
        (params["flag_b"], BLOG + FLAG_OFF),
        (params["switch_b"], BLOG + SWITCH_OFF),
        (params["move_b"], BLOG + MOVE_OFF),
        (params["atv_b2"], BVAL + 0),
        (params["flv_b2"], BVAL + 1),
        (params["mvv_b2"], BVAL + 2),
        (params["swv_b2"], BVAL + 3),
    ]
    w_d = jnp.zeros((D, W_D_N), f32)
    for arr, col in w_pieces:
        w_d = w_d.at[:, col:col + arr.shape[1]].set(arr.astype(f32))
    bias = jnp.zeros((1, BIAS_N), f32)
    for arr, col in b_pieces:
        bias = bias.at[:, col:col + arr.shape[1]].set(arr.astype(f32))
    return {
        "enc_w": params["enc_w"].astype(jnp.bfloat16),
        "w_d": w_d.astype(jnp.bfloat16),
        "bias": bias,                       # keep biases / logits math in f32
    }


# ------------------------------- kernel -------------------------------------
def nash_ketchum_kernel(x_ref, mask_ref, enc_w_ref, w_d_ref, bias_ref, out_ref):
    f32 = jnp.float32
    bf16 = jnp.bfloat16

    def w(col, width):                 # bf16 weight slice (128-lane aligned)
        return w_d_ref[:, col:col + width]

    def b(col, width):                 # f32 bias slice (128-lane aligned)
        return bias_ref[:, col:col + width]

    def dot(a, wt):
        return jnp.dot(a, wt, preferred_element_type=f32)

    relu = lambda v: jnp.maximum(v, 0.0)

    # ------------------ Encoder ------------------
    h = relu(dot(x_ref[...], enc_w_ref[...]) + b(ENC_B, D))     # f32 (TB, D)

    # ------------------ ResNet core --------------
    # TODO(synk): pre-activation residual ordering reproduces the previous
    #             version; swap in the exact Core block if its source appears.
    for i in range(N_CORE_BLOCKS):
        y = dot(relu(h).astype(bf16), w(CORE_W + 2 * i * D, D)) \
            + b(CORE_B + 2 * i * D, D)
        y = dot(relu(y).astype(bf16), w(CORE_W + (2 * i + 1) * D, D)) \
            + b(CORE_B + (2 * i + 1) * D, D)
        h = h + y
    state_emb = relu(h)
    state_bf = state_emb.astype(bf16)

    # ---------- Fused policy / value hidden layers (lane-dense MXU) ---------
    yA = dot(state_bf, w(WA, 2 * D)) + b(BA, 2 * D)
    sat_emb = relu(yA[:, 0:D])                 # state_action_type_embedding
    atv_hid = relu(yA[:, D:2 * D]).astype(bf16)
    sat_bf = sat_emb.astype(bf16)

    yB = dot(sat_bf, w(WB, 3 * D)) + b(BB, 3 * D)
    sfe_emb = relu(yB[:, 0:D])                 # state_flag_embedding
    flv_hid = relu(yB[:, D:2 * D]).astype(bf16)
    swv_hid = relu(yB[:, 2 * D:3 * D]).astype(bf16)
    sfe_bf = sfe_emb.astype(bf16)

    mvv_hid = relu(dot(sfe_bf, w(WC, D)) + b(BC, D)).astype(bf16)

    # ---------- Lane-packed logits / value slabs (f32) ----------
    logits = (dot(state_bf, w(WLOG_STATE, D)) + dot(sat_bf, w(WLOG_SAT, D))
              + dot(sfe_bf, w(WLOG_SFE, D)) + b(BLOG, D))
    values = (dot(atv_hid, w(WVAL_AT, D)) + dot(flv_hid, w(WVAL_FL, D))
              + dot(mvv_hid, w(WVAL_MV, D)) + dot(swv_hid, w(WVAL_SW, D))
              + b(BVAL, D))

    # ---------- Masked log-softmax, per head segment, on the packed slab ----
    mask = mask_ref[...]
    valid = mask > 0.5
    neg = jnp.full_like(logits, -1e30)
    masked = jnp.where(valid, logits, neg)
    lane = jax.lax.broadcasted_iota(jnp.int32, logits.shape, 1)
    lse_slab = jnp.zeros_like(logits)
    for off, width in SEGMENTS:
        seg = (lane >= off) & (lane < off + width)
        seg_masked = jnp.where(seg, masked, neg)
        m = jnp.max(seg_masked, axis=-1, keepdims=True)
        e = jnp.where(seg & valid, jnp.exp(masked - m), 0.0)
        lse = jnp.log(jnp.sum(e, axis=-1, keepdims=True)) + m
        lse_slab = jnp.where(seg, lse, lse_slab)
    logpol = jnp.where(valid, logits - lse_slab, 0.0)

    # ---------- Single lane-dense output slab ----------
    out_ref[:, OUT_LOGITS:OUT_LOGITS + D] = logits
    out_ref[:, OUT_LOGPOL:OUT_LOGPOL + D] = logpol
    out_ref[:, OUT_VALUES:OUT_VALUES + D] = values
    out_ref[:, OUT_SAT:OUT_SAT + D] = sat_emb
    out_ref[:, OUT_SFE:OUT_SFE + D] = sfe_emb


# ------------------------------- wrapper -------------------------------------
def build_features(state):
    """Flatten + concat all non-mask state fields, zero-pad to F_PAD lanes."""
    b = state["sides"].shape[0]
    feats = [state[k].reshape(b, -1).astype(jnp.float32) for k in STATE_FLOAT_FIELDS]
    x = jnp.concatenate(feats, axis=-1)
    pad = F_PAD - x.shape[-1]
    assert pad >= 0, "feature dim exceeds F_PAD"
    return jnp.pad(x, ((0, 0), (0, pad)))


def pack_masks(state, b_pad):
    b = state["action_type_mask"].shape[0]
    mask = jnp.zeros((b_pad, D), jnp.float32)
    for name, off, width in (("action_type_mask", AT_OFF, N_ACTION_TYPES),
                             ("flag_mask", FLAG_OFF, N_FLAGS),
                             ("switch_mask", SWITCH_OFF, N_SWITCHES),
                             ("move_mask", MOVE_OFF, N_MOVES)):
        mask = mask.at[:b, off:off + width].set(state[name].astype(jnp.float32))
    return mask


def nash_ketchum_forward(state, packed, *, tb=TB):
    x = build_features(state)
    b = x.shape[0]
    b_pad = ((b + tb - 1) // tb) * tb
    x = jnp.pad(x, ((0, b_pad - b), (0, 0))).astype(jnp.bfloat16)
    mask = pack_masks(state, b_pad)

    out = pl.pallas_call(
        nash_ketchum_kernel,
        out_shape=jax.ShapeDtypeStruct((b_pad, OUT_N), jnp.float32),
        grid=(b_pad // tb,),
        in_specs=[
            pl.BlockSpec((tb, F_PAD), lambda i: (i, 0)),   # x (batch-tiled)
            pl.BlockSpec((tb, D), lambda i: (i, 0)),       # packed masks
            pl.BlockSpec((F_PAD, D), lambda i: (0, 0)),    # enc_w  (resident)
            pl.BlockSpec((D, W_D_N), lambda i: (0, 0)),    # fused weight slab
            pl.BlockSpec((1, BIAS_N), lambda i: (0, 0)),   # fused bias slab
        ],
        out_specs=pl.BlockSpec((tb, OUT_N), lambda i: (i, 0)),
        compiler_params=pltpu.CompilerParams(
            dimension_semantics=("parallel",)),            # 2x on v7x megacore
    )(x, mask, packed["enc_w"], packed["w_d"], packed["bias"])

    slab = out[:b]
    logits = slab[:, OUT_LOGITS:OUT_LOGITS + D]
    logpol = slab[:, OUT_LOGPOL:OUT_LOGPOL + D]
    values = slab[:, OUT_VALUES:OUT_VALUES + D]

    def seg(a, off, width):
        return a[:, off:off + width]

    return OrderedDict(
        action_type_logits=seg(logits, AT_OFF, N_ACTION_TYPES),
        flag_logits=seg(logits, FLAG_OFF, N_FLAGS),
        move_logits=seg(logits, MOVE_OFF, N_MOVES),
        switch_logits=seg(logits, SWITCH_OFF, N_SWITCHES),
        state_action_type_embedding=slab[:, OUT_SAT:OUT_SAT + D],
        state_flag_embedding=slab[:, OUT_SFE:OUT_SFE + D],
        action_type_log_policy=seg(logpol, AT_OFF, N_ACTION_TYPES),
        flag_log_policy=seg(logpol, FLAG_OFF, N_FLAGS),
        move_log_policy=seg(logpol, MOVE_OFF, N_MOVES),
        switch_log_policy=seg(logpol, SWITCH_OFF, N_SWITCHES),
        action_type_value=values[:, 0:1],
        flag_value=values[:, 1:2],
        move_value=values[:, 2:3],
        switch_value=values[:, 3:4],
    )


# -------------------------- pure-JAX f32 reference ----------------------------
def reference_forward(state, params):
    relu = lambda v: jnp.maximum(v, 0.0)
    x = build_features(state)
    h = relu(x @ params["enc_w"] + params["enc_b"])
    for i in range(N_CORE_BLOCKS):
        y = relu(h) @ params[f"core{i}_w1"] + params[f"core{i}_b1"]
        y = relu(y) @ params[f"core{i}_w2"] + params[f"core{i}_b2"]
        h = h + y
    state_emb = relu(h)
    at_logits = state_emb @ params["at_w"] + params["at_b"]
    sat_emb = relu(state_emb @ params["sat_w"] + at_logits @ params["sat_we"]
                   + params["sat_b"])
    flag_logits = sat_emb @ params["flag_w"] + params["flag_b"]
    sfe_emb = relu(sat_emb @ params["sfe_w"] + flag_logits @ params["sfe_we"]
                   + params["sfe_b"])
    move_logits = sfe_emb @ params["move_w"] + params["move_b"]
    switch_logits = sat_emb @ params["switch_w"] + params["switch_b"]

    def vh(p, v):
        hid = relu(v @ params[f"{p}_w1"] + params[f"{p}_b1"])
        return hid @ params[f"{p}_w2"] + params[f"{p}_b2"]

    def log_policy(logits, mask):
        valid = mask > 0.5
        masked = jnp.where(valid, logits, -1e30)
        m = jnp.max(masked, -1, keepdims=True)
        e = jnp.where(valid, jnp.exp(masked - m), 0.0)
        lse = jnp.log(jnp.sum(e, -1, keepdims=True)) + m
        return jnp.where(valid, logits - lse, 0.0)

    return OrderedDict(
        action_type_logits=at_logits, flag_logits=flag_logits,
        move_logits=move_logits, switch_logits=switch_logits,
        state_action_type_embedding=sat_emb, state_flag_embedding=sfe_emb,
        action_type_log_policy=log_policy(at_logits, state["action_type_mask"]),
        flag_log_policy=log_policy(flag_logits, state["flag_mask"]),
        move_log_policy=log_policy(move_logits, state["move_mask"]),
        switch_log_policy=log_policy(switch_logits, state["switch_mask"]),
        action_type_value=vh("atv", state_emb),
        flag_value=vh("flv", sat_emb),
        move_value=vh("mvv", sfe_emb),
        switch_value=vh("swv", sat_emb),
    )


# --------------------------------- main ---------------------------------------
if __name__ == "__main__":
    key = jax.random.PRNGKey(0)
    kp, ks = jax.random.split(key)
    params = init_params(kp)
    packed = pack_params(params)

    B = 2
    field_shapes = {
        "sides": (B, 2, 6, 8),
        "boosts": (B, 8),
        "volatiles": (B, 16),
        "side_conditions": (B, 16),
        "pseudoweathers": (B, 8),
        "weather": (B, 4),
        "wisher": (B, 2),
        "scalars": (B, 8),
        "hist": (B, 8, 16),
        "choices_done": (B, 1),
    }
    state = {}
    keys = jax.random.split(ks, len(field_shapes))
    for k, (name, shape) in zip(keys, field_shapes.items()):
        state[name] = jax.random.normal(k, shape, jnp.float32)

    # legal-action masks (gen 9 singles: no max_move_mask / target_mask)
    state["action_type_mask"] = jnp.array([[1., 1., 0.], [1., 0., 1.]], jnp.float32)
    state["move_mask"] = jnp.array([[1., 1., 1., 0.], [1., 0., 1., 1.]], jnp.float32)
    state["switch_mask"] = jnp.array(
        [[1., 1., 1., 1., 0., 0.], [1., 1., 0., 1., 1., 0.]], jnp.float32)
    state["flag_mask"] = jnp.array([[1., 0., 0., 0., 1.], [1., 1., 0., 0., 0.]],
                                   jnp.float32)

    out = nash_ketchum_forward(state, packed)
    jax.block_until_ready(out)

    # correctness vs. pure-JAX f32 reference (bf16 matmul operands -> loose tol)
    ref = reference_forward(state, params)
    max_diff = 0.0
    for name in out:
        max_diff = max(max_diff, float(jnp.max(jnp.abs(out[name] - ref[name]))))
    assert max_diff < 0.35, f"mismatch vs f32 reference: {max_diff}"

    # structural sanity: masked log-policy entries are exactly 0, valid <= 0,
    # and valid probabilities sum to 1.
    lp = out["move_log_policy"]
    mvm = state["move_mask"]
    assert lp.shape == (B, N_MOVES)
    assert bool(jnp.all(jnp.where(mvm > 0.5, lp <= 1e-5, lp == 0.0)))
    prob_sum = jnp.sum(jnp.where(mvm > 0.5, jnp.exp(lp), 0.0), axis=-1)
    assert bool(jnp.all(jnp.abs(prob_sum - 1.0) < 1e-3))

    print("KERNEL_OK")
</pallas_src>

<mosaic_0001>
module attributes {stable_mosaic.version = 11 : i64} {
  func.func @nash_ketchum_kernel(%arg0: i32, %arg1: memref<128x384xbf16, #tpu.memory_space<vmem>>, %arg2: memref<128x128xf32, #tpu.memory_space<vmem>>, %arg3: memref<384x128xbf16, #tpu.memory_space<vmem>>, %arg4: memref<128x2176xbf16, #tpu.memory_space<vmem>>, %arg5: memref<1x1664xf32, #tpu.memory_space<vmem>>, %arg6: memref<128x640xf32, #tpu.memory_space<vmem>>) attributes {dimension_semantics = [#tpu.dimension_semantics<parallel>], iteration_bounds = array<i64: 1>, scalar_prefetch = 0 : i64, scratch_operands = 0 : i64, tpu.core_type = #tpu.core_type<tc>, window_params = [{transform_indices = @transform_0, window_bounds = array<i64: 128, 384>}, {transform_indices = @transform_1, window_bounds = array<i64: 128, 128>}, {pipeline_mode = #tpu.pipeline_mode<synchronous>, transform_indices = @transform_2, window_bounds = array<i64: 384, 128>}, {pipeline_mode = #tpu.pipeline_mode<synchronous>, transform_indices = @transform_3, window_bounds = array<i64: 128, 2176>}, {pipeline_mode = #tpu.pipeline_mode<synchronous>, transform_indices = @transform_4, window_bounds = array<i64: 1, 1664>}, {transform_indices = @transform_5, window_bounds = array<i64: 128, 640>}]} {
    %c0 = arith.constant 0 : index
    %c0_0 = arith.constant 0 : index
    %0 = vector.load %arg1[%c0, %c0_0] : memref<128x384xbf16, #tpu.memory_space<vmem>>, vector<128x384xbf16>
    %c0_1 = arith.constant 0 : index
    %c0_2 = arith.constant 0 : index
    %1 = vector.load %arg3[%c0_1, %c0_2] : memref<384x128xbf16, #tpu.memory_space<vmem>>, vector<384x128xbf16>
    %cst = arith.constant dense<0.000000e+00> : vector<128x128xf32>
    %2 = tpu.matmul %0, %1, %cst {dimension_numbers = #tpu.dot_dimension_numbers<[1], [0], [0], [1], [0, 0, 1, 1], [], []>} : vector<128x384xbf16>, vector<384x128xbf16>, vector<128x128xf32> -> vector<128x128xf32>
    %c0_3 = arith.constant 0 : index
    %c0_4 = arith.constant 0 : index
    %3 = vector.load %arg5[%c0_3, %c0_4] : memref<1x1664xf32, #tpu.memory_space<vmem>>, vector<1x128xf32>
    %4 = vector.broadcast %3 : vector<1x128xf32> to vector<128x128xf32>
    %5 = arith.addf %2, %4 : vector<128x128xf32>
    %cst_5 = arith.constant 0.000000e+00 : f32
    %6 = vector.broadcast %cst_5 : f32 to vector<128x128xf32>
    %7 = arith.maximumf %5, %6 : vector<128x128xf32>
    %cst_6 = arith.constant 0.000000e+00 : f32
    %8 = vector.broadcast %cst_6 : f32 to vector<128x128xf32>
    %9 = arith.maximumf %7, %8 : vector<128x128xf32>
    %10 = arith.truncf %9 : vector<128x128xf32> to vector<128x128xbf16>
    %c0_7 = arith.constant 0 : index
    %c0_8 = arith.constant 0 : index
    %11 = vector.load %arg4[%c0_7, %c0_8] : memref<128x2176xbf16, #tpu.memory_space<vmem>>, vector<128x128xbf16>
    %cst_9 = arith.constant dense<0.000000e+00> : vector<128x128xf32>
    %12 = tpu.matmul %10, %11, %cst_9 {dimension_numbers = #tpu.dot_dimension_numbers<[1], [0], [0], [1], [0, 0, 1, 1], [], []>} : vector<128x128xbf16>, vector<128x128xbf16>, vector<128x128xf32> -> vector<128x128xf32>
    %c0_10 = arith.constant 0 : index
    %c128 = arith.constant 128 : index
    %13 = vector.load %arg5[%c0_10, %c128] : memref<1x1664xf32, #tpu.memory_space<vmem>>, vector<1x128xf32>
    %14 = vector.broadcast %13 : vector<1x128xf32> to vector<128x128xf32>
    %15 = arith.addf %12, %14 : vector<128x128xf32>
    %cst_11 = arith.constant 0.000000e+00 : f32
    %16 = vector.broadcast %cst_11 : f32 to vector<128x128xf32>
    %17 = arith.maximumf %15, %16 : vector<128x128xf32>
    %18 = arith.truncf %17 : vector<128x128xf32> to vector<128x128xbf16>
    %c0_12 = arith.constant 0 : index
    %c128_13 = arith.constant 128 : index
    %19 = vector.load %arg4[%c0_12, %c128_13] : memref<128x2176xbf16, #tpu.memory_space<vmem>>, vector<128x128xbf16>
    %cst_14 = arith.constant dense<0.000000e+00> : vector<128x128xf32>
    %20 = tpu.matmul %18, %19, %cst_14 {dimension_numbers = #tpu.dot_dimension_numbers<[1], [0], [0], [1], [0, 0, 1, 1], [], []>} : vector<128x128xbf16>, vector<128x128xbf16>, vector<128x128xf32> -> vector<128x128xf32>
    %c0_15 = arith.constant 0 : index
    %c256 = arith.constant 256 : index
    %21 = vector.load %arg5[%c0_15, %c256] : memref<1x1664xf32, #tpu.memory_space<vmem>>, vector<1x128xf32>
    %22 = vector.broadcast %21 : vector<1x128xf32> to vector<128x128xf32>
    %23 = arith.addf %20, %22 : vector<128x128xf32>
    %24 = arith.addf %7, %23 : vector<128x128xf32>
    %cst_16 = arith.constant 0.000000e+00 : f32
    %25 = vector.broadcast %cst_16 : f32 to vector<128x128xf32>
    %26 = arith.maximumf %24, %25 : vector<128x128xf32>
    %27 = arith.truncf %26 : vector<128x128xf32> to vector<128x128xbf16>
    %c0_17 = arith.constant 0 : index
    %c256_18 = arith.constant 256 : index
    %28 = vector.load %arg4[%c0_17, %c256_18] : memref<128x2176xbf16, #tpu.memory_space<vmem>>, vector<128x128xbf16>
    %cst_19 = arith.constant dense<0.000000e+00> : vector<128x128xf32>
    %29 = tpu.matmul %27, %28, %cst_19 {dimension_numbers = #tpu.dot_dimension_numbers<[1], [0], [0], [1], [0, 0, 1, 1], [], []>} : vector<128x128xbf16>, vector<128x128xbf16>, vector<128x128xf32> -> vector<128x128xf32>
    %c0_20 = arith.constant 0 : index
    %c384 = arith.constant 384 : index
    %30 = vector.load %arg5[%c0_20, %c384] : memref<1x1664xf32, #tpu.memory_space<vmem>>, vector<1x128xf32>
    %31 = vector.broadcast %30 : vector<1x128xf32> to vector<128x128xf32>
    %32 = arith.addf %29, %31 : vector<128x128xf32>
    %cst_21 = arith.constant 0.000000e+00 : f32
    %33 = vector.broadcast %cst_21 : f32 to vector<128x128xf32>
    %34 = arith.maximumf %32, %33 : vector<128x128xf32>
    %35 = arith.truncf %34 : vector<128x128xf32> to vector<128x128xbf16>
    %c0_22 = arith.constant 0 : index
    %c384_23 = arith.constant 384 : index
    %36 = vector.load %arg4[%c0_22, %c384_23] : memref<128x2176xbf16, #tpu.memory_space<vmem>>, vector<128x128xbf16>
    %cst_24 = arith.constant dense<0.000000e+00> : vector<128x128xf32>
    %37 = tpu.matmul %35, %36, %cst_24 {dimension_numbers = #tpu.dot_dimension_numbers<[1], [0], [0], [1], [0, 0, 1, 1], [], []>} : vector<128x128xbf16>, vector<128x128xbf16>, vector<128x128xf32> -> vector<128x128xf32>
    %c0_25 = arith.constant 0 : index
    %c512 = arith.constant 512 : index
    %38 = vector.load %arg5[%c0_25, %c512] : memref<1x1664xf32, #tpu.memory_space<vmem>>, vector<1x128xf32>
    %39 = vector.broadcast %38 : vector<1x128xf32> to vector<128x128xf32>
    %40 = arith.addf %37, %39 : vector<128x128xf32>
    %41 = arith.addf %24, %40 : vector<128x128xf32>
    %cst_26 = arith.constant 0.000000e+00 : f32
    %42 = vector.broadcast %cst_26 : f32 to vector<128x128xf32>
    %43 = arith.maximumf %41, %42 : vector<128x128xf32>
    %44 = arith.truncf %43 : vector<128x128xf32> to vector<128x128xbf16>
    %c0_27 = arith.constant 0 : index
    %c512_28 = arith.constant 512 : index
    %45 = vector.load %arg4[%c0_27, %c512_28] : memref<128x2176xbf16, #tpu.memory_space<vmem>>, vector<128x256xbf16>
    %cst_29 = arith.constant dense<0.000000e+00> : vector<128x256xf32>
    %46 = tpu.matmul %44, %45, %cst_29 {dimension_numbers = #tpu.dot_dimension_numbers<[1], [0], [0], [1], [0, 0, 1, 1], [], []>} : vector<128x128xbf16>, vector<128x256xbf16>, vector<128x256xf32> -> vector<128x256xf32>
    %c0_30 = arith.constant 0 : index
    %c640 = arith.constant 640 : index
    %47 = vector.load %arg5[%c0_30, %c640] : memref<1x1664xf32, #tpu.memory_space<vmem>>, vector<1x256xf32>
    %48 = vector.broadcast %47 : vector<1x256xf32> to vector<128x256xf32>
    %49 = arith.addf %46, %48 : vector<128x256xf32>
    %50 = vector.extract_strided_slice %49 {offsets = [0, 0], sizes = [128, 128], strides = [1, 1]} : vector<128x256xf32> to vector<128x128xf32>
    %cst_31 = arith.constant 0.000000e+00 : f32
    %51 = vector.broadcast %cst_31 : f32 to vector<128x128xf32>
    %52 = arith.maximumf %50, %51 : vector<128x128xf32>
    %53 = vector.extract_strided_slice %49 {offsets = [0, 128], sizes = [128, 128], strides = [1, 1]} : vector<128x256xf32> to vector<128x128xf32>
    %cst_32 = arith.constant 0.000000e+00 : f32
    %54 = vector.broadcast %cst_32 : f32 to vector<128x128xf32>
    %55 = arith.maximumf %53, %54 : vector<128x128xf32>
    %56 = arith.truncf %55 : vector<128x128xf32> to vector<128x128xbf16>
    %57 = arith.truncf %52 : vector<128x128xf32> to vector<128x128xbf16>
    %c0_33 = arith.constant 0 : index
    %c768 = arith.constant 768 : index
    %58 = vector.load %arg4[%c0_33, %c768] : memref<128x2176xbf16, #tpu.memory_space<vmem>>, vector<128x384xbf16>
    %cst_34 = arith.constant dense<0.000000e+00> : vector<128x384xf32>
    %59 = tpu.matmul %57, %58, %cst_34 {dimension_numbers = #tpu.dot_dimension_numbers<[1], [0], [0], [1], [0, 0, 1, 1], [], []>} : vector<128x128xbf16>, vector<128x384xbf16>, vector<128x384xf32> -> vector<128x384xf32>
    %c0_35 = arith.constant 0 : index
    %c896 = arith.constant 896 : index
    %60 = vector.load %arg5[%c0_35, %c896] : memref<1x1664xf32, #tpu.memory_space<vmem>>, vector<1x384xf32>
    %61 = vector.broadcast %60 : vector<1x384xf32> to vector<128x384xf32>
    %62 = arith.addf %59, %61 : vector<128x384xf32>
    %63 = vector.extract_strided_slice %62 {offsets = [0, 0], sizes = [128, 128], strides = [1, 1]} : vector<128x384xf32> to vector<128x128xf32>
    %cst_36 = arith.constant 0.000000e+00 : f32
    %64 = vector.broadcast %cst_36 : f32 to vector<128x128xf32>
    %65 = arith.maximumf %63, %64 : vector<128x128xf32>
    %66 = vector.extract_strided_slice %62 {offsets = [0, 128], sizes = [128, 128], strides = [1, 1]} : vector<128x384xf32> to vector<128x128xf32>
    %cst_37 = arith.constant 0.000000e+00 : f32
    %67 = vector.broadcast %cst_37 : f32 to vector<128x128xf32>
    %68 = arith.maximumf %66, %67 : vector<128x128xf32>
    %69 = arith.truncf %68 : vector<128x128xf32> to vector<128x128xbf16>
    %70 = vector.extract_strided_slice %62 {offsets = [0, 256], sizes = [128, 128], strides = [1, 1]} : vector<128x384xf32> to vector<128x128xf32>
    %cst_38 = arith.constant 0.000000e+00 : f32
    %71 = vector.broadcast %cst_38 : f32 to vector<128x128xf32>
    %72 = arith.maximumf %70, %71 : vector<128x128xf32>
    %73 = arith.truncf %72 : vector<128x128xf32> to vector<128x128xbf16>
    %74 = arith.truncf %65 : vector<128x128xf32> to vector<128x128xbf16>
    %c0_39 = arith.constant 0 : index
    %c1152 = arith.constant 1152 : index
    %75 = vector.load %arg4[%c0_39, %c1152] : memref<128x2176xbf16, #tpu.memory_space<vmem>>, vector<128x128xbf16>
    %cst_40 = arith.constant dense<0.000000e+00> : vector<128x128xf32>
    %76 = tpu.matmul %74, %75, %cst_40 {dimension_numbers = #tpu.dot_dimension_numbers<[1], [0], [0], [1], [0, 0, 1, 1], [], []>} : vector<128x128xbf16>, vector<128x128xbf16>, vector<128x128xf32> -> vector<128x128xf32>
    %c0_41 = arith.constant 0 : index
    %c1280 = arith.constant 1280 : index
    %77 = vector.load %arg5[%c0_41, %c1280] : memref<1x1664xf32, #tpu.memory_space<vmem>>, vector<1x128xf32>
    %78 = vector.broadcast %77 : vector<1x128xf32> to vector<128x128xf32>
    %79 = arith.addf %76, %78 : vector<128x128xf32>
    %cst_42 = arith.constant 0.000000e+00 : f32
    %80 = vector.broadcast %cst_42 : f32 to vector<128x128xf32>
    %81 = arith.maximumf %79, %80 : vector<128x128xf32>
    %82 = arith.truncf %81 : vector<128x128xf32> to vector<128x128xbf16>
    %c0_43 = arith.constant 0 : index
    %c1280_44 = arith.constant 1280 : index
    %83 = vector.load %arg4[%c0_43, %c1280_44] : memref<128x2176xbf16, #tpu.memory_space<vmem>>, vector<128x128xbf16>
    %cst_45 = arith.constant dense<0.000000e+00> : vector<128x128xf32>
    %84 = tpu.matmul %44, %83, %cst_45 {dimension_numbers = #tpu.dot_dimension_numbers<[1], [0], [0], [1], [0, 0, 1, 1], [], []>} : vector<128x128xbf16>, vector<128x128xbf16>, vector<128x128xf32> -> vector<128x128xf32>
    %c0_46 = arith.constant 0 : index
    %c1408 = arith.constant 1408 : index
    %85 = vector.load %arg4[%c0_46, %c1408] : memref<128x2176xbf16, #tpu.memory_space<vmem>>, vector<128x128xbf16>
    %cst_47 = arith.constant dense<0.000000e+00> : vector<128x128xf32>
    %86 = tpu.matmul %57, %85, %cst_47 {dimension_numbers = #tpu.dot_dimension_numbers<[1], [0], [0], [1], [0, 0, 1, 1], [], []>} : vector<128x128xbf16>, vector<128x128xbf16>, vector<128x128xf32> -> vector<128x128xf32>
    %87 = arith.addf %84, %86 : vector<128x128xf32>
    %c0_48 = arith.constant 0 : index
    %c1536 = arith.constant 1536 : index
    %88 = vector.load %arg4[%c0_48, %c1536] : memref<128x2176xbf16, #tpu.memory_space<vmem>>, vector<128x128xbf16>
    %cst_49 = arith.constant dense<0.000000e+00> : vector<128x128xf32>
    %89 = tpu.matmul %74, %88, %cst_49 {dimension_numbers = #tpu.dot_dimension_numbers<[1], [0], [0], [1], [0, 0, 1, 1], [], []>} : vector<128x128xbf16>, vector<128x128xbf16>, vector<128x128xf32> -> vector<128x128xf32>
    %90 = arith.addf %87, %89 : vector<128x128xf32>
    %c0_50 = arith.constant 0 : index
    %c1408_51 = arith.constant 1408 : index
    %91 = vector.load %arg5[%c0_50, %c1408_51] : memref<1x1664xf32, #tpu.memory_space<vmem>>, vector<1x128xf32>
    %92 = vector.broadcast %91 : vector<1x128xf32> to vector<128x128xf32>
    %93 = arith.addf %90, %92 : vector<128x128xf32>
    %c0_52 = arith.constant 0 : index
    %c1664 = arith.constant 1664 : index
    %94 = vector.load %arg4[%c0_52, %c1664] : memref<128x2176xbf16, #tpu.memory_space<vmem>>, vector<128x128xbf16>
    %cst_53 = arith.constant dense<0.000000e+00> : vector<128x128xf32>
    %95 = tpu.matmul %56, %94, %cst_53 {dimension_numbers = #tpu.dot_dimension_numbers<[1], [0], [0], [1], [0, 0, 1, 1], [], []>} : vector<128x128xbf16>, vector<128x128xbf16>, vector<128x128xf32> -> vector<128x128xf32>
    %c0_54 = arith.constant 0 : index
    %c1792 = arith.constant 1792 : index
    %96 = vector.load %arg4[%c0_54, %c1792] : memref<128x2176xbf16, #tpu.memory_space<vmem>>, vector<128x128xbf16>
    %cst_55 = arith.constant dense<0.000000e+00> : vector<128x128xf32>
    %97 = tpu.matmul %69, %96, %cst_55 {dimension_numbers = #tpu.dot_dimension_numbers<[1], [0], [0], [1], [0, 0, 1, 1], [], []>} : vector<128x128xbf16>, vector<128x128xbf16>, vector<128x128xf32> -> vector<128x128xf32>
    %98 = arith.addf %95, %97 : vector<128x128xf32>
    %c0_56 = arith.constant 0 : index
    %c1920 = arith.constant 1920 : index
    %99 = vector.load %arg4[%c0_56, %c1920] : memref<128x2176xbf16, #tpu.memory_space<vmem>>, vector<128x128xbf16>
    %cst_57 = arith.constant dense<0.000000e+00> : vector<128x128xf32>
    %100 = tpu.matmul %82, %99, %cst_57 {dimension_numbers = #tpu.dot_dimension_numbers<[1], [0], [0], [1], [0, 0, 1, 1], [], []>} : vector<128x128xbf16>, vector<128x128xbf16>, vector<128x128xf32> -> vector<128x128xf32>
    %101 = arith.addf %98, %100 : vector<128x128xf32>
    %c0_58 = arith.constant 0 : index
    %c2048 = arith.constant 2048 : index
    %102 = vector.load %arg4[%c0_58, %c2048] : memref<128x2176xbf16, #tpu.memory_space<vmem>>, vector<128x128xbf16>
    %cst_59 = arith.constant dense<0.000000e+00> : vector<128x128xf32>
    %103 = tpu.matmul %73, %102, %cst_59 {dimension_numbers = #tpu.dot_dimension_numbers<[1], [0], [0], [1], [0, 0, 1, 1], [], []>} : vector<128x128xbf16>, vector<128x128xbf16>, vector<128x128xf32> -> vector<128x128xf32>
    %104 = arith.addf %101, %103 : vector<128x128xf32>
    %c0_60 = arith.constant 0 : index
    %c1536_61 = arith.constant 1536 : index
    %105 = vector.load %arg5[%c0_60, %c1536_61] : memref<1x1664xf32, #tpu.memory_space<vmem>>, vector<1x128xf32>
    %106 = vector.broadcast %105 : vector<1x128xf32> to vector<128x128xf32>
    %107 = arith.addf %104, %106 : vector<128x128xf32>
    %c0_62 = arith.constant 0 : index
    %c0_63 = arith.constant 0 : index
    %108 = vector.load %arg2[%c0_62, %c0_63] : memref<128x128xf32, #tpu.memory_space<vmem>>, vector<128x128xf32>
    %cst_64 = arith.constant 5.000000e-01 : f32
    %109 = vector.broadcast %cst_64 : f32 to vector<128x128xf32>
    %110 = arith.cmpf ogt, %108, %109 : vector<128x128xf32>
    %cst_65 = arith.constant -1.000000e+30 : f32
    %111 = vector.broadcast %cst_65 : f32 to vector<128x128xf32>
    %112 = arith.select %110, %93, %111 : vector<128x128xi1>, vector<128x128xf32>
    %113 = tpu.iota {dimensions = array<i32: 1>} : vector<128x128xi32>
    %cst_66 = arith.constant 0.000000e+00 : f32
    %114 = vector.broadcast %cst_66 : f32 to vector<128x128xf32>
    %c0_i32 = arith.constant 0 : i32
    %115 = vector.broadcast %c0_i32 : i32 to vector<128x128xi32>
    %116 = arith.cmpi sge, %113, %115 : vector<128x128xi32>
    %c3_i32 = arith.constant 3 : i32
    %117 = vector.broadcast %c3_i32 : i32 to vector<128x128xi32>
    %118 = arith.cmpi slt, %113, %117 : vector<128x128xi32>
    %119 = arith.andi %116, %118 : vector<128x128xi1>
    %120 = arith.select %119, %112, %111 : vector<128x128xi1>, vector<128x128xf32>
    %cst_67 = arith.constant dense<0xFF800000> : vector<128xf32>
    %121 = vector.multi_reduction <maximumf>, %120, %cst_67 [1] : vector<128x128xf32> to vector<128xf32>
    %122 = vector.shape_cast %121 : vector<128xf32> to vector<128x1xf32>
    %123 = arith.andi %119, %110 : vector<128x128xi1>
    %124 = vector.broadcast %122 : vector<128x1xf32> to vector<128x128xf32>
    %125 = arith.subf %112, %124 : vector<128x128xf32>
    %126 = math.exp %125 : vector<128x128xf32>
    %cst_68 = arith.constant 0.000000e+00 : f32
    %127 = vector.broadcast %cst_68 : f32 to vector<128x128xf32>
    %128 = arith.select %123, %126, %127 : vector<128x128xi1>, vector<128x128xf32>
    %cst_69 = arith.constant dense<0.000000e+00> : vector<128xf32>
    %129 = vector.multi_reduction <add>, %128, %cst_69 [1] : vector<128x128xf32> to vector<128xf32>
    %130 = vector.shape_cast %129 : vector<128xf32> to vector<128x1xf32>
    %131 = math.log %130 : vector<128x1xf32>
    %132 = arith.addf %131, %122 : vector<128x1xf32>
    %133 = vector.shape_cast %132 : vector<128x1xf32> to vector<128x1xf32>
    %134 = vector.broadcast %133 : vector<128x1xf32> to vector<128x128xf32>
    %135 = arith.select %119, %134, %114 : vector<128x128xi1>, vector<128x128xf32>
    %c3_i32_70 = arith.constant 3 : i32
    %136 = vector.broadcast %c3_i32_70 : i32 to vector<128x128xi32>
    %137 = arith.cmpi sge, %113, %136 : vector<128x128xi32>
    %c8_i32 = arith.constant 8 : i32
    %138 = vector.broadcast %c8_i32 : i32 to vector<128x128xi32>
    %139 = arith.cmpi slt, %113, %138 : vector<128x128xi32>
    %140 = arith.andi %137, %139 : vector<128x128xi1>
    %141 = arith.select %140, %112, %111 : vector<128x128xi1>, vector<128x128xf32>
    %cst_71 = arith.constant dense<0xFF800000> : vector<128xf32>
    %142 = vector.multi_reduction <maximumf>, %141, %cst_71 [1] : vector<128x128xf32> to vector<128xf32>
    %143 = vector.shape_cast %142 : vector<128xf32> to vector<128x1xf32>
    %144 = arith.andi %140, %110 : vector<128x128xi1>
    %145 = vector.broadcast %143 : vector<128x1xf32> to vector<128x128xf32>
    %146 = arith.subf %112, %145 : vector<128x128xf32>
    %147 = math.exp %146 : vector<128x128xf32>
    %cst_72 = arith.constant 0.000000e+00 : f32
    %148 = vector.broadcast %cst_72 : f32 to vector<128x128xf32>
    %149 = arith.select %144, %147, %148 : vector<128x128xi1>, vector<128x128xf32>
    %cst_73 = arith.constant dense<0.000000e+00> : vector<128xf32>
    %150 = vector.multi_reduction <add>, %149, %cst_73 [1] : vector<128x128xf32> to vector<128xf32>
    %151 = vector.shape_cast %150 : vector<128xf32> to vector<128x1xf32>
    %152 = math.log %151 : vector<128x1xf32>
    %153 = arith.addf %152, %143 : vector<128x1xf32>
    %154 = vector.shape_cast %153 : vector<128x1xf32> to vector<128x1xf32>
    %155 = vector.broadcast %154 : vector<128x1xf32> to vector<128x128xf32>
    %156 = arith.select %140, %155, %135 : vector<128x128xi1>, vector<128x128xf32>
    %c8_i32_74 = arith.constant 8 : i32
    %157 = vector.broadcast %c8_i32_74 : i32 to vector<128x128xi32>
    %158 = arith.cmpi sge, %113, %157 : vector<128x128xi32>
    %c14_i32 = arith.constant 14 : i32
    %159 = vector.broadcast %c14_i32 : i32 to vector<128x128xi32>
    %160 = arith.cmpi slt, %113, %159 : vector<128x128xi32>
    %161 = arith.andi %158, %160 : vector<128x128xi1>
    %162 = arith.select %161, %112, %111 : vector<128x128xi1>, vector<128x128xf32>
    %cst_75 = arith.constant dense<0xFF800000> : vector<128xf32>
    %163 = vector.multi_reduction <maximumf>, %162, %cst_75 [1] : vector<128x128xf32> to vector<128xf32>
    %164 = vector.shape_cast %163 : vector<128xf32> to vector<128x1xf32>
    %165 = arith.andi %161, %110 : vector<128x128xi1>
    %166 = vector.broadcast %164 : vector<128x1xf32> to vector<128x128xf32>
    %167 = arith.subf %112, %166 : vector<128x128xf32>
    %168 = math.exp %167 : vector<128x128xf32>
    %cst_76 = arith.constant 0.000000e+00 : f32
    %169 = vector.broadcast %cst_76 : f32 to vector<128x128xf32>
    %170 = arith.select %165, %168, %169 : vector<128x128xi1>, vector<128x128xf32>
    %cst_77 = arith.constant dense<0.000000e+00> : vector<128xf32>
    %171 = vector.multi_reduction <add>, %170, %cst_77 [1] : vector<128x128xf32> to vector<128xf32>
    %172 = vector.shape_cast %171 : vector<128xf32> to vector<128x1xf32>
    %173 = math.log %172 : vector<128x1xf32>
    %174 = arith.addf %173, %164 : vector<128x1xf32>
    %175 = vector.shape_cast %174 : vector<128x1xf32> to vector<128x1xf32>
    %176 = vector.broadcast %175 : vector<128x1xf32> to vector<128x128xf32>
    %177 = arith.select %161, %176, %156 : vector<128x128xi1>, vector<128x128xf32>
    %c14_i32_78 = arith.constant 14 : i32
    %178 = vector.broadcast %c14_i32_78 : i32 to vector<128x128xi32>
    %179 = arith.cmpi sge, %113, %178 : vector<128x128xi32>
    %c18_i32 = arith.constant 18 : i32
    %180 = vector.broadcast %c18_i32 : i32 to vector<128x128xi32>
    %181 = arith.cmpi slt, %113, %180 : vector<128x128xi32>
    %182 = arith.andi %179, %181 : vector<128x128xi1>
    %183 = arith.select %182, %112, %111 : vector<128x128xi1>, vector<128x128xf32>
    %cst_79 = arith.constant dense<0xFF800000> : vector<128xf32>
    %184 = vector.multi_reduction <maximumf>, %183, %cst_79 [1] : vector<128x128xf32> to vector<128xf32>
    %185 = vector.shape_cast %184 : vector<128xf32> to vector<128x1xf32>
    %186 = arith.andi %182, %110 : vector<128x128xi1>
    %187 = vector.broadcast %185 : vector<128x1xf32> to vector<128x128xf32>
    %188 = arith.subf %112, %187 : vector<128x128xf32>
    %189 = math.exp %188 : vector<128x128xf32>
    %cst_80 = arith.constant 0.000000e+00 : f32
    %190 = vector.broadcast %cst_80 : f32 to vector<128x128xf32>
    %191 = arith.select %186, %189, %190 : vector<128x128xi1>, vector<128x128xf32>
    %cst_81 = arith.constant dense<0.000000e+00> : vector<128xf32>
    %192 = vector.multi_reduction <add>, %191, %cst_81 [1] : vector<128x128xf32> to vector<128xf32>
    %193 = vector.shape_cast %192 : vector<128xf32> to vector<128x1xf32>
    %194 = math.log %193 : vector<128x1xf32>
    %195 = arith.addf %194, %185 : vector<128x1xf32>
    %196 = vector.shape_cast %195 : vector<128x1xf32> to vector<128x1xf32>
    %197 = vector.broadcast %196 : vector<128x1xf32> to vector<128x128xf32>
    %198 = arith.select %182, %197, %177 : vector<128x128xi1>, vector<128x128xf32>
    %199 = arith.subf %93, %198 : vector<128x128xf32>
    %cst_82 = arith.constant 0.000000e+00 : f32
    %200 = vector.broadcast %cst_82 : f32 to vector<128x128xf32>
    %201 = arith.select %110, %199, %200 : vector<128x128xi1>, vector<128x128xf32>
    %c0_83 = arith.constant 0 : index
    %c0_84 = arith.constant 0 : index
    %202 = vector.load %arg6[%c0_83, %c0_84] : memref<128x640xf32, #tpu.memory_space<vmem>>, vector<128x128xf32>
    tpu.vector_store %arg6[%c0_83, %c0_84], %93 {strides = array<i32>} : memref<128x640xf32, #tpu.memory_space<vmem>>, vector<128x128xf32>,
    %c0_85 = arith.constant 0 : index
    %c128_86 = arith.constant 128 : index
    %203 = vector.load %arg6[%c0_85, %c128_86] : memref<128x640xf32, #tpu.memory_space<vmem>>, vector<128x128xf32>
    tpu.vector_store %arg6[%c0_85, %c128_86], %201 {strides = array<i32>} : memref<128x640xf32, #tpu.memory_space<vmem>>, vector<128x128xf32>,
    %c0_87 = arith.constant 0 : index
    %c256_88 = arith.constant 256 : index
    %204 = vector.load %arg6[%c0_87, %c256_88] : memref<128x640xf32, #tpu.memory_space<vmem>>, vector<128x128xf32>
    tpu.vector_store %arg6[%c0_87, %c256_88], %107 {strides = array<i32>} : memref<128x640xf32, #tpu.memory_space<vmem>>, vector<128x128xf32>,
    %c0_89 = arith.constant 0 : index
    %c384_90 = arith.constant 384 : index
    %205 = vector.load %arg6[%c0_89, %c384_90] : memref<128x640xf32, #tpu.memory_space<vmem>>, vector<128x128xf32>
    tpu.vector_store %arg6[%c0_89, %c384_90], %52 {strides = array<i32>} : memref<128x640xf32, #tpu.memory_space<vmem>>, vector<128x128xf32>,
    %c0_91 = arith.constant 0 : index
    %c512_92 = arith.constant 512 : index
    %206 = vector.load %arg6[%c0_91, %c512_92] : memref<128x640xf32, #tpu.memory_space<vmem>>, vector<128x128xf32>
    tpu.vector_store %arg6[%c0_91, %c512_92], %65 {strides = array<i32>} : memref<128x640xf32, #tpu.memory_space<vmem>>, vector<128x128xf32>,
    return
  }
  func.func @transform_0(%arg0: i32) -> (i32, i32) {
    %c0_i32 = arith.constant 0 : i32
    %c0_i32_0 = arith.constant 0 : i32
    return %arg0, %c0_i32 : i32, i32
  }
  func.func @transform_1(%arg0: i32) -> (i32, i32) {
    %c0_i32 = arith.constant 0 : i32
    %c0_i32_0 = arith.constant 0 : i32
    return %arg0, %c0_i32 : i32, i32
  }
  func.func @transform_2(%arg0: i32) -> (i32, i32) {
    %c0_i32 = arith.constant 0 : i32
    %c0_i32_0 = arith.constant 0 : i32
    %c0_i32_1 = arith.constant 0 : i32
    return %c0_i32, %c0_i32_0 : i32, i32
  }
  func.func @transform_3(%arg0: i32) -> (i32, i32) {
    %c0_i32 = arith.constant 0 : i32
    %c0_i32_0 = arith.constant 0 : i32
    %c0_i32_1 = arith.constant 0 : i32
    return %c0_i32, %c0_i32_0 : i32, i32
  }
  func.func @transform_4(%arg0: i32) -> (i32, i32) {
    %c0_i32 = arith.constant 0 : i32
    %c0_i32_0 = arith.constant 0 : i32
    %c0_i32_1 = arith.constant 0 : i32
    return %c0_i32, %c0_i32_0 : i32, i32
  }
  func.func @transform_5(%arg0: i32) -> (i32, i32) {
    %c0_i32 = arith.constant 0 : i32
    %c0_i32_0 = arith.constant 0 : i32
    return %arg0, %c0_i32 : i32, i32
  }
}

</mosaic_0001>

<llo_original>
// kernel: tpu_custom_call.1
$region0: #{tpu_custom_call.1}
  #allocation0 [shape = 'u32[]', space=smem, size = 0x4, offset = 0x4, fixed_abs, tag = 'smem constant byte address 0x4 - core index']
  #allocation1 [shape = 'u32[144,128]{1,0:T(1,128)}', space=vmem, size = 0x12000, scoped, tag = 'internal scratch']
  %s0 = inlined_call_operand.hbm [shape: bf16[128,384], index: 0, kind: input, shape index: {}]
  %s1 = inlined_call_operand.hbm [shape: f32[128,128], index: 1, kind: input, shape index: {}]
  %s2 = inlined_call_operand.hbm [shape: bf16[384,128], index: 2, kind: input, shape index: {}]
  %s3 = inlined_call_operand.hbm [shape: bf16[128,2176], index: 3, kind: input, shape index: {}]
  %s4 = inlined_call_operand.vmem [shape: f32[1,1664], index: 4, kind: input, shape index: {}]
  %s5 = inlined_call_operand.hbm [shape: f32[128,640], index: 5, kind: output, shape index: {}]
  %s6 = sld [smem:[#allocation0]]
  $region46: #{tpu_custom_call.1} parent=0
    _
  %s8 = ssub.s32 1, %s6
  %s9 = scalar_select 0, %s8, %s6
  $region1: #{tpu_custom_call.1} parent=0
    #allocation2 [shape = 'u8[98304]{0}', space=vmem, size = 0x18000, scoped, tag = 'input window, operand 0, single buffered']
    #allocation3 [shape = 's32[1]{0}', space=sflag, size = 0x4, scoped, tag = 'scoped memory for tpu_custom_call.1']
    #allocation4 [shape = 's32[1]{0}', space=sflag, size = 0x4, scoped, tag = 'scoped memory for tpu_custom_call.1']
    #allocation5 [shape = 'u8[65536]{0}', space=vmem, size = 0x10000, scoped, tag = 'input window, operand 1, single buffered']
    #allocation6 [shape = 's32[1]{0}', space=sflag, size = 0x4, scoped, tag = 'scoped memory for tpu_custom_call.1']
    #allocation7 [shape = 'u8[98304]{0}', space=vmem, size = 0x18000, scoped, tag = 'input window, operand 2, single buffered']
    #allocation8 [shape = 'u8[557056]{0}', space=vmem, size = 0x88000, scoped, tag = 'input window, operand 3, single buffered']
    #allocation9 [shape = 's32[1]{0}', space=sflag, size = 0x4, scoped, tag = 'scoped memory for tpu_custom_call.1']
    #allocation10 [shape = 'u8[327680]{0}', space=vmem, size = 0x50000, scoped, tag = 'output window, operand 0, single buffered']
    %10 = vsyncpa [#allocation3], 0
    %11 = vsyncpa [#allocation6], 0
    %12 = vsyncpa [#allocation9], 0
    %13 = vsyncpa [#allocation4], 0
    // Predicated region
    $region2: #{tpu_custom_call.1} parent=1 // pred_check
      _
    $region3: #{tpu_custom_call.1} parent=1 // pred_check_branch
      %15 = sbr.rel (0) target = $region5
    $region4: #{tpu_custom_call.1} parent=1 // pred_region
      %s17 = ssub.s32 3072, 3072
      %18 = vsyncadd [#allocation3], %s17
      %s19 = sshll.u32 [#allocation2], 4
      %s20 = int_to_ptr.vmem [resolvable:$true] %s19
      %25 = dma.hbm_to_vmem [thread:$0]  %s0, 3072, %s20, [#allocation3], 192, 192, 12
    $region5: #{tpu_custom_call.1} parent=1 // pred_fallthru
      _
    // Predicated region
    $region6: #{tpu_custom_call.1} parent=1 // pred_check
      _
    $region7: #{tpu_custom_call.1} parent=1 // pred_check_branch
      %27 = sbr.rel (0) target = $region9
    $region8: #{tpu_custom_call.1} parent=1 // pred_region
      %s29 = ssub.s32 2048, 2048
      %30 = vsyncadd [#allocation6], %s29
      %s31 = sshll.u32 [#allocation5], 4
      %s32 = int_to_ptr.vmem [resolvable:$true] %s31
      %37 = dma.hbm_to_vmem [thread:$0]  %s1, 2048, %s32, [#allocation6], 128, 128, 8
    $region9: #{tpu_custom_call.1} parent=1 // pred_fallthru
      _
    // Predicated region
    $region10: #{tpu_custom_call.1} parent=1 // pred_check
      _
    $region11: #{tpu_custom_call.1} parent=1 // pred_check_branch
      %39 = sbr.rel (0) target = $region13
    $region12: #{tpu_custom_call.1} parent=1 // pred_region
      %s41 = ssub.s32 3072, 3072
      %42 = vsyncadd [#allocation6], %s41
      %s43 = sshll.u32 [#allocation7], 4
      %s44 = int_to_ptr.vmem [resolvable:$true] %s43
      %49 = dma.hbm_to_vmem [thread:$0]  %s2, 3072, %s44, [#allocation6], 64, 64, 4
    $region13: #{tpu_custom_call.1} parent=1 // pred_fallthru
      _
    // Predicated region
    $region14: #{tpu_custom_call.1} parent=1 // pred_check
      _
    $region15: #{tpu_custom_call.1} parent=1 // pred_check_branch
      %51 = sbr.rel (0) target = $region17
    $region16: #{tpu_custom_call.1} parent=1 // pred_region
      %s53 = ssub.s32 17408, 17408
      %54 = vsyncadd [#allocation9], %s53
      %s55 = sshll.u32 [#allocation8], 4
      %s56 = int_to_ptr.vmem [resolvable:$true] %s55
      %61 = dma.hbm_to_vmem [thread:$0]  %s3, 17408, %s56, [#allocation9], 1088, 1088, 68
    $region17: #{tpu_custom_call.1} parent=1 // pred_fallthru
      _
    // Predicated region
    $region18: #{tpu_custom_call.1} parent=1 // pred_check
      _
    $region19: #{tpu_custom_call.1} parent=1 // pred_check_branch
      %63 = sbr.rel (0) target = $region21
    $region20: #{tpu_custom_call.1} parent=1 // pred_region
      _
    $region21: #{tpu_custom_call.1} parent=1 // pred_fallthru
      _
    // Predicated region
    $region22: #{tpu_custom_call.1} parent=1 // pred_check
      _
    $region23: #{tpu_custom_call.1} parent=1 // pred_check_branch
      %65 = sbr.rel (0) target = $region25
    $region24: #{tpu_custom_call.1} parent=1 // pred_region
      %66 = dma.done [#allocation3], 3072
    $region25: #{tpu_custom_call.1} parent=1 // pred_fallthru
      _
    // Predicated region
    $region26: #{tpu_custom_call.1} parent=1 // pred_check
      _
    $region27: #{tpu_custom_call.1} parent=1 // pred_check_branch
      %68 = sbr.rel (0) target = $region29
    $region28: #{tpu_custom_call.1} parent=1 // pred_region
      %69 = dma.done [#allocation6], 2048
    $region29: #{tpu_custom_call.1} parent=1 // pred_fallthru
      _
    // Predicated region
    $region30: #{tpu_custom_call.1} parent=1 // pred_check
      _
    $region31: #{tpu_custom_call.1} parent=1 // pred_check_branch
      %71 = sbr.rel (0) target = $region33
    $region32: #{tpu_custom_call.1} parent=1 // pred_region
      %72 = dma.done [#allocation6], 3072
    $region33: #{tpu_custom_call.1} parent=1 // pred_fallthru
      _
    // Predicated region
    $region34: #{tpu_custom_call.1} parent=1 // pred_check
      _
    $region35: #{tpu_custom_call.1} parent=1 // pred_check_branch
      %74 = sbr.rel (0) target = $region37
    $region36: #{tpu_custom_call.1} parent=1 // pred_region
      %75 = dma.done [#allocation9], 17408
    $region37: #{tpu_custom_call.1} parent=1 // pred_fallthru
      _
    %v77 = vld [vmem:[#allocation2] sm:$0xff]
    %v78 = vld [vmem:[#allocation2 + $0x8] sm:$0xf]
    %v79 = vld [vmem:[#allocation2 + $0xc] sm:$0xff]
    %v80 = vld [vmem:[#allocation2 + $0x14] sm:$0xf]
    %v81 = vld [vmem:[#allocation2 + $0x18] sm:$0xff]
    %v82 = vld [vmem:[#allocation2 + $0x20] sm:$0xf]
    %v83 = vld [vmem:[#allocation2 + $0x24] sm:$0xff]
    %v84 = vld [vmem:[#allocation2 + $0x2c] sm:$0xf]
    %v85 = vld [vmem:[#allocation2 + $0x30] sm:$0xff]
    %v86 = vld [vmem:[#allocation2 + $0x38] sm:$0xf]
    %v87 = vld [vmem:[#allocation2 + $0x3c] sm:$0xff]
    %v88 = vld [vmem:[#allocation2 + $0x44] sm:$0xf]
    %v89 = vld [vmem:[#allocation2 + $0x48] sm:$0xff]
    %v90 = vld [vmem:[#allocation2 + $0x50] sm:$0xf]
    %v91 = vld [vmem:[#allocation2 + $0x54] sm:$0xff]
    %v92 = vld [vmem:[#allocation2 + $0x5c] sm:$0xf]
    %v93 = vld [vmem:[#allocation2 + $0x60] sm:$0xff]
    %v94 = vld [vmem:[#allocation2 + $0x68] sm:$0xf]
    %v95 = vld [vmem:[#allocation2 + $0x6c] sm:$0xff]
    %v96 = vld [vmem:[#allocation2 + $0x74] sm:$0xf]
    %v97 = vld [vmem:[#allocation2 + $0x78] sm:$0xff]
    %v98 = vld [vmem:[#allocation2 + $0x80] sm:$0xf]
    %v99 = vld [vmem:[#allocation2 + $0x84] sm:$0xff]
    %v100 = vld [vmem:[#allocation2 + $0x8c] sm:$0xf]
    %v101 = vld [vmem:[#allocation2 + $0x90] sm:$0xff]
    %v102 = vld [vmem:[#allocation2 + $0x98] sm:$0xf]
    %v103 = vld [vmem:[#allocation2 + $0x9c] sm:$0xff]
    %v104 = vld [vmem:[#allocation2 + $0xa4] sm:$0xf]
    %v105 = vld [vmem:[#allocation2 + $0xa8] sm:$0xff]
    %v106 = vld [vmem:[#allocation2 + $0xb0] sm:$0xf]
    %v107 = vld [vmem:[#allocation2 + $0xb4] sm:$0xff]
    %v108 = vld [vmem:[#allocation2 + $0xbc] sm:$0xf]
    %v109 = vld [vmem:[#allocation7] sm:$0xf]
    %v110 = vld [vmem:[#allocation7 + $0x4] sm:$0xf]
    %v111 = vld [vmem:[#allocation7 + $0x8] sm:$0xf]
    %v112 = vld [vmem:[#allocation7 + $0xc] sm:$0xf]
    %v113 = vld [vmem:[#allocation7 + $0x10] sm:$0xf]
    %v114 = vld [vmem:[#allocation7 + $0x14] sm:$0xf]
    %v115 = vld [vmem:[#allocation7 + $0x18] sm:$0xf]
    %v116 = vld [vmem:[#allocation7 + $0x1c] sm:$0xf]
    %v117 = vld [vmem:[#allocation7 + $0x20] sm:$0xf]
    %v118 = vld [vmem:[#allocation7 + $0x24] sm:$0xf]
    %v119 = vld [vmem:[#allocation7 + $0x28] sm:$0xf]
    %v120 = vld [vmem:[#allocation7 + $0x2c] sm:$0xf]
    %v121 = vld [vmem:[#allocation7 + $0x30] sm:$0xf]
    %v122 = vld [vmem:[#allocation7 + $0x34] sm:$0xf]
    %v123 = vld [vmem:[#allocation7 + $0x38] sm:$0xf]
    %v124 = vld [vmem:[#allocation7 + $0x3c] sm:$0xf]
    %v125 = vld [vmem:[#allocation7 + $0x40] sm:$0xf]
    %v126 = vld [vmem:[#allocation7 + $0x44] sm:$0xf]
    %v127 = vld [vmem:[#allocation7 + $0x48] sm:$0xf]
    %v128 = vld [vmem:[#allocation7 + $0x4c] sm:$0xf]
    %v129 = vld [vmem:[#allocation7 + $0x50] sm:$0xf]
    %v130 = vld [vmem:[#allocation7 + $0x54] sm:$0xf]
    %v131 = vld [vmem:[#allocation7 + $0x58] sm:$0xf]
    %v132 = vld [vmem:[#allocation7 + $0x5c] sm:$0xf]
    %v133 = vld [vmem:[#allocation7 + $0x60] sm:$0xf]
    %v134 = vld [vmem:[#allocation7 + $0x64] sm:$0xf]
    %v135 = vld [vmem:[#allocation7 + $0x68] sm:$0xf]
    %v136 = vld [vmem:[#allocation7 + $0x6c] sm:$0xf]
    %v137 = vld [vmem:[#allocation7 + $0x70] sm:$0xf]
    %v138 = vld [vmem:[#allocation7 + $0x74] sm:$0xf]
    %v139 = vld [vmem:[#allocation7 + $0x78] sm:$0xf]
    %v140 = vld [vmem:[#allocation7 + $0x7c] sm:$0xf]
    %v141 = vld [vmem:[#allocation7 + $0x80] sm:$0xf]
    %v142 = vld [vmem:[#allocation7 + $0x84] sm:$0xf]
    %v143 = vld [vmem:[#allocation7 + $0x88] sm:$0xf]
    %v144 = vld [vmem:[#allocation7 + $0x8c] sm:$0xf]
    %v145 = vld [vmem:[#allocation7 + $0x90] sm:$0xf]
    %v146 = vld [vmem:[#allocation7 + $0x94] sm:$0xf]
    %v147 = vld [vmem:[#allocation7 + $0x98] sm:$0xf]
    %v148 = vld [vmem:[#allocation7 + $0x9c] sm:$0xf]
    %v149 = vld [vmem:[#allocation7 + $0xa0] sm:$0xf]
    %v150 = vld [vmem:[#allocation7 + $0xa4] sm:$0xf]
    %v151 = vld [vmem:[#allocation7 + $0xa8] sm:$0xf]
    %v152 = vld [vmem:[#allocation7 + $0xac] sm:$0xf]
    %v153 = vld [vmem:[#allocation7 + $0xb0] sm:$0xf]
    %v154 = vld [vmem:[#allocation7 + $0xb4] sm:$0xf]
    %v155 = vld [vmem:[#allocation7 + $0xb8] sm:$0xf]
    %v156 = vld [vmem:[#allocation7 + $0xbc] sm:$0xf]
    %v157 = vld [vmem:[%s4] sm:$0x1]
    %v159 = vlaneseq
    %v160 = vshrl.u32 %v159, 7
    %v161 = vsub.s32 0, %v160
    %v162 = vrot.slane %v157, %v161
    %v196 = vunpack.c.l.b16 %v77
    %v197 = vunpack.c.h.b16 %v77
    %v198 = vunpack.c.l.b16 %v78
    %v199 = vunpack.c.l.b16 %v79
    %v200 = vunpack.c.h.b16 %v79
    %v201 = vunpack.c.l.b16 %v80
    %v202 = vunpack.c.l.b16 %v81
    %v203 = vunpack.c.h.b16 %v81
    %v204 = vunpack.c.l.b16 %v82
    %v205 = vunpack.c.l.b16 %v83
    %v206 = vunpack.c.h.b16 %v83
    %v207 = vunpack.c.l.b16 %v84
    %v208 = vunpack.c.l.b16 %v85
    %v209 = vunpack.c.h.b16 %v85
    %v210 = vunpack.c.l.b16 %v86
    %v211 = vunpack.c.l.b16 %v87
    %v212 = vunpack.c.h.b16 %v87
    %v213 = vunpack.c.l.b16 %v88
    %v214 = vunpack.c.l.b16 %v89
    %v215 = vunpack.c.h.b16 %v89
    %v216 = vunpack.c.l.b16 %v90
    %v217 = vunpack.c.l.b16 %v91
    %v218 = vunpack.c.h.b16 %v91
    %v219 = vunpack.c.l.b16 %v92
    %v220 = vunpack.c.l.b16 %v93
    %v221 = vunpack.c.h.b16 %v93
    %v222 = vunpack.c.l.b16 %v94
    %v223 = vunpack.c.l.b16 %v95
    %v224 = vunpack.c.h.b16 %v95
    %v225 = vunpack.c.l.b16 %v96
    %v226 = vunpack.c.l.b16 %v97
    %v227 = vunpack.c.h.b16 %v97
    %v228 = vunpack.c.l.b16 %v98
    %v229 = vunpack.c.l.b16 %v99
    %v230 = vunpack.c.h.b16 %v99
    %v231 = vunpack.c.l.b16 %v100
    %v232 = vunpack.c.l.b16 %v101
    %v233 = vunpack.c.h.b16 %v101
    %v234 = vunpack.c.l.b16 %v102
    %v235 = vunpack.c.l.b16 %v103
    %v236 = vunpack.c.h.b16 %v103
    %v237 = vunpack.c.l.b16 %v104
    %v238 = vunpack.c.l.b16 %v105
    %v239 = vunpack.c.h.b16 %v105
    %v240 = vunpack.c.l.b16 %v106
    %v241 = vunpack.c.l.b16 %v107
    %v242 = vunpack.c.h.b16 %v107
    %v243 = vunpack.c.l.b16 %v108
    %v244 = vpack.c.b16 %v199, %v196
    %v245 = vpack.c.b16 %v200, %v197
    %v246 = vpack.c.b16 %v201, %v198
    %v247 = vpack.c.b16 %v205, %v202
    %v248 = vpack.c.b16 %v206, %v203
    %v249 = vpack.c.b16 %v207, %v204
    %v250 = vpack.c.b16 %v211, %v208
    %v251 = vpack.c.b16 %v212, %v209
    %v252 = vpack.c.b16 %v213, %v210
    %v253 = vpack.c.b16 %v217, %v214
    %v254 = vpack.c.b16 %v218, %v215
    %v255 = vpack.c.b16 %v219, %v216
    %v256 = vpack.c.b16 %v223, %v220
    %v257 = vpack.c.b16 %v224, %v221
    %v258 = vpack.c.b16 %v225, %v222
    %v259 = vpack.c.b16 %v229, %v226
    %v260 = vpack.c.b16 %v230, %v227
    %v261 = vpack.c.b16 %v231, %v228
    %v262 = vpack.c.b16 %v235, %v232
    %v263 = vpack.c.b16 %v236, %v233
    %v264 = vpack.c.b16 %v237, %v234
    %v265 = vpack.c.b16 %v241, %v238
    %v266 = vpack.c.b16 %v242, %v239
    %v267 = vpack.c.b16 %v243, %v240
    %v340 = vunpack.c.l.b16 %v109
    %v341 = vunpack.c.l.b16 %v110
    %v342 = vunpack.c.l.b16 %v111
    %v343 = vunpack.c.l.b16 %v112
    %v344 = vunpack.c.l.b16 %v113
    %v345 = vunpack.c.l.b16 %v114
    %v346 = vunpack.c.l.b16 %v115
    %v347 = vunpack.c.l.b16 %v116
    %v348 = vunpack.c.l.b16 %v117
    %v349 = vunpack.c.l.b16 %v118
    %v350 = vunpack.c.l.b16 %v119
    %v351 = vunpack.c.l.b16 %v120
    %v352 = vunpack.c.l.b16 %v121
    %v353 = vunpack.c.l.b16 %v122
    %v354 = vunpack.c.l.b16 %v123
    %v355 = vunpack.c.l.b16 %v124
    %v356 = vunpack.c.l.b16 %v125
    %v357 = vunpack.c.l.b16 %v126
    %v358 = vunpack.c.l.b16 %v127
    %v359 = vunpack.c.l.b16 %v128
    %v360 = vunpack.c.l.b16 %v129
    %v361 = vunpack.c.l.b16 %v130
    %v362 = vunpack.c.l.b16 %v131
    %v363 = vunpack.c.l.b16 %v132
    %v364 = vunpack.c.l.b16 %v133
    %v365 = vunpack.c.l.b16 %v134
    %v366 = vunpack.c.l.b16 %v135
    %v367 = vunpack.c.l.b16 %v136
    %v368 = vunpack.c.l.b16 %v137
    %v369 = vunpack.c.l.b16 %v138
    %v370 = vunpack.c.l.b16 %v139
    %v371 = vunpack.c.l.b16 %v140
    %v372 = vunpack.c.l.b16 %v141
    %v373 = vunpack.c.l.b16 %v142
    %v374 = vunpack.c.l.b16 %v143
    %v375 = vunpack.c.l.b16 %v144
    %v376 = vunpack.c.l.b16 %v145
    %v377 = vunpack.c.l.b16 %v146
    %v378 = vunpack.c.l.b16 %v147
    %v379 = vunpack.c.l.b16 %v148
    %v380 = vunpack.c.l.b16 %v149
    %v381 = vunpack.c.l.b16 %v150
    %v382 = vunpack.c.l.b16 %v151
    %v383 = vunpack.c.l.b16 %v152
    %v384 = vunpack.c.l.b16 %v153
    %v385 = vunpack.c.l.b16 %v154
    %v386 = vunpack.c.l.b16 %v155
    %v387 = vunpack.c.l.b16 %v156
    %v388 = vpack.c.b16 %v341, %v340
    %v389 = vpack.c.b16 %v343, %v342
    %v390 = vpack.c.b16 %v345, %v344
    %v391 = vpack.c.b16 %v347, %v346
    %v392 = vpack.c.b16 %v349, %v348
    %v393 = vpack.c.b16 %v351, %v350
    %v394 = vpack.c.b16 %v353, %v352
    %v395 = vpack.c.b16 %v355, %v354
    %v396 = vpack.c.b16 %v357, %v356
    %v397 = vpack.c.b16 %v359, %v358
    %v398 = vpack.c.b16 %v361, %v360
    %v399 = vpack.c.b16 %v363, %v362
    %v400 = vpack.c.b16 %v365, %v364
    %v401 = vpack.c.b16 %v367, %v366
    %v402 = vpack.c.b16 %v369, %v368
    %v403 = vpack.c.b16 %v371, %v370
    %v404 = vpack.c.b16 %v373, %v372
    %v405 = vpack.c.b16 %v375, %v374
    %v406 = vpack.c.b16 %v377, %v376
    %v407 = vpack.c.b16 %v379, %v378
    %v408 = vpack.c.b16 %v381, %v380
    %v409 = vpack.c.b16 %v383, %v382
    %v410 = vpack.c.b16 %v385, %v384
    %v411 = vpack.c.b16 %v387, %v386
    %436 = vmatprep.subr.bf16.mxu0 0
    %437 = vmatpush1.bf16.msra.mxu0 %v388
    %438 = vmatprep.subr.bf16.mxu0 0
    %439 = vmatpush1.bf16.msra.mxu0 %v389
    %440 = vmatprep.subr.bf16.mxu0 0
    %441 = vmatpush1.bf16.msra.mxu0 %v390
    %442 = vmatprep.subr.bf16.mxu0 0
    %443 = vmatpush1.bf16.msra.mxu0 %v391
    %444 = vmatprep.subr.bf16.mxu0 0
    %445 = vmatpush1.bf16.msra.mxu0 %v392
    %446 = vmatprep.subr.bf16.mxu0 0
    %447 = vmatpush1.bf16.msra.mxu0 %v393
    %448 = vmatprep.subr.bf16.mxu0 0
    %449 = vmatpush1.bf16.msra.mxu0 %v394
    %450 = vmatprep.subr.bf16.mxu0 0
    %451 = vmatpush1.bf16.msra.mxu0 %v395
    %452 = vmatprep.subr.bf16.mxu0 0
    %453 = vmatpush1.bf16.msra.mxu0 %v396
    %454 = vmatprep.subr.bf16.mxu0 0
    %455 = vmatpush1.bf16.msra.mxu0 %v397
    %456 = vmatprep.subr.bf16.mxu0 0
    %457 = vmatpush1.bf16.msra.mxu0 %v398
    %458 = vmatprep.subr.bf16.mxu0 0
    %459 = vmatpush1.bf16.msra.mxu0 %v399
    %460 = vmatprep.subr.bf16.mxu0 0
    %461 = vmatpush1.bf16.msra.mxu0 %v400
    %462 = vmatprep.subr.bf16.mxu0 0
    %463 = vmatpush1.bf16.msra.mxu0 %v401
    %464 = vmatprep.subr.bf16.mxu0 0
    %465 = vmatpush1.bf16.msra.mxu0 %v402
    %466 = vmatprep.subr.bf16.mxu0 0
    %467 = vmatpush1.bf16.msra.mxu0 %v403
    %468 = vmatprep.mubr.bf16.mxu0 %v245
    %469 = vmatmul.mubr.bf16.gmra.mrb[0].mxu0 %v244
    %v470 = vpop.f32.mrb[0].mxu0
    %v471 = vadd.f32 %v162, %v470
    %v472 = vpop.f32.mrb[0].mxu0
    %v473 = vpop.f32.mrb[0].mxu0
    %v474 = vadd.f32 %v162, %v473
    %v475 = vpop.f32.mrb[0].mxu0
    %476 = vmatprep.mubr.bf16.mxu0 %v248
    %477 = vmatmul.mubr.bf16.gmra.mrb[0].mxu0 %v247
    %v478 = vpop.f32.mrb[0].mxu0
    %v479 = vadd.f32 %v162, %v478
    %v480 = vpop.f32.mrb[0].mxu0
    %v481 = vpop.f32.mrb[0].mxu0
    %v482 = vadd.f32 %v162, %v481
    %v483 = vpop.f32.mrb[0].mxu0
    %484 = vmatprep.mubr.bf16.mxu0 %v251
    %485 = vmatmul.mubr.bf16.gmra.mrb[0].mxu0 %v250
    %v486 = vpop.f32.mrb[0].mxu0
    %v487 = vadd.f32 %v162, %v486
    %v488 = vpop.f32.mrb[0].mxu0
    %v489 = vpop.f32.mrb[0].mxu0
    %v490 = vadd.f32 %v162, %v489
    %v491 = vpop.f32.mrb[0].mxu0
    %492 = vmatprep.mubr.bf16.mxu0 %v254
    %493 = vmatmul.mubr.bf16.gmra.mrb[0].mxu0 %v253
    %v494 = vpop.f32.mrb[0].mxu0
    %v495 = vadd.f32 %v162, %v494
    %v496 = vpop.f32.mrb[0].mxu0
    %v497 = vpop.f32.mrb[0].mxu0
    %v498 = vadd.f32 %v162, %v497
    %v499 = vpop.f32.mrb[0].mxu0
    %500 = vmatprep.mubr.bf16.mxu0 %v257
    %501 = vmatmul.mubr.bf16.gmra.mrb[0].mxu0 %v256
    %v502 = vpop.f32.mrb[0].mxu0
    %v503 = vadd.f32 %v162, %v502
    %v504 = vpop.f32.mrb[0].mxu0
    %v505 = vpop.f32.mrb[0].mxu0
    %v506 = vadd.f32 %v162, %v505
    %v507 = vpop.f32.mrb[0].mxu0
    %508 = vmatprep.mubr.bf16.mxu0 %v260
    %509 = vmatmul.mubr.bf16.gmra.mrb[0].mxu0 %v259
    %v510 = vpop.f32.mrb[0].mxu0
    %v511 = vadd.f32 %v162, %v510
    %v512 = vpop.f32.mrb[0].mxu0
    %v513 = vpop.f32.mrb[0].mxu0
    %v514 = vadd.f32 %v162, %v513
    %v515 = vpop.f32.mrb[0].mxu0
    %516 = vmatprep.mubr.bf16.mxu0 %v263
    %517 = vmatmul.mubr.bf16.gmra.mrb[0].mxu0 %v262
    %v518 = vpop.f32.mrb[0].mxu0
    %v519 = vadd.f32 %v162, %v518
    %v520 = vpop.f32.mrb[0].mxu0
    %v521 = vpop.f32.mrb[0].mxu0
    %v522 = vadd.f32 %v162, %v521
    %v523 = vpop.f32.mrb[0].mxu0
    %524 = vmatprep.mubr.bf16.mxu0 %v266
    %525 = vmatmul.mubr.bf16.gmra.mrb[0].mxu0 %v265
    %v526 = vpop.f32.mrb[0].mxu0
    %v527 = vadd.f32 %v162, %v526
    %v528 = vpop.f32.mrb[0].mxu0
    %v529 = vpop.f32.mrb[0].mxu0
    %v530 = vadd.f32 %v162, %v529
    %v531 = vpop.f32.mrb[0].mxu0
    %532 = vdwg.mxu0
    %533 = vmatprep.subr.bf16.mxu0 0
    %534 = vmatpush1.bf16.msra.mxu0 %v404
    %535 = vmatprep.subr.bf16.mxu0 0
    %536 = vmatpush1.bf16.msra.mxu0 %v405
    %537 = vmatprep.subr.bf16.mxu0 0
    %538 = vmatpush1.bf16.msra.mxu0 %v406
    %539 = vmatprep.subr.bf16.mxu0 0
    %540 = vmatpush1.bf16.msra.mxu0 %v407
    %541 = vmatprep.subr.bf16.mxu0 0
    %542 = vmatpush1.bf16.msra.mxu0 %v408
    %543 = vmatprep.subr.bf16.mxu0 0
    %544 = vmatpush1.bf16.msra.mxu0 %v409
    %545 = vmatprep.subr.bf16.mxu0 0
    %546 = vmatpush1.bf16.msra.mxu0 %v410
    %547 = vmatprep.subr.bf16.mxu0 0
    %548 = vmatpush1.bf16.msra.mxu0 %v411
    %549 = vmatprep.subr.bf16.mxu0 0
    %550 = vmatpush1.bf16.msra.mxu0 0
    %551 = vmatprep.subr.bf16.mxu0 0
    %552 = vmatpush1.bf16.msra.mxu0 0
    %553 = vmatprep.subr.bf16.mxu0 0
    %554 = vmatpush1.bf16.msra.mxu0 0
    %555 = vmatprep.subr.bf16.mxu0 0
    %556 = vmatpush1.bf16.msra.mxu0 0
    %557 = vmatprep.subr.bf16.mxu0 0
    %558 = vmatpush1.bf16.msra.mxu0 0
    %559 = vmatprep.subr.bf16.mxu0 0
    %560 = vmatpush1.bf16.msra.mxu0 0
    %561 = vmatprep.subr.bf16.mxu0 0
    %562 = vmatpush1.bf16.msra.mxu0 0
    %563 = vmatprep.subr.bf16.mxu0 0
    %564 = vmatpush1.bf16.msra.mxu0 0
    %565 = vmatprep.mubr.bf16.mxu0 0
    %566 = vmatmul.mubr.bf16.gmra.mrb[0].mxu0 %v246
    %v567 = vpop.f32.mrb[0].mxu0
    %v568 = vadd.f32 %v471, %v567
    %v569 = vpop.f32.mrb[0].mxu0
    %v570 = vpop.f32.mrb[0].mxu0
    %v571 = vadd.f32 %v474, %v570
    %v572 = vpop.f32.mrb[0].mxu0
    %573 = vmatprep.mubr.bf16.mxu0 0
    %574 = vmatmul.mubr.bf16.gmra.mrb[0].mxu0 %v249
    %v575 = vpop.f32.mrb[0].mxu0
    %v576 = vadd.f32 %v479, %v575
    %v577 = vpop.f32.mrb[0].mxu0
    %v578 = vpop.f32.mrb[0].mxu0
    %v579 = vadd.f32 %v482, %v578
    %v580 = vpop.f32.mrb[0].mxu0
    %581 = vmatprep.mubr.bf16.mxu0 0
    %582 = vmatmul.mubr.bf16.gmra.mrb[0].mxu0 %v252
    %v583 = vpop.f32.mrb[0].mxu0
    %v584 = vadd.f32 %v487, %v583
    %v585 = vpop.f32.mrb[0].mxu0
    %v586 = vpop.f32.mrb[0].mxu0
    %v587 = vadd.f32 %v490, %v586
    %v588 = vpop.f32.mrb[0].mxu0
    %589 = vmatprep.mubr.bf16.mxu0 0
    %590 = vmatmul.mubr.bf16.gmra.mrb[0].mxu0 %v255
    %v591 = vpop.f32.mrb[0].mxu0
    %v592 = vadd.f32 %v495, %v591
    %v593 = vpop.f32.mrb[0].mxu0
    %v594 = vpop.f32.mrb[0].mxu0
    %v595 = vadd.f32 %v498, %v594
    %v596 = vpop.f32.mrb[0].mxu0
    %597 = vmatprep.mubr.bf16.mxu0 0
    %598 = vmatmul.mubr.bf16.gmra.mrb[0].mxu0 %v258
    %v599 = vpop.f32.mrb[0].mxu0
    %v600 = vadd.f32 %v503, %v599
    %v601 = vpop.f32.mrb[0].mxu0
    %v602 = vpop.f32.mrb[0].mxu0
    %v603 = vadd.f32 %v506, %v602
    %v604 = vpop.f32.mrb[0].mxu0
    %605 = vmatprep.mubr.bf16.mxu0 0
    %606 = vmatmul.mubr.bf16.gmra.mrb[0].mxu0 %v261
    %v607 = vpop.f32.mrb[0].mxu0
    %v608 = vadd.f32 %v511, %v607
    %v609 = vpop.f32.mrb[0].mxu0
    %v610 = vpop.f32.mrb[0].mxu0
    %v611 = vadd.f32 %v514, %v610
    %v612 = vpop.f32.mrb[0].mxu0
    %613 = vmatprep.mubr.bf16.mxu0 0
    %614 = vmatmul.mubr.bf16.gmra.mrb[0].mxu0 %v264
    %v615 = vpop.f32.mrb[0].mxu0
    %v616 = vadd.f32 %v519, %v615
    %v617 = vpop.f32.mrb[0].mxu0
    %v618 = vpop.f32.mrb[0].mxu0
    %v619 = vadd.f32 %v522, %v618
    %v620 = vpop.f32.mrb[0].mxu0
    %621 = vmatprep.mubr.bf16.mxu0 0
    %622 = vmatmul.mubr.bf16.gmra.mrb[0].mxu0 %v267
    %v623 = vpop.f32.mrb[0].mxu0
    %v624 = vadd.f32 %v527, %v623
    %v625 = vpop.f32.mrb[0].mxu0
    %v626 = vpop.f32.mrb[0].mxu0
    %v627 = vadd.f32 %v530, %v626
    %v628 = vpop.f32.mrb[0].mxu0
    %629 = vdwg.mxu0
    %v630 = vmax.f32 %v568, 0.0
    %v631 = vmax.f32 %v571, 0.0
    %v632 = vmax.f32 %v576, 0.0
    %v633 = vmax.f32 %v579, 0.0
    %v634 = vmax.f32 %v584, 0.0
    %v635 = vmax.f32 %v587, 0.0
    %v636 = vmax.f32 %v592, 0.0
    %v637 = vmax.f32 %v595, 0.0
    %v638 = vmax.f32 %v600, 0.0
    %v639 = vmax.f32 %v603, 0.0
    %v640 = vmax.f32 %v608, 0.0
    %v641 = vmax.f32 %v611, 0.0
    %v642 = vmax.f32 %v616, 0.0
    %v643 = vmax.f32 %v619, 0.0
    %v644 = vmax.f32 %v624, 0.0
    %v645 = vmax.f32 %v627, 0.0
    %v646 = vmax.f32 %v630, 0.0
    %v647 = vmax.f32 %v631, 0.0
    %v648 = vmax.f32 %v632, 0.0
    %v649 = vmax.f32 %v633, 0.0
    %v650 = vmax.f32 %v634, 0.0
    %v651 = vmax.f32 %v635, 0.0
    %v652 = vmax.f32 %v636, 0.0
    %v653 = vmax.f32 %v637, 0.0
    %v654 = vmax.f32 %v638, 0.0
    %v655 = vmax.f32 %v639, 0.0
    %v656 = vmax.f32 %v640, 0.0
    %v657 = vmax.f32 %v641, 0.0
    %v658 = vmax.f32 %v642, 0.0
    %v659 = vmax.f32 %v643, 0.0
    %v660 = vmax.f32 %v644, 0.0
    %v661 = vmax.f32 %v645, 0.0
    %v662 = vpack.c.bf16 %v647, %v646
    %v663 = vpack.c.bf16 %v649, %v648
    %v664 = vpack.c.bf16 %v651, %v650
    %v665 = vpack.c.bf16 %v653, %v652
    %v666 = vpack.c.bf16 %v655, %v654
    %v667 = vpack.c.bf16 %v657, %v656
    %v668 = vpack.c.bf16 %v659, %v658
    %v669 = vpack.c.bf16 %v661, %v660
    %v670 = vld [vmem:[#allocation8] sm:$0xf]
    %v671 = vld [vmem:[#allocation8 + $0x44] sm:$0xf]
    %v672 = vld [vmem:[#allocation8 + $0x88] sm:$0xf]
    %v673 = vld [vmem:[#allocation8 + $0xcc] sm:$0xf]
    %v674 = vld [vmem:[#allocation8 + $0x110] sm:$0xf]
    %v675 = vld [vmem:[#allocation8 + $0x154] sm:$0xf]
    %v676 = vld [vmem:[#allocation8 + $0x198] sm:$0xf]
    %v677 = vld [vmem:[#allocation8 + $0x1dc] sm:$0xf]
    %v678 = vld [vmem:[#allocation8 + $0x220] sm:$0xf]
    %v679 = vld [vmem:[#allocation8 + $0x264] sm:$0xf]
    %v680 = vld [vmem:[#allocation8 + $0x2a8] sm:$0xf]
    %v681 = vld [vmem:[#allocation8 + $0x2ec] sm:$0xf]
    %v682 = vld [vmem:[#allocation8 + $0x330] sm:$0xf]
    %v683 = vld [vmem:[#allocation8 + $0x374] sm:$0xf]
    %v684 = vld [vmem:[#allocation8 + $0x3b8] sm:$0xf]
    %v685 = vld [vmem:[#allocation8 + $0x3fc] sm:$0xf]
    %v686 = vld [vmem:[%s4 + $0x1] sm:$0x1]
    %v688 = vlaneseq
    %v689 = vshrl.u32 %v688, 7
    %v690 = vsub.s32 0, %v689
    %v691 = vrot.slane %v686, %v690
    %v709 = vunpack.c.l.b16 %v670
    %v710 = vunpack.c.l.b16 %v671
    %v711 = vunpack.c.l.b16 %v672
    %v712 = vunpack.c.l.b16 %v673
    %v713 = vunpack.c.l.b16 %v674
    %v714 = vunpack.c.l.b16 %v675
    %v715 = vunpack.c.l.b16 %v676
    %v716 = vunpack.c.l.b16 %v677
    %v717 = vunpack.c.l.b16 %v678
    %v718 = vunpack.c.l.b16 %v679
    %v719 = vunpack.c.l.b16 %v680
    %v720 = vunpack.c.l.b16 %v681
    %v721 = vunpack.c.l.b16 %v682
    %v722 = vunpack.c.l.b16 %v683
    %v723 = vunpack.c.l.b16 %v684
    %v724 = vunpack.c.l.b16 %v685
    %v725 = vpack.c.b16 %v710, %v709
    %v726 = vpack.c.b16 %v712, %v711
    %v727 = vpack.c.b16 %v714, %v713
    %v728 = vpack.c.b16 %v716, %v715
    %v729 = vpack.c.b16 %v718, %v717
    %v730 = vpack.c.b16 %v720, %v719
    %v731 = vpack.c.b16 %v722, %v721
    %v732 = vpack.c.b16 %v724, %v723
    %741 = vmatprep.subr.bf16.mxu0 0
    %742 = vmatpush1.bf16.msra.mxu0 %v725
    %743 = vmatprep.subr.bf16.mxu0 0
    %744 = vmatpush1.bf16.msra.mxu0 %v726
    %745 = vmatprep.subr.bf16.mxu0 0
    %746 = vmatpush1.bf16.msra.mxu0 %v727
    %747 = vmatprep.subr.bf16.mxu0 0
    %748 = vmatpush1.bf16.msra.mxu0 %v728
    %749 = vmatprep.subr.bf16.mxu0 0
    %750 = vmatpush1.bf16.msra.mxu0 %v729
    %751 = vmatprep.subr.bf16.mxu0 0
    %752 = vmatpush1.bf16.msra.mxu0 %v730
    %753 = vmatprep.subr.bf16.mxu0 0
    %754 = vmatpush1.bf16.msra.mxu0 %v731
    %755 = vmatprep.subr.bf16.mxu0 0
    %756 = vmatpush1.bf16.msra.mxu0 %v732
    %757 = vmatprep.subr.bf16.mxu0 0
    %758 = vmatpush1.bf16.msra.mxu0 0
    %759 = vmatprep.subr.bf16.mxu0 0
    %760 = vmatpush1.bf16.msra.mxu0 0
    %761 = vmatprep.subr.bf16.mxu0 0
    %762 = vmatpush1.bf16.msra.mxu0 0
    %763 = vmatprep.subr.bf16.mxu0 0
    %764 = vmatpush1.bf16.msra.mxu0 0
    %765 = vmatprep.subr.bf16.mxu0 0
    %766 = vmatpush1.bf16.msra.mxu0 0
    %767 = vmatprep.subr.bf16.mxu0 0
    %768 = vmatpush1.bf16.msra.mxu0 0
    %769 = vmatprep.subr.bf16.mxu0 0
    %770 = vmatpush1.bf16.msra.mxu0 0
    %771 = vmatprep.subr.bf16.mxu0 0
    %772 = vmatpush1.bf16.msra.mxu0 0
    %773 = vmatprep.mubr.bf16.mxu0 0
    %774 = vmatmul.mubr.bf16.gmra.mrb[0].mxu0 %v662
    %v775 = vpop.f32.mrb[0].mxu0
    %v776 = vadd.f32 %v691, %v775
    %v777 = vpop.f32.mrb[0].mxu0
    %v778 = vpop.f32.mrb[0].mxu0
    %v779 = vadd.f32 %v691, %v778
    %v780 = vpop.f32.mrb[0].mxu0
    %781 = vmatprep.mubr.bf16.mxu0 0
    %782 = vmatmul.mubr.bf16.gmra.mrb[0].mxu0 %v663
    %v783 = vpop.f32.mrb[0].mxu0
    %v784 = vadd.f32 %v691, %v783
    %v785 = vpop.f32.mrb[0].mxu0
    %v786 = vpop.f32.mrb[0].mxu0
    %v787 = vadd.f32 %v691, %v786
    %v788 = vpop.f32.mrb[0].mxu0
    %789 = vmatprep.mubr.bf16.mxu0 0
    %790 = vmatmul.mubr.bf16.gmra.mrb[0].mxu0 %v664
    %v791 = vpop.f32.mrb[0].mxu0
    %v792 = vadd.f32 %v691, %v791
    %v793 = vpop.f32.mrb[0].mxu0
    %v794 = vpop.f32.mrb[0].mxu0
    %v795 = vadd.f32 %v691, %v794
    %v796 = vpop.f32.mrb[0].mxu0
    %797 = vmatprep.mubr.bf16.mxu0 0
    %798 = vmatmul.mubr.bf16.gmra.mrb[0].mxu0 %v665
    %v799 = vpop.f32.mrb[0].mxu0
    %v800 = vadd.f32 %v691, %v799
    %v801 = vpop.f32.mrb[0].mxu0
    %v802 = vpop.f32.mrb[0].mxu0
    %v803 = vadd.f32 %v691, %v802
    %v804 = vpop.f32.mrb[0].mxu0
    %805 = vmatprep.mubr.bf16.mxu0 0
    %806 = vmatmul.mubr.bf16.gmra.mrb[0].mxu0 %v666
    %v807 = vpop.f32.mrb[0].mxu0
    %v808 = vadd.f32 %v691, %v807
    %v809 = vpop.f32.mrb[0].mxu0
    %v810 = vpop.f32.mrb[0].mxu0
    %v811 = vadd.f32 %v691, %v810
    %v812 = vpop.f32.mrb[0].mxu0
    %813 = vmatprep.mubr.bf16.mxu0 0
    %814 = vmatmul.mubr.bf16.gmra.mrb[0].mxu0 %v667
    %v815 = vpop.f32.mrb[0].mxu0
    %v816 = vadd.f32 %v691, %v815
    %v817 = vpop.f32.mrb[0].mxu0
    %v818 = vpop.f32.mrb[0].mxu0
    %v819 = vadd.f32 %v691, %v818
    %v820 = vpop.f32.mrb[0].mxu0
    %821 = vmatprep.mubr.bf16.mxu0 0
    %822 = vmatmul.mubr.bf16.gmra.mrb[0].mxu0 %v668
    %v823 = vpop.f32.mrb[0].mxu0
    %v824 = vadd.f32 %v691, %v823
    %v825 = vpop.f32.mrb[0].mxu0
    %v826 = vpop.f32.mrb[0].mxu0
    %v827 = vadd.f32 %v691, %v826
    %v828 = vpop.f32.mrb[0].mxu0
    %829 = vmatprep.mubr.bf16.mxu0 0
    %830 = vmatmul.mubr.bf16.gmra.mrb[0].mxu0 %v669
    %v831 = vpop.f32.mrb[0].mxu0
    %v832 = vadd.f32 %v691, %v831
    %v833 = vpop.f32.mrb[0].mxu0
    %v834 = vpop.f32.mrb[0].mxu0
    %v835 = vadd.f32 %v691, %v834
    %v836 = vpop.f32.mrb[0].mxu0
    %837 = vdwg.mxu0
    %v838 = vmax.f32 %v776, 0.0
    %v839 = vmax.f32 %v779, 0.0
    %v840 = vmax.f32 %v784, 0.0
    %v841 = vmax.f32 %v787, 0.0
    %v842 = vmax.f32 %v792, 0.0
    %v843 = vmax.f32 %v795, 0.0
    %v844 = vmax.f32 %v800, 0.0
    %v845 = vmax.f32 %v803, 0.0
    %v846 = vmax.f32 %v808, 0.0
    %v847 = vmax.f32 %v811, 0.0
    %v848 = vmax.f32 %v816, 0.0
    %v849 = vmax.f32 %v819, 0.0
    %v850 = vmax.f32 %v824, 0.0
    %v851 = vmax.f32 %v827, 0.0
    %v852 = vmax.f32 %v832, 0.0
    %v853 = vmax.f32 %v835, 0.0
    %v854 = vpack.c.bf16 %v839, %v838
    %v855 = vpack.c.bf16 %v841, %v840
    %v856 = vpack.c.bf16 %v843, %v842
    %v857 = vpack.c.bf16 %v845, %v844
    %v858 = vpack.c.bf16 %v847, %v846
    %v859 = vpack.c.bf16 %v849, %v848
    %v860 = vpack.c.bf16 %v851, %v850
    %v861 = vpack.c.bf16 %v853, %v852
    %v862 = vld [vmem:[#allocation8 + $0x4] sm:$0xf]
    %v863 = vld [vmem:[#allocation8 + $0x48] sm:$0xf]
    %v864 = vld [vmem:[#allocation8 + $0x8c] sm:$0xf]
    %v865 = vld [vmem:[#allocation8 + $0xd0] sm:$0xf]
    %v866 = vld [vmem:[#allocation8 + $0x114] sm:$0xf]
    %v867 = vld [vmem:[#allocation8 + $0x158] sm:$0xf]
    %v868 = vld [vmem:[#allocation8 + $0x19c] sm:$0xf]
    %v869 = vld [vmem:[#allocation8 + $0x1e0] sm:$0xf]
    %v870 = vld [vmem:[#allocation8 + $0x224] sm:$0xf]
    %v871 = vld [vmem:[#allocation8 + $0x268] sm:$0xf]
    %v872 = vld [vmem:[#allocation8 + $0x2ac] sm:$0xf]
    %v873 = vld [vmem:[#allocation8 + $0x2f0] sm:$0xf]
    %v874 = vld [vmem:[#allocation8 + $0x334] sm:$0xf]
    %v875 = vld [vmem:[#allocation8 + $0x378] sm:$0xf]
    %v876 = vld [vmem:[#allocation8 + $0x3bc] sm:$0xf]
    %v877 = vld [vmem:[#allocation8 + $0x400] sm:$0xf]
    %v878 = vld [vmem:[%s4 + $0x2] sm:$0x1]
    %v880 = vlaneseq
    %v881 = vshrl.u32 %v880, 7
    %v882 = vsub.s32 0, %v881
    %v883 = vrot.slane %v878, %v882
    %v901 = vunpack.c.l.b16 %v862
    %v902 = vunpack.c.l.b16 %v863
    %v903 = vunpack.c.l.b16 %v864
    %v904 = vunpack.c.l.b16 %v865
    %v905 = vunpack.c.l.b16 %v866
    %v906 = vunpack.c.l.b16 %v867
    %v907 = vunpack.c.l.b16 %v868
    %v908 = vunpack.c.l.b16 %v869
    %v909 = vunpack.c.l.b16 %v870
    %v910 = vunpack.c.l.b16 %v871
    %v911 = vunpack.c.l.b16 %v872
    %v912 = vunpack.c.l.b16 %v873
    %v913 = vunpack.c.l.b16 %v874
    %v914 = vunpack.c.l.b16 %v875
    %v915 = vunpack.c.l.b16 %v876
    %v916 = vunpack.c.l.b16 %v877
    %v917 = vpack.c.b16 %v902, %v901
    %v918 = vpack.c.b16 %v904, %v903
    %v919 = vpack.c.b16 %v906, %v905
    %v920 = vpack.c.b16 %v908, %v907
    %v921 = vpack.c.b16 %v910, %v909
    %v922 = vpack.c.b16 %v912, %v911
    %v923 = vpack.c.b16 %v914, %v913
    %v924 = vpack.c.b16 %v916, %v915
    %933 = vmatprep.subr.bf16.mxu0 0
    %934 = vmatpush1.bf16.msra.mxu0 %v917
    %935 = vmatprep.subr.bf16.mxu0 0
    %936 = vmatpush1.bf16.msra.mxu0 %v918
    %937 = vmatprep.subr.bf16.mxu0 0
    %938 = vmatpush1.bf16.msra.mxu0 %v919
    %939 = vmatprep.subr.bf16.mxu0 0
    %940 = vmatpush1.bf16.msra.mxu0 %v920
    %941 = vmatprep.subr.bf16.mxu0 0
    %942 = vmatpush1.bf16.msra.mxu0 %v921
    %943 = vmatprep.subr.bf16.mxu0 0
    %944 = vmatpush1.bf16.msra.mxu0 %v922
    %945 = vmatprep.subr.bf16.mxu0 0
    %946 = vmatpush1.bf16.msra.mxu0 %v923
    %947 = vmatprep.subr.bf16.mxu0 0
    %948 = vmatpush1.bf16.msra.mxu0 %v924
    %949 = vmatprep.subr.bf16.mxu0 0
    %950 = vmatpush1.bf16.msra.mxu0 0
    %951 = vmatprep.subr.bf16.mxu0 0
    %952 = vmatpush1.bf16.msra.mxu0 0
    %953 = vmatprep.subr.bf16.mxu0 0
    %954 = vmatpush1.bf16.msra.mxu0 0
    %955 = vmatprep.subr.bf16.mxu0 0
    %956 = vmatpush1.bf16.msra.mxu0 0
    %957 = vmatprep.subr.bf16.mxu0 0
    %958 = vmatpush1.bf16.msra.mxu0 0
    %959 = vmatprep.subr.bf16.mxu0 0
    %960 = vmatpush1.bf16.msra.mxu0 0
    %961 = vmatprep.subr.bf16.mxu0 0
    %962 = vmatpush1.bf16.msra.mxu0 0
    %963 = vmatprep.subr.bf16.mxu0 0
    %964 = vmatpush1.bf16.msra.mxu0 0
    %965 = vmatprep.mubr.bf16.mxu0 0
    %966 = vmatmul.mubr.bf16.gmra.mrb[0].mxu0 %v854
    %v967 = vpop.f32.mrb[0].mxu0
    %v968 = vadd.f32 %v883, %v967
    %v969 = vpop.f32.mrb[0].mxu0
    %v970 = vpop.f32.mrb[0].mxu0
    %v971 = vadd.f32 %v883, %v970
    %v972 = vpop.f32.mrb[0].mxu0
    %973 = vmatprep.mubr.bf16.mxu0 0
    %974 = vmatmul.mubr.bf16.gmra.mrb[0].mxu0 %v855
    %v975 = vpop.f32.mrb[0].mxu0
    %v976 = vadd.f32 %v883, %v975
    %v977 = vpop.f32.mrb[0].mxu0
    %v978 = vpop.f32.mrb[0].mxu0
    %v979 = vadd.f32 %v883, %v978
    %v980 = vpop.f32.mrb[0].mxu0
    %981 = vmatprep.mubr.bf16.mxu0 0
    %982 = vmatmul.mubr.bf16.gmra.mrb[0].mxu0 %v856
    %v983 = vpop.f32.mrb[0].mxu0
    %v984 = vadd.f32 %v883, %v983
    %v985 = vpop.f32.mrb[0].mxu0
    %v986 = vpop.f32.mrb[0].mxu0
    %v987 = vadd.f32 %v883, %v986
    %v988 = vpop.f32.mrb[0].mxu0
    %989 = vmatprep.mubr.bf16.mxu0 0
    %990 = vmatmul.mubr.bf16.gmra.mrb[0].mxu0 %v857
    %v991 = vpop.f32.mrb[0].mxu0
    %v992 = vadd.f32 %v883, %v991
    %v993 = vpop.f32.mrb[0].mxu0
    %v994 = vpop.f32.mrb[0].mxu0
    %v995 = vadd.f32 %v883, %v994
    %v996 = vpop.f32.mrb[0].mxu0
    %997 = vmatprep.mubr.bf16.mxu0 0
    %998 = vmatmul.mubr.bf16.gmra.mrb[0].mxu0 %v858
    %v999 = vpop.f32.mrb[0].mxu0
    %v1000 = vadd.f32 %v883, %v999
    %v1001 = vpop.f32.mrb[0].mxu0
    %v1002 = vpop.f32.mrb[0].mxu0
    %v1003 = vadd.f32 %v883, %v1002
    %v1004 = vpop.f32.mrb[0].mxu0
    %1005 = vmatprep.mubr.bf16.mxu0 0
    %1006 = vmatmul.mubr.bf16.gmra.mrb[0].mxu0 %v859
    %v1007 = vpop.f32.mrb[0].mxu0
    %v1008 = vadd.f32 %v883, %v1007
    %v1009 = vpop.f32.mrb[0].mxu0
    %v1010 = vpop.f32.mrb[0].mxu0
    %v1011 = vadd.f32 %v883, %v1010
    %v1012 = vpop.f32.mrb[0].mxu0
    %1013 = vmatprep.mubr.bf16.mxu0 0
    %1014 = vmatmul.mubr.bf16.gmra.mrb[0].mxu0 %v860
    %v1015 = vpop.f32.mrb[0].mxu0
    %v1016 = vadd.f32 %v883, %v1015
    %v1017 = vpop.f32.mrb[0].mxu0
    %v1018 = vpop.f32.mrb[0].mxu0
    %v1019 = vadd.f32 %v883, %v1018
    %v1020 = vpop.f32.mrb[0].mxu0
    %1021 = vmatprep.mubr.bf16.mxu0 0
    %1022 = vmatmul.mubr.bf16.gmra.mrb[0].mxu0 %v861
    %v1023 = vpop.f32.mrb[0].mxu0
    %v1024 = vadd.f32 %v883, %v1023
    %v1025 = vpop.f32.mrb[0].mxu0
    %v1026 = vpop.f32.mrb[0].mxu0
    %v1027 = vadd.f32 %v883, %v1026
    %v1028 = vpop.f32.mrb[0].mxu0
    %1029 = vdwg.mxu0
    %v1030 = vadd.f32 %v630, %v968
    %v1031 = vadd.f32 %v631, %v971
    %v1032 = vadd.f32 %v632, %v976
    %v1033 = vadd.f32 %v633, %v979
    %v1034 = vadd.f32 %v634, %v984
    %v1035 = vadd.f32 %v635, %v987
    %v1036 = vadd.f32 %v636, %v992
    %v1037 = vadd.f32 %v637, %v995
    %v1038 = vadd.f32 %v638, %v1000
    %v1039 = vadd.f32 %v639, %v1003
    %v1040 = vadd.f32 %v640, %v1008
    %v1041 = vadd.f32 %v641, %v1011
    %v1042 = vadd.f32 %v642, %v1016
    %v1043 = vadd.f32 %v643, %v1019
    %v1044 = vadd.f32 %v644, %v1024
    %v1045 = vadd.f32 %v645, %v1027
    %v1046 = vmax.f32 %v1030, 0.0
    %v1047 = vmax.f32 %v1031, 0.0
    %v1048 = vmax.f32 %v1032, 0.0
    %v1049 = vmax.f32 %v1033, 0.0
    %v1050 = vmax.f32 %v1034, 0.0
    %v1051 = vmax.f32 %v1035, 0.0
    %v1052 = vmax.f32 %v1036, 0.0
    %v1053 = vmax.f32 %v1037, 0.0
    %v1054 = vmax.f32 %v1038, 0.0
    %v1055 = vmax.f32 %v1039, 0.0
    %v1056 = vmax.f32 %v1040, 0.0
    %v1057 = vmax.f32 %v1041, 0.0
    %v1058 = vmax.f32 %v1042, 0.0
    %v1059 = vmax.f32 %v1043, 0.0
    %v1060 = vmax.f32 %v1044, 0.0
    %v1061 = vmax.f32 %v1045, 0.0
    %v1062 = vpack.c.bf16 %v1047, %v1046
    %v1063 = vpack.c.bf16 %v1049, %v1048
    %v1064 = vpack.c.bf16 %v1051, %v1050
    %v1065 = vpack.c.bf16 %v1053, %v1052
    %v1066 = vpack.c.bf16 %v1055, %v1054
    %v1067 = vpack.c.bf16 %v1057, %v1056
    %v1068 = vpack.c.bf16 %v1059, %v1058
    %v1069 = vpack.c.bf16 %v1061, %v1060
    %v1070 = vld [vmem:[#allocation8 + $0x8] sm:$0xf]
    %v1071 = vld [vmem:[#allocation8 + $0x4c] sm:$0xf]
    %v1072 = vld [vmem:[#allocation8 + $0x90] sm:$0xf]
    %v1073 = vld [vmem:[#allocation8 + $0xd4] sm:$0xf]
    %v1074 = vld [vmem:[#allocation8 + $0x118] sm:$0xf]
    %v1075 = vld [vmem:[#allocation8 + $0x15c] sm:$0xf]
    %v1076 = vld [vmem:[#allocation8 + $0x1a0] sm:$0xf]
    %v1077 = vld [vmem:[#allocation8 + $0x1e4] sm:$0xf]
    %v1078 = vld [vmem:[#allocation8 + $0x228] sm:$0xf]
    %v1079 = vld [vmem:[#allocation8 + $0x26c] sm:$0xf]
    %v1080 = vld [vmem:[#allocation8 + $0x2b0] sm:$0xf]
    %v1081 = vld [vmem:[#allocation8 + $0x2f4] sm:$0xf]
    %v1082 = vld [vmem:[#allocation8 + $0x338] sm:$0xf]
    %v1083 = vld [vmem:[#allocation8 + $0x37c] sm:$0xf]
    %v1084 = vld [vmem:[#allocation8 + $0x3c0] sm:$0xf]
    %v1085 = vld [vmem:[#allocation8 + $0x404] sm:$0xf]
    %v1086 = vld [vmem:[%s4 + $0x3] sm:$0x1]
    %v1088 = vlaneseq
    %v1089 = vshrl.u32 %v1088, 7
    %v1090 = vsub.s32 0, %v1089
    %v1091 = vrot.slane %v1086, %v1090
    %v1109 = vunpack.c.l.b16 %v1070
    %v1110 = vunpack.c.l.b16 %v1071
    %v1111 = vunpack.c.l.b16 %v1072
    %v1112 = vunpack.c.l.b16 %v1073
    %v1113 = vunpack.c.l.b16 %v1074
    %v1114 = vunpack.c.l.b16 %v1075
    %v1115 = vunpack.c.l.b16 %v1076
    %v1116 = vunpack.c.l.b16 %v1077
    %v1117 = vunpack.c.l.b16 %v1078
    %v1118 = vunpack.c.l.b16 %v1079
    %v1119 = vunpack.c.l.b16 %v1080
    %v1120 = vunpack.c.l.b16 %v1081
    %v1121 = vunpack.c.l.b16 %v1082
    %v1122 = vunpack.c.l.b16 %v1083
    %v1123 = vunpack.c.l.b16 %v1084
    %v1124 = vunpack.c.l.b16 %v1085
    %v1125 = vpack.c.b16 %v1110, %v1109
    %v1126 = vpack.c.b16 %v1112, %v1111
    %v1127 = vpack.c.b16 %v1114, %v1113
    %v1128 = vpack.c.b16 %v1116, %v1115
    %v1129 = vpack.c.b16 %v1118, %v1117
    %v1130 = vpack.c.b16 %v1120, %v1119
    %v1131 = vpack.c.b16 %v1122, %v1121
    %v1132 = vpack.c.b16 %v1124, %v1123
    %1141 = vmatprep.subr.bf16.mxu0 0
    %1142 = vmatpush1.bf16.msra.mxu0 %v1125
    %1143 = vmatprep.subr.bf16.mxu0 0
    %1144 = vmatpush1.bf16.msra.mxu0 %v1126
    %1145 = vmatprep.subr.bf16.mxu0 0
    %1146 = vmatpush1.bf16.msra.mxu0 %v1127
    %1147 = vmatprep.subr.bf16.mxu0 0
    %1148 = vmatpush1.bf16.msra.mxu0 %v1128
    %1149 = vmatprep.subr.bf16.mxu0 0
    %1150 = vmatpush1.bf16.msra.mxu0 %v1129
    %1151 = vmatprep.subr.bf16.mxu0 0
    %1152 = vmatpush1.bf16.msra.mxu0 %v1130
    %1153 = vmatprep.subr.bf16.mxu0 0
    %1154 = vmatpush1.bf16.msra.mxu0 %v1131
    %1155 = vmatprep.subr.bf16.mxu0 0
    %1156 = vmatpush1.bf16.msra.mxu0 %v1132
    %1157 = vmatprep.subr.bf16.mxu0 0
    %1158 = vmatpush1.bf16.msra.mxu0 0
    %1159 = vmatprep.subr.bf16.mxu0 0
    %1160 = vmatpush1.bf16.msra.mxu0 0
    %1161 = vmatprep.subr.bf16.mxu0 0
    %1162 = vmatpush1.bf16.msra.mxu0 0
    %1163 = vmatprep.subr.bf16.mxu0 0
    %1164 = vmatpush1.bf16.msra.mxu0 0
    %1165 = vmatprep.subr.bf16.mxu0 0
    %1166 = vmatpush1.bf16.msra.mxu0 0
    %1167 = vmatprep.subr.bf16.mxu0 0
    %1168 = vmatpush1.bf16.msra.mxu0 0
    %1169 = vmatprep.subr.bf16.mxu0 0
    %1170 = vmatpush1.bf16.msra.mxu0 0
    %1171 = vmatprep.subr.bf16.mxu0 0
    %1172 = vmatpush1.bf16.msra.mxu0 0
    %1173 = vmatprep.mubr.bf16.mxu0 0
    %1174 = vmatmul.mubr.bf16.gmra.mrb[0].mxu0 %v1062
    %v1175 = vpop.f32.mrb[0].mxu0
    %v1176 = vadd.f32 %v1091, %v1175
    %v1177 = vpop.f32.mrb[0].mxu0
    %v1178 = vpop.f32.mrb[0].mxu0
    %v1179 = vadd.f32 %v1091, %v1178
    %v1180 = vpop.f32.mrb[0].mxu0
    %1181 = vmatprep.mubr.bf16.mxu0 0
    %1182 = vmatmul.mubr.bf16.gmra.mrb[0].mxu0 %v1063
    %v1183 = vpop.f32.mrb[0].mxu0
    %v1184 = vadd.f32 %v1091, %v1183
    %v1185 = vpop.f32.mrb[0].mxu0
    %v1186 = vpop.f32.mrb[0].mxu0
    %v1187 = vadd.f32 %v1091, %v1186
    %v1188 = vpop.f32.mrb[0].mxu0
    %1189 = vmatprep.mubr.bf16.mxu0 0
    %1190 = vmatmul.mubr.bf16.gmra.mrb[0].mxu0 %v1064
    %v1191 = vpop.f32.mrb[0].mxu0
    %v1192 = vadd.f32 %v1091, %v1191
    %v1193 = vpop.f32.mrb[0].mxu0
    %v1194 = vpop.f32.mrb[0].mxu0
    %v1195 = vadd.f32 %v1091, %v1194
    %v1196 = vpop.f32.mrb[0].mxu0
    %1197 = vmatprep.mubr.bf16.mxu0 0
    %1198 = vmatmul.mubr.bf16.gmra.mrb[0].mxu0 %v1065
    %v1199 = vpop.f32.mrb[0].mxu0
    %v1200 = vadd.f32 %v1091, %v1199
    %v1201 = vpop.f32.mrb[0].mxu0
    %v1202 = vpop.f32.mrb[0].mxu0
    %v1203 = vadd.f32 %v1091, %v1202
    %v1204 = vpop.f32.mrb[0].mxu0
    %1205 = vmatprep.mubr.bf16.mxu0 0
    %1206 = vmatmul.mubr.bf16.gmra.mrb[0].mxu0 %v1066
    %v1207 = vpop.f32.mrb[0].mxu0
    %v1208 = vadd.f32 %v1091, %v1207
    %v1209 = vpop.f32.mrb[0].mxu0
    %v1210 = vpop.f32.mrb[0].mxu0
    %v1211 = vadd.f32 %v1091, %v1210
    %v1212 = vpop.f32.mrb[0].mxu0
    %1213 = vmatprep.mubr.bf16.mxu0 0
    %1214 = vmatmul.mubr.bf16.gmra.mrb[0].mxu0 %v1067
    %v1215 = vpop.f32.mrb[0].mxu0
    %v1216 = vadd.f32 %v1091, %v1215
    %v1217 = vpop.f32.mrb[0].mxu0
    %v1218 = vpop.f32.mrb[0].mxu0
    %v1219 = vadd.f32 %v1091, %v1218
    %v1220 = vpop.f32.mrb[0].mxu0
    %1221 = vmatprep.mubr.bf16.mxu0 0
    %1222 = vmatmul.mubr.bf16.gmra.mrb[0].mxu0 %v1068
    %v1223 = vpop.f32.mrb[0].mxu0
    %v1224 = vadd.f32 %v1091, %v1223
    %v1225 = vpop.f32.mrb[0].mxu0
    %v1226 = vpop.f32.mrb[0].mxu0
    %v1227 = vadd.f32 %v1091, %v1226
    %v1228 = vpop.f32.mrb[0].mxu0
    %1229 = vmatprep.mubr.bf16.mxu0 0
    %1230 = vmatmul.mubr.bf16.gmra.mrb[0].mxu0 %v1069
    %v1231 = vpop.f32.mrb[0].mxu0
    %v1232 = vadd.f32 %v1091, %v1231
    %v1233 = vpop.f32.mrb[0].mxu0
    %v1234 = vpop.f32.mrb[0].mxu0
    %v1235 = vadd.f32 %v1091, %v1234
    %v1236 = vpop.f32.mrb[0].mxu0
    %1237 = vdwg.mxu0
    %v1238 = vmax.f32 %v1176, 0.0
    %v1239 = vmax.f32 %v1179, 0.0
    %v1240 = vmax.f32 %v1184, 0.0
    %v1241 = vmax.f32 %v1187, 0.0
    %v1242 = vmax.f32 %v1192, 0.0
    %v1243 = vmax.f32 %v1195, 0.0
    %v1244 = vmax.f32 %v1200, 0.0
    %v1245 = vmax.f32 %v1203, 0.0
    %v1246 = vmax.f32 %v1208, 0.0
    %v1247 = vmax.f32 %v1211, 0.0
    %v1248 = vmax.f32 %v1216, 0.0
    %v1249 = vmax.f32 %v1219, 0.0
    %v1250 = vmax.f32 %v1224, 0.0
    %v1251 = vmax.f32 %v1227, 0.0
    %v1252 = vmax.f32 %v1232, 0.0
    %v1253 = vmax.f32 %v1235, 0.0
    %v1254 = vpack.c.bf16 %v1239, %v1238
    %v1255 = vpack.c.bf16 %v1241, %v1240
    %v1256 = vpack.c.bf16 %v1243, %v1242
    %v1257 = vpack.c.bf16 %v1245, %v1244
    %v1258 = vpack.c.bf16 %v1247, %v1246
    %v1259 = vpack.c.bf16 %v1249, %v1248
    %v1260 = vpack.c.bf16 %v1251, %v1250
    %v1261 = vpack.c.bf16 %v1253, %v1252
    %v1262 = vld [vmem:[#allocation8 + $0xc] sm:$0xf]
    %v1263 = vld [vmem:[#allocation8 + $0x50] sm:$0xf]
    %v1264 = vld [vmem:[#allocation8 + $0x94] sm:$0xf]
    %v1265 = vld [vmem:[#allocation8 + $0xd8] sm:$0xf]
    %v1266 = vld [vmem:[#allocation8 + $0x11c] sm:$0xf]
    %v1267 = vld [vmem:[#allocation8 + $0x160] sm:$0xf]
    %v1268 = vld [vmem:[#allocation8 + $0x1a4] sm:$0xf]
    %v1269 = vld [vmem:[#allocation8 + $0x1e8] sm:$0xf]
    %v1270 = vld [vmem:[#allocation8 + $0x22c] sm:$0xf]
    %v1271 = vld [vmem:[#allocation8 + $0x270] sm:$0xf]
    %v1272 = vld [vmem:[#allocation8 + $0x2b4] sm:$0xf]
    %v1273 = vld [vmem:[#allocation8 + $0x2f8] sm:$0xf]
    %v1274 = vld [vmem:[#allocation8 + $0x33c] sm:$0xf]
    %v1275 = vld [vmem:[#allocation8 + $0x380] sm:$0xf]
    %v1276 = vld [vmem:[#allocation8 + $0x3c4] sm:$0xf]
    %v1277 = vld [vmem:[#allocation8 + $0x408] sm:$0xf]
    %v1278 = vld [vmem:[%s4 + $0x4] sm:$0x1]
    %v1280 = vlaneseq
    %v1281 = vshrl.u32 %v1280, 7
    %v1282 = vsub.s32 0, %v1281
    %v1283 = vrot.slane %v1278, %v1282
    %v1301 = vunpack.c.l.b16 %v1262
    %v1302 = vunpack.c.l.b16 %v1263
    %v1303 = vunpack.c.l.b16 %v1264
    %v1304 = vunpack.c.l.b16 %v1265
    %v1305 = vunpack.c.l.b16 %v1266
    %v1306 = vunpack.c.l.b16 %v1267
    %v1307 = vunpack.c.l.b16 %v1268
    %v1308 = vunpack.c.l.b16 %v1269
    %v1309 = vunpack.c.l.b16 %v1270
    %v1310 = vunpack.c.l.b16 %v1271
    %v1311 = vunpack.c.l.b16 %v1272
    %v1312 = vunpack.c.l.b16 %v1273
    %v1313 = vunpack.c.l.b16 %v1274
    %v1314 = vunpack.c.l.b16 %v1275
    %v1315 = vunpack.c.l.b16 %v1276
    %v1316 = vunpack.c.l.b16 %v1277
    %v1317 = vpack.c.b16 %v1302, %v1301
    %v1318 = vpack.c.b16 %v1304, %v1303
    %v1319 = vpack.c.b16 %v1306, %v1305
    %v1320 = vpack.c.b16 %v1308, %v1307
    %v1321 = vpack.c.b16 %v1310, %v1309
    %v1322 = vpack.c.b16 %v1312, %v1311
    %v1323 = vpack.c.b16 %v1314, %v1313
    %v1324 = vpack.c.b16 %v1316, %v1315
    %1333 = vmatprep.subr.bf16.mxu0 0
    %1334 = vmatpush1.bf16.msra.mxu0 %v1317
    %1335 = vmatprep.subr.bf16.mxu0 0
    %1336 = vmatpush1.bf16.msra.mxu0 %v1318
    %1337 = vmatprep.subr.bf16.mxu0 0
    %1338 = vmatpush1.bf16.msra.mxu0 %v1319
    %1339 = vmatprep.subr.bf16.mxu0 0
    %1340 = vmatpush1.bf16.msra.mxu0 %v1320
    %1341 = vmatprep.subr.bf16.mxu0 0
    %1342 = vmatpush1.bf16.msra.mxu0 %v1321
    %1343 = vmatprep.subr.bf16.mxu0 0
    %1344 = vmatpush1.bf16.msra.mxu0 %v1322
    %1345 = vmatprep.subr.bf16.mxu0 0
    %1346 = vmatpush1.bf16.msra.mxu0 %v1323
    %1347 = vmatprep.subr.bf16.mxu0 0
    %1348 = vmatpush1.bf16.msra.mxu0 %v1324
    %1349 = vmatprep.subr.bf16.mxu0 0
    %1350 = vmatpush1.bf16.msra.mxu0 0
    %1351 = vmatprep.subr.bf16.mxu0 0
    %1352 = vmatpush1.bf16.msra.mxu0 0
    %1353 = vmatprep.subr.bf16.mxu0 0
    %1354 = vmatpush1.bf16.msra.mxu0 0
    %1355 = vmatprep.subr.bf16.mxu0 0
    %1356 = vmatpush1.bf16.msra.mxu0 0
    %1357 = vmatprep.subr.bf16.mxu0 0
    %1358 = vmatpush1.bf16.msra.mxu0 0
    %1359 = vmatprep.subr.bf16.mxu0 0
    %1360 = vmatpush1.bf16.msra.mxu0 0
    %1361 = vmatprep.subr.bf16.mxu0 0
    %1362 = vmatpush1.bf16.msra.mxu0 0
    %1363 = vmatprep.subr.bf16.mxu0 0
    %1364 = vmatpush1.bf16.msra.mxu0 0
    %1365 = vmatprep.mubr.bf16.mxu0 0
    %1366 = vmatmul.mubr.bf16.gmra.mrb[0].mxu0 %v1254
    %v1367 = vpop.f32.mrb[0].mxu0
    %v1368 = vadd.f32 %v1283, %v1367
    %v1369 = vpop.f32.mrb[0].mxu0
    %v1370 = vpop.f32.mrb[0].mxu0
    %v1371 = vadd.f32 %v1283, %v1370
    %v1372 = vpop.f32.mrb[0].mxu0
    %1373 = vmatprep.mubr.bf16.mxu0 0
    %1374 = vmatmul.mubr.bf16.gmra.mrb[0].mxu0 %v1255
    %v1375 = vpop.f32.mrb[0].mxu0
    %v1376 = vadd.f32 %v1283, %v1375
    %v1377 = vpop.f32.mrb[0].mxu0
    %v1378 = vpop.f32.mrb[0].mxu0
    %v1379 = vadd.f32 %v1283, %v1378
    %v1380 = vpop.f32.mrb[0].mxu0
    %1381 = vmatprep.mubr.bf16.mxu0 0
    %1382 = vmatmul.mubr.bf16.gmra.mrb[0].mxu0 %v1256
    %v1383 = vpop.f32.mrb[0].mxu0
    %v1384 = vadd.f32 %v1283, %v1383
    %v1385 = vpop.f32.mrb[0].mxu0
    %v1386 = vpop.f32.mrb[0].mxu0
    %v1387 = vadd.f32 %v1283, %v1386
    %v1388 = vpop.f32.mrb[0].mxu0
    %1389 = vmatprep.mubr.bf16.mxu0 0
    %1390 = vmatmul.mubr.bf16.gmra.mrb[0].mxu0 %v1257
    %v1391 = vpop.f32.mrb[0].mxu0
    %v1392 = vadd.f32 %v1283, %v1391
    %v1393 = vpop.f32.mrb[0].mxu0
    %v1394 = vpop.f32.mrb[0].mxu0
    %v1395 = vadd.f32 %v1283, %v1394
    %v1396 = vpop.f32.mrb[0].mxu0
    %1397 = vmatprep.mubr.bf16.mxu0 0
    %1398 = vmatmul.mubr.bf16.gmra.mrb[0].mxu0 %v1258
    %v1399 = vpop.f32.mrb[0].mxu0
    %v1400 = vadd.f32 %v1283, %v1399
    %v1401 = vpop.f32.mrb[0].mxu0
    %v1402 = vpop.f32.mrb[0].mxu0
    %v1403 = vadd.f32 %v1283, %v1402
    %v1404 = vpop.f32.mrb[0].mxu0
    %1405 = vmatprep.mubr.bf16.mxu0 0
    %1406 = vmatmul.mubr.bf16.gmra.mrb[0].mxu0 %v1259
    %v1407 = vpop.f32.mrb[0].mxu0
    %v1408 = vadd.f32 %v1283, %v1407
    %v1409 = vpop.f32.mrb[0].mxu0
    %v1410 = vpop.f32.mrb[0].mxu0
    %v1411 = vadd.f32 %v1283, %v1410
    %v1412 = vpop.f32.mrb[0].mxu0
    %1413 = vmatprep.mubr.bf16.mxu0 0
    %1414 = vmatmul.mubr.bf16.gmra.mrb[0].mxu0 %v1260
    %v1415 = vpop.f32.mrb[0].mxu0
    %v1416 = vadd.f32 %v1283, %v1415
    %v1417 = vpop.f32.mrb[0].mxu0
    %v1418 = vpop.f32.mrb[0].mxu0
    %v1419 = vadd.f32 %v1283, %v1418
    %v1420 = vpop.f32.mrb[0].mxu0
    %1421 = vmatprep.mubr.bf16.mxu0 0
    %1422 = vmatmul.mubr.bf16.gmra.mrb[0].mxu0 %v1261
    %v1423 = vpop.f32.mrb[0].mxu0
    %v1424 = vadd.f32 %v1283, %v1423
    %v1425 = vpop.f32.mrb[0].mxu0
    %v1426 = vpop.f32.mrb[0].mxu0
    %v1427 = vadd.f32 %v1283, %v1426
    %v1428 = vpop.f32.mrb[0].mxu0
    %1429 = vdwg.mxu0
    %v1430 = vadd.f32 %v1030, %v1368
    %v1431 = vadd.f32 %v1031, %v1371
    %v1432 = vadd.f32 %v1032, %v1376
    %v1433 = vadd.f32 %v1033, %v1379
    %v1434 = vadd.f32 %v1034, %v1384
    %v1435 = vadd.f32 %v1035, %v1387
    %v1436 = vadd.f32 %v1036, %v1392
    %v1437 = vadd.f32 %v1037, %v1395
    %v1438 = vadd.f32 %v1038, %v1400
    %v1439 = vadd.f32 %v1039, %v1403
    %v1440 = vadd.f32 %v1040, %v1408
    %v1441 = vadd.f32 %v1041, %v1411
    %v1442 = vadd.f32 %v1042, %v1416
    %v1443 = vadd.f32 %v1043, %v1419
    %v1444 = vadd.f32 %v1044, %v1424
    %v1445 = vadd.f32 %v1045, %v1427
    %v1446 = vmax.f32 %v1430, 0.0
    %v1447 = vmax.f32 %v1431, 0.0
    %v1448 = vmax.f32 %v1432, 0.0
    %v1449 = vmax.f32 %v1433, 0.0
    %v1450 = vmax.f32 %v1434, 0.0
    %v1451 = vmax.f32 %v1435, 0.0
    %v1452 = vmax.f32 %v1436, 0.0
    %v1453 = vmax.f32 %v1437, 0.0
    %v1454 = vmax.f32 %v1438, 0.0
    %v1455 = vmax.f32 %v1439, 0.0
    %v1456 = vmax.f32 %v1440, 0.0
    %v1457 = vmax.f32 %v1441, 0.0
    %v1458 = vmax.f32 %v1442, 0.0
    %v1459 = vmax.f32 %v1443, 0.0
    %v1460 = vmax.f32 %v1444, 0.0
    %v1461 = vmax.f32 %v1445, 0.0
    %v1462 = vpack.c.bf16 %v1447, %v1446
    %v1463 = vpack.c.bf16 %v1449, %v1448
    %v1464 = vpack.c.bf16 %v1451, %v1450
    %v1465 = vpack.c.bf16 %v1453, %v1452
    %v1466 = vpack.c.bf16 %v1455, %v1454
    %v1467 = vpack.c.bf16 %v1457, %v1456
    %v1468 = vpack.c.bf16 %v1459, %v1458
    %v1469 = vpack.c.bf16 %v1461, %v1460
    %v1470 = vld [vmem:[#allocation8 + $0x10] sm:$0xff]
    %v1471 = vld [vmem:[#allocation8 + $0x54] sm:$0xff]
    %v1472 = vld [vmem:[#allocation8 + $0x98] sm:$0xff]
    %v1473 = vld [vmem:[#allocation8 + $0xdc] sm:$0xff]
    %v1474 = vld [vmem:[#allocation8 + $0x120] sm:$0xff]
    %v1475 = vld [vmem:[#allocation8 + $0x164] sm:$0xff]
    %v1476 = vld [vmem:[#allocation8 + $0x1a8] sm:$0xff]
    %v1477 = vld [vmem:[#allocation8 + $0x1ec] sm:$0xff]
    %v1478 = vld [vmem:[#allocation8 + $0x230] sm:$0xff]
    %v1479 = vld [vmem:[#allocation8 + $0x274] sm:$0xff]
    %v1480 = vld [vmem:[#allocation8 + $0x2b8] sm:$0xff]
    %v1481 = vld [vmem:[#allocation8 + $0x2fc] sm:$0xff]
    %v1482 = vld [vmem:[#allocation8 + $0x340] sm:$0xff]
    %v1483 = vld [vmem:[#allocation8 + $0x384] sm:$0xff]
    %v1484 = vld [vmem:[#allocation8 + $0x3c8] sm:$0xff]
    %v1485 = vld [vmem:[#allocation8 + $0x40c] sm:$0xff]
    %v1486 = vld [vmem:[%s4 + $0x5] sm:$0x3]
    %v1488 = vlaneseq
    %v1489 = vshrl.u32 %v1488, 7
    %v1490 = vsub.s32 0, %v1489
    %v1491 = vrot.slane %v1486, %v1490
    %v1492 = vlaneseq
    %v1493 = vshrl.u32 %v1492, 7
    %v1494 = vsub.s32 1, %v1493
    %v1495 = vrot.slane %v1486, %v1494
    %v1514 = vunpack.c.l.b16 %v1470
    %v1515 = vunpack.c.h.b16 %v1470
    %v1516 = vunpack.c.l.b16 %v1471
    %v1517 = vunpack.c.h.b16 %v1471
    %v1518 = vunpack.c.l.b16 %v1472
    %v1519 = vunpack.c.h.b16 %v1472
    %v1520 = vunpack.c.l.b16 %v1473
    %v1521 = vunpack.c.h.b16 %v1473
    %v1522 = vunpack.c.l.b16 %v1474
    %v1523 = vunpack.c.h.b16 %v1474
    %v1524 = vunpack.c.l.b16 %v1475
    %v1525 = vunpack.c.h.b16 %v1475
    %v1526 = vunpack.c.l.b16 %v1476
    %v1527 = vunpack.c.h.b16 %v1476
    %v1528 = vunpack.c.l.b16 %v1477
    %v1529 = vunpack.c.h.b16 %v1477
    %v1530 = vunpack.c.l.b16 %v1478
    %v1531 = vunpack.c.h.b16 %v1478
    %v1532 = vunpack.c.l.b16 %v1479
    %v1533 = vunpack.c.h.b16 %v1479
    %v1534 = vunpack.c.l.b16 %v1480
    %v1535 = vunpack.c.h.b16 %v1480
    %v1536 = vunpack.c.l.b16 %v1481
    %v1537 = vunpack.c.h.b16 %v1481
    %v1538 = vunpack.c.l.b16 %v1482
    %v1539 = vunpack.c.h.b16 %v1482
    %v1540 = vunpack.c.l.b16 %v1483
    %v1541 = vunpack.c.h.b16 %v1483
    %v1542 = vunpack.c.l.b16 %v1484
    %v1543 = vunpack.c.h.b16 %v1484
    %v1544 = vunpack.c.l.b16 %v1485
    %v1545 = vunpack.c.h.b16 %v1485
    %v1546 = vpack.c.b16 %v1516, %v1514
    %v1547 = vpack.c.b16 %v1517, %v1515
    %v1548 = vpack.c.b16 %v1520, %v1518
    %v1549 = vpack.c.b16 %v1521, %v1519
    %v1550 = vpack.c.b16 %v1524, %v1522
    %v1551 = vpack.c.b16 %v1525, %v1523
    %v1552 = vpack.c.b16 %v1528, %v1526
    %v1553 = vpack.c.b16 %v1529, %v1527
    %v1554 = vpack.c.b16 %v1532, %v1530
    %v1555 = vpack.c.b16 %v1533, %v1531
    %v1556 = vpack.c.b16 %v1536, %v1534
    %v1557 = vpack.c.b16 %v1537, %v1535
    %v1558 = vpack.c.b16 %v1540, %v1538
    %v1559 = vpack.c.b16 %v1541, %v1539
    %v1560 = vpack.c.b16 %v1544, %v1542
    %v1561 = vpack.c.b16 %v1545, %v1543
    %1578 = vmatprep.subr.bf16.mxu0 %v1547
    %1579 = vmatpush1.bf16.msra.mxu0 %v1546
    %1580 = vmatprep.subr.bf16.mxu0 %v1549
    %1581 = vmatpush1.bf16.msra.mxu0 %v1548
    %1582 = vmatprep.subr.bf16.mxu0 %v1551
    %1583 = vmatpush1.bf16.msra.mxu0 %v1550
    %1584 = vmatprep.subr.bf16.mxu0 %v1553
    %1585 = vmatpush1.bf16.msra.mxu0 %v1552
    %1586 = vmatprep.subr.bf16.mxu0 %v1555
    %1587 = vmatpush1.bf16.msra.mxu0 %v1554
    %1588 = vmatprep.subr.bf16.mxu0 %v1557
    %1589 = vmatpush1.bf16.msra.mxu0 %v1556
    %1590 = vmatprep.subr.bf16.mxu0 %v1559
    %1591 = vmatpush1.bf16.msra.mxu0 %v1558
    %1592 = vmatprep.subr.bf16.mxu0 %v1561
    %1593 = vmatpush1.bf16.msra.mxu0 %v1560
    %1594 = vmatprep.subr.bf16.mxu0 0
    %1595 = vmatpush1.bf16.msra.mxu0 0
    %1596 = vmatprep.subr.bf16.mxu0 0
    %1597 = vmatpush1.bf16.msra.mxu0 0
    %1598 = vmatprep.subr.bf16.mxu0 0
    %1599 = vmatpush1.bf16.msra.mxu0 0
    %1600 = vmatprep.subr.bf16.mxu0 0
    %1601 = vmatpush1.bf16.msra.mxu0 0
    %1602 = vmatprep.subr.bf16.mxu0 0
    %1603 = vmatpush1.bf16.msra.mxu0 0
    %1604 = vmatprep.subr.bf16.mxu0 0
    %1605 = vmatpush1.bf16.msra.mxu0 0
    %1606 = vmatprep.subr.bf16.mxu0 0
    %1607 = vmatpush1.bf16.msra.mxu0 0
    %1608 = vmatprep.subr.bf16.mxu0 0
    %1609 = vmatpush1.bf16.msra.mxu0 0
    %1610 = vmatprep.mubr.bf16.mxu0 0
    %1611 = vmatmul.mubr.bf16.gmra.mrb[0].mxu0 %v1462
    %v1612 = vpop.f32.mrb[0].mxu0
    %v1613 = vadd.f32 %v1491, %v1612
    %v1614 = vpop.f32.mrb[0].mxu0
    %v1615 = vadd.f32 %v1495, %v1614
    %v1616 = vpop.f32.mrb[0].mxu0
    %v1617 = vadd.f32 %v1491, %v1616
    %v1618 = vpop.f32.mrb[0].mxu0
    %v1619 = vadd.f32 %v1495, %v1618
    %1620 = vmatprep.mubr.bf16.mxu0 0
    %1621 = vmatmul.mubr.bf16.gmra.mrb[0].mxu0 %v1463
    %v1622 = vpop.f32.mrb[0].mxu0
    %v1623 = vadd.f32 %v1491, %v1622
    %v1624 = vpop.f32.mrb[0].mxu0
    %v1625 = vadd.f32 %v1495, %v1624
    %v1626 = vpop.f32.mrb[0].mxu0
    %v1627 = vadd.f32 %v1491, %v1626
    %v1628 = vpop.f32.mrb[0].mxu0
    %v1629 = vadd.f32 %v1495, %v1628
    %1630 = vmatprep.mubr.bf16.mxu0 0
    %1631 = vmatmul.mubr.bf16.gmra.mrb[0].mxu0 %v1464
    %v1632 = vpop.f32.mrb[0].mxu0
    %v1633 = vadd.f32 %v1491, %v1632
    %v1634 = vpop.f32.mrb[0].mxu0
    %v1635 = vadd.f32 %v1495, %v1634
    %v1636 = vpop.f32.mrb[0].mxu0
    %v1637 = vadd.f32 %v1491, %v1636
    %v1638 = vpop.f32.mrb[0].mxu0
    %v1639 = vadd.f32 %v1495, %v1638
    %1640 = vmatprep.mubr.bf16.mxu0 0
    %1641 = vmatmul.mubr.bf16.gmra.mrb[0].mxu0 %v1465
    %v1642 = vpop.f32.mrb[0].mxu0
    %v1643 = vadd.f32 %v1491, %v1642
    %v1644 = vpop.f32.mrb[0].mxu0
    %v1645 = vadd.f32 %v1495, %v1644
    %v1646 = vpop.f32.mrb[0].mxu0
    %v1647 = vadd.f32 %v1491, %v1646
    %v1648 = vpop.f32.mrb[0].mxu0
    %v1649 = vadd.f32 %v1495, %v1648
    %1650 = vmatprep.mubr.bf16.mxu0 0
    %1651 = vmatmul.mubr.bf16.gmra.mrb[0].mxu0 %v1466
    %v1652 = vpop.f32.mrb[0].mxu0
    %v1653 = vadd.f32 %v1491, %v1652
    %v1654 = vpop.f32.mrb[0].mxu0
    %v1655 = vadd.f32 %v1495, %v1654
    %v1656 = vpop.f32.mrb[0].mxu0
    %v1657 = vadd.f32 %v1491, %v1656
    %v1658 = vpop.f32.mrb[0].mxu0
    %v1659 = vadd.f32 %v1495, %v1658
    %1660 = vmatprep.mubr.bf16.mxu0 0
    %1661 = vmatmul.mubr.bf16.gmra.mrb[0].mxu0 %v1467
    %v1662 = vpop.f32.mrb[0].mxu0
    %v1663 = vadd.f32 %v1491, %v1662
    %v1664 = vpop.f32.mrb[0].mxu0
    %v1665 = vadd.f32 %v1495, %v1664
    %v1666 = vpop.f32.mrb[0].mxu0
    %v1667 = vadd.f32 %v1491, %v1666
    %v1668 = vpop.f32.mrb[0].mxu0
    %v1669 = vadd.f32 %v1495, %v1668
    %1670 = vmatprep.mubr.bf16.mxu0 0
    %1671 = vmatmul.mubr.bf16.gmra.mrb[0].mxu0 %v1468
    %v1672 = vpop.f32.mrb[0].mxu0
    %v1673 = vadd.f32 %v1491, %v1672
    %v1674 = vpop.f32.mrb[0].mxu0
    %v1675 = vadd.f32 %v1495, %v1674
    %v1676 = vpop.f32.mrb[0].mxu0
    %v1677 = vadd.f32 %v1491, %v1676
    %v1678 = vpop.f32.mrb[0].mxu0
    %v1679 = vadd.f32 %v1495, %v1678
    %1680 = vmatprep.mubr.bf16.mxu0 0
    %1681 = vmatmul.mubr.bf16.gmra.mrb[0].mxu0 %v1469
    %v1682 = vpop.f32.mrb[0].mxu0
    %v1683 = vadd.f32 %v1491, %v1682
    %v1684 = vpop.f32.mrb[0].mxu0
    %v1685 = vadd.f32 %v1495, %v1684
    %v1686 = vpop.f32.mrb[0].mxu0
    %v1687 = vadd.f32 %v1491, %v1686
    %v1688 = vpop.f32.mrb[0].mxu0
    %v1689 = vadd.f32 %v1495, %v1688
    %1690 = vdwg.mxu0
    %v1691 = vmax.f32 %v1613, 0.0
    %v1692 = vmax.f32 %v1617, 0.0
    %v1693 = vmax.f32 %v1623, 0.0
    %v1694 = vmax.f32 %v1627, 0.0
    %v1695 = vmax.f32 %v1633, 0.0
    %v1696 = vmax.f32 %v1637, 0.0
    %v1697 = vmax.f32 %v1643, 0.0
    %v1698 = vmax.f32 %v1647, 0.0
    %v1699 = vmax.f32 %v1653, 0.0
    %v1700 = vmax.f32 %v1657, 0.0
    %v1701 = vmax.f32 %v1663, 0.0
    %v1702 = vmax.f32 %v1667, 0.0
    %v1703 = vmax.f32 %v1673, 0.0
    %v1704 = vmax.f32 %v1677, 0.0
    %v1705 = vmax.f32 %v1683, 0.0
    %v1706 = vmax.f32 %v1687, 0.0
    %v1707 = vmax.f32 %v1615, 0.0
    %v1708 = vmax.f32 %v1619, 0.0
    %v1709 = vmax.f32 %v1625, 0.0
    %v1710 = vmax.f32 %v1629, 0.0
    %v1711 = vmax.f32 %v1635, 0.0
    %v1712 = vmax.f32 %v1639, 0.0
    %v1713 = vmax.f32 %v1645, 0.0
    %v1714 = vmax.f32 %v1649, 0.0
    %v1715 = vmax.f32 %v1655, 0.0
    %v1716 = vmax.f32 %v1659, 0.0
    %v1717 = vmax.f32 %v1665, 0.0
    %v1718 = vmax.f32 %v1669, 0.0
    %v1719 = vmax.f32 %v1675, 0.0
    %v1720 = vmax.f32 %v1679, 0.0
    %v1721 = vmax.f32 %v1685, 0.0
    %v1722 = vmax.f32 %v1689, 0.0
    %v1723 = vpack.c.bf16 %v1708, %v1707
    %v1724 = vpack.c.bf16 %v1710, %v1709
    %v1725 = vpack.c.bf16 %v1712, %v1711
    %v1726 = vpack.c.bf16 %v1714, %v1713
    %v1727 = vpack.c.bf16 %v1716, %v1715
    %v1728 = vpack.c.bf16 %v1718, %v1717
    %v1729 = vpack.c.bf16 %v1720, %v1719
    %v1730 = vpack.c.bf16 %v1722, %v1721
    %v1731 = vpack.c.bf16 %v1692, %v1691
    %v1732 = vpack.c.bf16 %v1694, %v1693
    %v1733 = vpack.c.bf16 %v1696, %v1695
    %v1734 = vpack.c.bf16 %v1698, %v1697
    %v1735 = vpack.c.bf16 %v1700, %v1699
    %v1736 = vpack.c.bf16 %v1702, %v1701
    %v1737 = vpack.c.bf16 %v1704, %v1703
    %v1738 = vpack.c.bf16 %v1706, %v1705
    %v1739 = vld [vmem:[#allocation8 + $0x18] sm:$0xff]
    %v1740 = vld [vmem:[#allocation8 + $0x20] sm:$0xf]
    %v1741 = vld [vmem:[#allocation8 + $0x5c] sm:$0xff]
    %v1742 = vld [vmem:[#allocation8 + $0x64] sm:$0xf]
    %v1743 = vld [vmem:[#allocation8 + $0xa0] sm:$0xff]
    %v1744 = vld [vmem:[#allocation8 + $0xa8] sm:$0xf]
    %v1745 = vld [vmem:[#allocation8 + $0xe4] sm:$0xff]
    %v1746 = vld [vmem:[#allocation8 + $0xec] sm:$0xf]
    %v1747 = vld [vmem:[#allocation8 + $0x128] sm:$0xff]
    %v1748 = vld [vmem:[#allocation8 + $0x130] sm:$0xf]
    %v1749 = vld [vmem:[#allocation8 + $0x16c] sm:$0xff]
    %v1750 = vld [vmem:[#allocation8 + $0x174] sm:$0xf]
    %v1751 = vld [vmem:[#allocation8 + $0x1b0] sm:$0xff]
    %v1752 = vld [vmem:[#allocation8 + $0x1b8] sm:$0xf]
    %v1753 = vld [vmem:[#allocation8 + $0x1f4] sm:$0xff]
    %v1754 = vld [vmem:[#allocation8 + $0x1fc] sm:$0xf]
    %v1755 = vld [vmem:[#allocation8 + $0x238] sm:$0xff]
    %v1756 = vld [vmem:[#allocation8 + $0x240] sm:$0xf]
    %v1757 = vld [vmem:[#allocation8 + $0x27c] sm:$0xff]
    %v1758 = vld [vmem:[#allocation8 + $0x284] sm:$0xf]
    %v1759 = vld [vmem:[#allocation8 + $0x2c0] sm:$0xff]
    %v1760 = vld [vmem:[#allocation8 + $0x2c8] sm:$0xf]
    %v1761 = vld [vmem:[#allocation8 + $0x304] sm:$0xff]
    %v1762 = vld [vmem:[#allocation8 + $0x30c] sm:$0xf]
    %v1763 = vld [vmem:[#allocation8 + $0x348] sm:$0xff]
    %v1764 = vld [vmem:[#allocation8 + $0x350] sm:$0xf]
    %v1765 = vld [vmem:[#allocation8 + $0x38c] sm:$0xff]
    %v1766 = vld [vmem:[#allocation8 + $0x394] sm:$0xf]
    %v1767 = vld [vmem:[#allocation8 + $0x3d0] sm:$0xff]
    %v1768 = vld [vmem:[#allocation8 + $0x3d8] sm:$0xf]
    %v1769 = vld [vmem:[#allocation8 + $0x414] sm:$0xff]
    %v1770 = vld [vmem:[#allocation8 + $0x41c] sm:$0xf]
    %v1771 = vld [vmem:[%s4 + $0x7] sm:$0x7]
    %v1773 = vlaneseq
    %v1774 = vshrl.u32 %v1773, 7
    %v1775 = vsub.s32 0, %v1774
    %v1776 = vrot.slane %v1771, %v1775
    %v1777 = vlaneseq
    %v1778 = vshrl.u32 %v1777, 7
    %v1779 = vsub.s32 1, %v1778
    %v1780 = vrot.slane %v1771, %v1779
    %v1781 = vlaneseq
    %v1782 = vshrl.u32 %v1781, 7
    %v1783 = vsub.s32 2, %v1782
    %v1784 = vrot.slane %v1771, %v1783
    %v1820 = vunpack.c.l.b16 %v1739
    %v1821 = vunpack.c.h.b16 %v1739
    %v1822 = vunpack.c.l.b16 %v1740
    %v1823 = vunpack.c.l.b16 %v1741
    %v1824 = vunpack.c.h.b16 %v1741
    %v1825 = vunpack.c.l.b16 %v1742
    %v1826 = vunpack.c.l.b16 %v1743
    %v1827 = vunpack.c.h.b16 %v1743
    %v1828 = vunpack.c.l.b16 %v1744
    %v1829 = vunpack.c.l.b16 %v1745
    %v1830 = vunpack.c.h.b16 %v1745
    %v1831 = vunpack.c.l.b16 %v1746
    %v1832 = vunpack.c.l.b16 %v1747
    %v1833 = vunpack.c.h.b16 %v1747
    %v1834 = vunpack.c.l.b16 %v1748
    %v1835 = vunpack.c.l.b16 %v1749
    %v1836 = vunpack.c.h.b16 %v1749
    %v1837 = vunpack.c.l.b16 %v1750
    %v1838 = vunpack.c.l.b16 %v1751
    %v1839 = vunpack.c.h.b16 %v1751
    %v1840 = vunpack.c.l.b16 %v1752
    %v1841 = vunpack.c.l.b16 %v1753
    %v1842 = vunpack.c.h.b16 %v1753
    %v1843 = vunpack.c.l.b16 %v1754
    %v1844 = vunpack.c.l.b16 %v1755
    %v1845 = vunpack.c.h.b16 %v1755
    %v1846 = vunpack.c.l.b16 %v1756
    %v1847 = vunpack.c.l.b16 %v1757
    %v1848 = vunpack.c.h.b16 %v1757
    %v1849 = vunpack.c.l.b16 %v1758
    %v1850 = vunpack.c.l.b16 %v1759
    %v1851 = vunpack.c.h.b16 %v1759
    %v1852 = vunpack.c.l.b16 %v1760
    %v1853 = vunpack.c.l.b16 %v1761
    %v1854 = vunpack.c.h.b16 %v1761
    %v1855 = vunpack.c.l.b16 %v1762
    %v1856 = vunpack.c.l.b16 %v1763
    %v1857 = vunpack.c.h.b16 %v1763
    %v1858 = vunpack.c.l.b16 %v1764
    %v1859 = vunpack.c.l.b16 %v1765
    %v1860 = vunpack.c.h.b16 %v1765
    %v1861 = vunpack.c.l.b16 %v1766
    %v1862 = vunpack.c.l.b16 %v1767
    %v1863 = vunpack.c.h.b16 %v1767
    %v1864 = vunpack.c.l.b16 %v1768
    %v1865 = vunpack.c.l.b16 %v1769
    %v1866 = vunpack.c.h.b16 %v1769
    %v1867 = vunpack.c.l.b16 %v1770
    %v1868 = vpack.c.b16 %v1823, %v1820
    %v1869 = vpack.c.b16 %v1824, %v1821
    %v1870 = vpack.c.b16 %v1825, %v1822
    %v1871 = vpack.c.b16 %v1829, %v1826
    %v1872 = vpack.c.b16 %v1830, %v1827
    %v1873 = vpack.c.b16 %v1831, %v1828
    %v1874 = vpack.c.b16 %v1835, %v1832
    %v1875 = vpack.c.b16 %v1836, %v1833
    %v1876 = vpack.c.b16 %v1837, %v1834
    %v1877 = vpack.c.b16 %v1841, %v1838
    %v1878 = vpack.c.b16 %v1842, %v1839
    %v1879 = vpack.c.b16 %v1843, %v1840
    %v1880 = vpack.c.b16 %v1847, %v1844
    %v1881 = vpack.c.b16 %v1848, %v1845
    %v1882 = vpack.c.b16 %v1849, %v1846
    %v1883 = vpack.c.b16 %v1853, %v1850
    %v1884 = vpack.c.b16 %v1854, %v1851
    %v1885 = vpack.c.b16 %v1855, %v1852
    %v1886 = vpack.c.b16 %v1859, %v1856
    %v1887 = vpack.c.b16 %v1860, %v1857
    %v1888 = vpack.c.b16 %v1861, %v1858
    %v1889 = vpack.c.b16 %v1865, %v1862
    %v1890 = vpack.c.b16 %v1866, %v1863
    %v1891 = vpack.c.b16 %v1867, %v1864
    %1916 = vmatprep.subr.bf16.mxu0 %v1869
    %1917 = vmatpush1.bf16.msra.mxu0 %v1868
    %1918 = vmatprep.subr.bf16.mxu0 %v1872
    %1919 = vmatpush1.bf16.msra.mxu0 %v1871
    %1920 = vmatprep.subr.bf16.mxu0 %v1875
    %1921 = vmatpush1.bf16.msra.mxu0 %v1874
    %1922 = vmatprep.subr.bf16.mxu0 %v1878
    %1923 = vmatpush1.bf16.msra.mxu0 %v1877
    %1924 = vmatprep.subr.bf16.mxu0 %v1881
    %1925 = vmatpush1.bf16.msra.mxu0 %v1880
    %1926 = vmatprep.subr.bf16.mxu0 %v1884
    %1927 = vmatpush1.bf16.msra.mxu0 %v1883
    %1928 = vmatprep.subr.bf16.mxu0 %v1887
    %1929 = vmatpush1.bf16.msra.mxu0 %v1886
    %1930 = vmatprep.subr.bf16.mxu0 %v1890
    %1931 = vmatpush1.bf16.msra.mxu0 %v1889
    %1932 = vmatprep.subr.bf16.mxu0 0
    %1933 = vmatpush1.bf16.msra.mxu0 0
    %1934 = vmatprep.subr.bf16.mxu0 0
    %1935 = vmatpush1.bf16.msra.mxu0 0
    %1936 = vmatprep.subr.bf16.mxu0 0
    %1937 = vmatpush1.bf16.msra.mxu0 0
    %1938 = vmatprep.subr.bf16.mxu0 0
    %1939 = vmatpush1.bf16.msra.mxu0 0
    %1940 = vmatprep.subr.bf16.mxu0 0
    %1941 = vmatpush1.bf16.msra.mxu0 0
    %1942 = vmatprep.subr.bf16.mxu0 0
    %1943 = vmatpush1.bf16.msra.mxu0 0
    %1944 = vmatprep.subr.bf16.mxu0 0
    %1945 = vmatpush1.bf16.msra.mxu0 0
    %1946 = vmatprep.subr.bf16.mxu0 0
    %1947 = vmatpush1.bf16.msra.mxu0 0
    %1948 = vmatprep.mubr.bf16.mxu0 0
    %1949 = vmatmul.mubr.bf16.gmra.mrb[0].mxu0 %v1731
    %v1950 = vpop.f32.mrb[0].mxu0
    %v1951 = vadd.f32 %v1776, %v1950
    %v1952 = vpop.f32.mrb[0].mxu0
    %v1953 = vadd.f32 %v1780, %v1952
    %v1954 = vpop.f32.mrb[0].mxu0
    %v1955 = vadd.f32 %v1776, %v1954
    %v1956 = vpop.f32.mrb[0].mxu0
    %v1957 = vadd.f32 %v1780, %v1956
    %1958 = vmatprep.mubr.bf16.mxu0 0
    %1959 = vmatmul.mubr.bf16.gmra.mrb[0].mxu0 %v1732
    %v1960 = vpop.f32.mrb[0].mxu0
    %v1961 = vadd.f32 %v1776, %v1960
    %v1962 = vpop.f32.mrb[0].mxu0
    %v1963 = vadd.f32 %v1780, %v1962
    %v1964 = vpop.f32.mrb[0].mxu0
    %v1965 = vadd.f32 %v1776, %v1964
    %v1966 = vpop.f32.mrb[0].mxu0
    %v1967 = vadd.f32 %v1780, %v1966
    %1968 = vmatprep.mubr.bf16.mxu0 0
    %1969 = vmatmul.mubr.bf16.gmra.mrb[0].mxu0 %v1733
    %v1970 = vpop.f32.mrb[0].mxu0
    %v1971 = vadd.f32 %v1776, %v1970
    %v1972 = vpop.f32.mrb[0].mxu0
    %v1973 = vadd.f32 %v1780, %v1972
    %v1974 = vpop.f32.mrb[0].mxu0
    %v1975 = vadd.f32 %v1776, %v1974
    %v1976 = vpop.f32.mrb[0].mxu0
    %v1977 = vadd.f32 %v1780, %v1976
    %1978 = vmatprep.mubr.bf16.mxu0 0
    %1979 = vmatmul.mubr.bf16.gmra.mrb[0].mxu0 %v1734
    %v1980 = vpop.f32.mrb[0].mxu0
    %v1981 = vadd.f32 %v1776, %v1980
    %v1982 = vpop.f32.mrb[0].mxu0
    %v1983 = vadd.f32 %v1780, %v1982
    %v1984 = vpop.f32.mrb[0].mxu0
    %v1985 = vadd.f32 %v1776, %v1984
    %v1986 = vpop.f32.mrb[0].mxu0
    %v1987 = vadd.f32 %v1780, %v1986
    %1988 = vmatprep.mubr.bf16.mxu0 0
    %1989 = vmatmul.mubr.bf16.gmra.mrb[0].mxu0 %v1735
    %v1990 = vpop.f32.mrb[0].mxu0
    %v1991 = vadd.f32 %v1776, %v1990
    %v1992 = vpop.f32.mrb[0].mxu0
    %v1993 = vadd.f32 %v1780, %v1992
    %v1994 = vpop.f32.mrb[0].mxu0
    %v1995 = vadd.f32 %v1776, %v1994
    %v1996 = vpop.f32.mrb[0].mxu0
    %v1997 = vadd.f32 %v1780, %v1996
    %1998 = vmatprep.mubr.bf16.mxu0 0
    %1999 = vmatmul.mubr.bf16.gmra.mrb[0].mxu0 %v1736
    %v2000 = vpop.f32.mrb[0].mxu0
    %v2001 = vadd.f32 %v1776, %v2000
    %v2002 = vpop.f32.mrb[0].mxu0
    %v2003 = vadd.f32 %v1780, %v2002
    %v2004 = vpop.f32.mrb[0].mxu0
    %v2005 = vadd.f32 %v1776, %v2004
    %v2006 = vpop.f32.mrb[0].mxu0
    %v2007 = vadd.f32 %v1780, %v2006
    %2008 = vmatprep.mubr.bf16.mxu0 0
    %2009 = vmatmul.mubr.bf16.gmra.mrb[0].mxu0 %v1737
    %v2010 = vpop.f32.mrb[0].mxu0
    %v2011 = vadd.f32 %v1776, %v2010
    %v2012 = vpop.f32.mrb[0].mxu0
    %v2013 = vadd.f32 %v1780, %v2012
    %v2014 = vpop.f32.mrb[0].mxu0
    %v2015 = vadd.f32 %v1776, %v2014
    %v2016 = vpop.f32.mrb[0].mxu0
    %v2017 = vadd.f32 %v1780, %v2016
    %2018 = vmatprep.mubr.bf16.mxu0 0
    %2019 = vmatmul.mubr.bf16.gmra.mrb[0].mxu0 %v1738
    %v2020 = vpop.f32.mrb[0].mxu0
    %v2021 = vadd.f32 %v1776, %v2020
    %v2022 = vpop.f32.mrb[0].mxu0
    %v2023 = vadd.f32 %v1780, %v2022
    %v2024 = vpop.f32.mrb[0].mxu0
    %v2025 = vadd.f32 %v1776, %v2024
    %v2026 = vpop.f32.mrb[0].mxu0
    %v2027 = vadd.f32 %v1780, %v2026
    %2028 = vdwg.mxu0
    %2029 = vmatprep.subr.bf16.mxu0 0
    %2030 = vmatpush1.bf16.msra.mxu0 %v1870
    %2031 = vmatprep.subr.bf16.mxu0 0
    %2032 = vmatpush1.bf16.msra.mxu0 %v1873
    %2033 = vmatprep.subr.bf16.mxu0 0
    %2034 = vmatpush1.bf16.msra.mxu0 %v1876
    %2035 = vmatprep.subr.bf16.mxu0 0
    %2036 = vmatpush1.bf16.msra.mxu0 %v1879
    %2037 = vmatprep.subr.bf16.mxu0 0
    %2038 = vmatpush1.bf16.msra.mxu0 %v1882
    %2039 = vmatprep.subr.bf16.mxu0 0
    %2040 = vmatpush1.bf16.msra.mxu0 %v1885
    %2041 = vmatprep.subr.bf16.mxu0 0
    %2042 = vmatpush1.bf16.msra.mxu0 %v1888
    %2043 = vmatprep.subr.bf16.mxu0 0
    %2044 = vmatpush1.bf16.msra.mxu0 %v1891
    %2045 = vmatprep.subr.bf16.mxu0 0
    %2046 = vmatpush1.bf16.msra.mxu0 0
    %2047 = vmatprep.subr.bf16.mxu0 0
    %2048 = vmatpush1.bf16.msra.mxu0 0
    %2049 = vmatprep.subr.bf16.mxu0 0
    %2050 = vmatpush1.bf16.msra.mxu0 0
    %2051 = vmatprep.subr.bf16.mxu0 0
    %2052 = vmatpush1.bf16.msra.mxu0 0
    %2053 = vmatprep.subr.bf16.mxu0 0
    %2054 = vmatpush1.bf16.msra.mxu0 0
    %2055 = vmatprep.subr.bf16.mxu0 0
    %2056 = vmatpush1.bf16.msra.mxu0 0
    %2057 = vmatprep.subr.bf16.mxu0 0
    %2058 = vmatpush1.bf16.msra.mxu0 0
    %2059 = vmatprep.subr.bf16.mxu0 0
    %2060 = vmatpush1.bf16.msra.mxu0 0
    %2061 = vmatprep.mubr.bf16.mxu0 0
    %2062 = vmatmul.mubr.bf16.gmra.mrb[0].mxu0 %v1731
    %v2063 = vpop.f32.mrb[0].mxu0
    %v2064 = vadd.f32 %v1784, %v2063
    %v2065 = vpop.f32.mrb[0].mxu0
    %v2066 = vpop.f32.mrb[0].mxu0
    %v2067 = vadd.f32 %v1784, %v2066
    %v2068 = vpop.f32.mrb[0].mxu0
    %2069 = vmatprep.mubr.bf16.mxu0 0
    %2070 = vmatmul.mubr.bf16.gmra.mrb[0].mxu0 %v1732
    %v2071 = vpop.f32.mrb[0].mxu0
    %v2072 = vadd.f32 %v1784, %v2071
    %v2073 = vpop.f32.mrb[0].mxu0
    %v2074 = vpop.f32.mrb[0].mxu0
    %v2075 = vadd.f32 %v1784, %v2074
    %v2076 = vpop.f32.mrb[0].mxu0
    %2077 = vmatprep.mubr.bf16.mxu0 0
    %2078 = vmatmul.mubr.bf16.gmra.mrb[0].mxu0 %v1733
    %v2079 = vpop.f32.mrb[0].mxu0
    %v2080 = vadd.f32 %v1784, %v2079
    %v2081 = vpop.f32.mrb[0].mxu0
    %v2082 = vpop.f32.mrb[0].mxu0
    %v2083 = vadd.f32 %v1784, %v2082
    %v2084 = vpop.f32.mrb[0].mxu0
    %2085 = vmatprep.mubr.bf16.mxu0 0
    %2086 = vmatmul.mubr.bf16.gmra.mrb[0].mxu0 %v1734
    %v2087 = vpop.f32.mrb[0].mxu0
    %v2088 = vadd.f32 %v1784, %v2087
    %v2089 = vpop.f32.mrb[0].mxu0
    %v2090 = vpop.f32.mrb[0].mxu0
    %v2091 = vadd.f32 %v1784, %v2090
    %v2092 = vpop.f32.mrb[0].mxu0
    %2093 = vmatprep.mubr.bf16.mxu0 0
    %2094 = vmatmul.mubr.bf16.gmra.mrb[0].mxu0 %v1735
    %v2095 = vpop.f32.mrb[0].mxu0
    %v2096 = vadd.f32 %v1784, %v2095
    %v2097 = vpop.f32.mrb[0].mxu0
    %v2098 = vpop.f32.mrb[0].mxu0
    %v2099 = vadd.f32 %v1784, %v2098
    %v2100 = vpop.f32.mrb[0].mxu0
    %2101 = vmatprep.mubr.bf16.mxu0 0
    %2102 = vmatmul.mubr.bf16.gmra.mrb[0].mxu0 %v1736
    %v2103 = vpop.f32.mrb[0].mxu0
    %v2104 = vadd.f32 %v1784, %v2103
    %v2105 = vpop.f32.mrb[0].mxu0
    %v2106 = vpop.f32.mrb[0].mxu0
    %v2107 = vadd.f32 %v1784, %v2106
    %v2108 = vpop.f32.mrb[0].mxu0
    %2109 = vmatprep.mubr.bf16.mxu0 0
    %2110 = vmatmul.mubr.bf16.gmra.mrb[0].mxu0 %v1737
    %v2111 = vpop.f32.mrb[0].mxu0
    %v2112 = vadd.f32 %v1784, %v2111
    %v2113 = vpop.f32.mrb[0].mxu0
    %v2114 = vpop.f32.mrb[0].mxu0
    %v2115 = vadd.f32 %v1784, %v2114
    %v2116 = vpop.f32.mrb[0].mxu0
    %2117 = vmatprep.mubr.bf16.mxu0 0
    %2118 = vmatmul.mubr.bf16.gmra.mrb[0].mxu0 %v1738
    %v2119 = vpop.f32.mrb[0].mxu0
    %v2120 = vadd.f32 %v1784, %v2119
    %v2121 = vpop.f32.mrb[0].mxu0
    %v2122 = vpop.f32.mrb[0].mxu0
    %v2123 = vadd.f32 %v1784, %v2122
    %v2124 = vpop.f32.mrb[0].mxu0
    %2125 = vdwg.mxu0
    %v2126 = vmax.f32 %v1951, 0.0
    %v2127 = vmax.f32 %v1955, 0.0
    %v2128 = vmax.f32 %v1961, 0.0
    %v2129 = vmax.f32 %v1965, 0.0
    %v2130 = vmax.f32 %v1971, 0.0
    %v2131 = vmax.f32 %v1975, 0.0
    %v2132 = vmax.f32 %v1981, 0.0
    %v2133 = vmax.f32 %v1985, 0.0
    %v2134 = vmax.f32 %v1991, 0.0
    %v2135 = vmax.f32 %v1995, 0.0
    %v2136 = vmax.f32 %v2001, 0.0
    %v2137 = vmax.f32 %v2005, 0.0
    %v2138 = vmax.f32 %v2011, 0.0
    %v2139 = vmax.f32 %v2015, 0.0
    %v2140 = vmax.f32 %v2021, 0.0
    %v2141 = vmax.f32 %v2025, 0.0
    %v2142 = vmax.f32 %v1953, 0.0
    %v2143 = vmax.f32 %v1957, 0.0
    %v2144 = vmax.f32 %v1963, 0.0
    %v2145 = vmax.f32 %v1967, 0.0
    %v2146 = vmax.f32 %v1973, 0.0
    %v2147 = vmax.f32 %v1977, 0.0
    %v2148 = vmax.f32 %v1983, 0.0
    %v2149 = vmax.f32 %v1987, 0.0
    %v2150 = vmax.f32 %v1993, 0.0
    %v2151 = vmax.f32 %v1997, 0.0
    %v2152 = vmax.f32 %v2003, 0.0
    %v2153 = vmax.f32 %v2007, 0.0
    %v2154 = vmax.f32 %v2013, 0.0
    %v2155 = vmax.f32 %v2017, 0.0
    %v2156 = vmax.f32 %v2023, 0.0
    %v2157 = vmax.f32 %v2027, 0.0
    %v2158 = vpack.c.bf16 %v2143, %v2142
    %v2159 = vpack.c.bf16 %v2145, %v2144
    %v2160 = vpack.c.bf16 %v2147, %v2146
    %v2161 = vpack.c.bf16 %v2149, %v2148
    %v2162 = vpack.c.bf16 %v2151, %v2150
    %v2163 = vpack.c.bf16 %v2153, %v2152
    %v2164 = vpack.c.bf16 %v2155, %v2154
    %v2165 = vpack.c.bf16 %v2157, %v2156
    %v2166 = vmax.f32 %v2064, 0.0
    %v2167 = vmax.f32 %v2067, 0.0
    %v2168 = vmax.f32 %v2072, 0.0
    %v2169 = vmax.f32 %v2075, 0.0
    %v2170 = vmax.f32 %v2080, 0.0
    %v2171 = vmax.f32 %v2083, 0.0
    %v2172 = vmax.f32 %v2088, 0.0
    %v2173 = vmax.f32 %v2091, 0.0
    %v2174 = vmax.f32 %v2096, 0.0
    %v2175 = vmax.f32 %v2099, 0.0
    %v2176 = vmax.f32 %v2104, 0.0
    %v2177 = vmax.f32 %v2107, 0.0
    %v2178 = vmax.f32 %v2112, 0.0
    %v2179 = vmax.f32 %v2115, 0.0
    %v2180 = vmax.f32 %v2120, 0.0
    %v2181 = vmax.f32 %v2123, 0.0
    %v2182 = vpack.c.bf16 %v2167, %v2166
    %v2183 = vpack.c.bf16 %v2169, %v2168
    %v2184 = vpack.c.bf16 %v2171, %v2170
    %v2185 = vpack.c.bf16 %v2173, %v2172
    %v2186 = vpack.c.bf16 %v2175, %v2174
    %v2187 = vpack.c.bf16 %v2177, %v2176
    %v2188 = vpack.c.bf16 %v2179, %v2178
    %v2189 = vpack.c.bf16 %v2181, %v2180
    %v2190 = vpack.c.bf16 %v2127, %v2126
    %v2191 = vpack.c.bf16 %v2129, %v2128
    %v2192 = vpack.c.bf16 %v2131, %v2130
    %v2193 = vpack.c.bf16 %v2133, %v2132
    %v2194 = vpack.c.bf16 %v2135, %v2134
    %v2195 = vpack.c.bf16 %v2137, %v2136
    %v2196 = vpack.c.bf16 %v2139, %v2138
    %v2197 = vpack.c.bf16 %v2141, %v2140
    %v2198 = vld [vmem:[#allocation8 + $0x24] sm:$0xf]
    %v2199 = vld [vmem:[#allocation8 + $0x68] sm:$0xf]
    %v2200 = vld [vmem:[#allocation8 + $0xac] sm:$0xf]
    %v2201 = vld [vmem:[#allocation8 + $0xf0] sm:$0xf]
    %v2202 = vld [vmem:[#allocation8 + $0x134] sm:$0xf]
    %v2203 = vld [vmem:[#allocation8 + $0x178] sm:$0xf]
    %v2204 = vld [vmem:[#allocation8 + $0x1bc] sm:$0xf]
    %v2205 = vld [vmem:[#allocation8 + $0x200] sm:$0xf]
    %v2206 = vld [vmem:[#allocation8 + $0x244] sm:$0xf]
    %v2207 = vld [vmem:[#allocation8 + $0x288] sm:$0xf]
    %v2208 = vld [vmem:[#allocation8 + $0x2cc] sm:$0xf]
    %v2209 = vld [vmem:[#allocation8 + $0x310] sm:$0xf]
    %v2210 = vld [vmem:[#allocation8 + $0x354] sm:$0xf]
    %v2211 = vld [vmem:[#allocation8 + $0x398] sm:$0xf]
    %v2212 = vld [vmem:[#allocation8 + $0x3dc] sm:$0xf]
    %v2213 = vld [vmem:[#allocation8 + $0x420] sm:$0xf]
    %v2214 = vld [vmem:[%s4 + $0xa] sm:$0x1]
    %v2216 = vlaneseq
    %v2217 = vshrl.u32 %v2216, 7
    %v2218 = vsub.s32 0, %v2217
    %v2219 = vrot.slane %v2214, %v2218
    %v2237 = vunpack.c.l.b16 %v2198
    %v2238 = vunpack.c.l.b16 %v2199
    %v2239 = vunpack.c.l.b16 %v2200
    %v2240 = vunpack.c.l.b16 %v2201
    %v2241 = vunpack.c.l.b16 %v2202
    %v2242 = vunpack.c.l.b16 %v2203
    %v2243 = vunpack.c.l.b16 %v2204
    %v2244 = vunpack.c.l.b16 %v2205
    %v2245 = vunpack.c.l.b16 %v2206
    %v2246 = vunpack.c.l.b16 %v2207
    %v2247 = vunpack.c.l.b16 %v2208
    %v2248 = vunpack.c.l.b16 %v2209
    %v2249 = vunpack.c.l.b16 %v2210
    %v2250 = vunpack.c.l.b16 %v2211
    %v2251 = vunpack.c.l.b16 %v2212
    %v2252 = vunpack.c.l.b16 %v2213
    %v2253 = vpack.c.b16 %v2238, %v2237
    %v2254 = vpack.c.b16 %v2240, %v2239
    %v2255 = vpack.c.b16 %v2242, %v2241
    %v2256 = vpack.c.b16 %v2244, %v2243
    %v2257 = vpack.c.b16 %v2246, %v2245
    %v2258 = vpack.c.b16 %v2248, %v2247
    %v2259 = vpack.c.b16 %v2250, %v2249
    %v2260 = vpack.c.b16 %v2252, %v2251
    %2269 = vmatprep.subr.bf16.mxu0 0
    %2270 = vmatpush1.bf16.msra.mxu0 %v2253
    %2271 = vmatprep.subr.bf16.mxu0 0
    %2272 = vmatpush1.bf16.msra.mxu0 %v2254
    %2273 = vmatprep.subr.bf16.mxu0 0
    %2274 = vmatpush1.bf16.msra.mxu0 %v2255
    %2275 = vmatprep.subr.bf16.mxu0 0
    %2276 = vmatpush1.bf16.msra.mxu0 %v2256
    %2277 = vmatprep.subr.bf16.mxu0 0
    %2278 = vmatpush1.bf16.msra.mxu0 %v2257
    %2279 = vmatprep.subr.bf16.mxu0 0
    %2280 = vmatpush1.bf16.msra.mxu0 %v2258
    %2281 = vmatprep.subr.bf16.mxu0 0
    %2282 = vmatpush1.bf16.msra.mxu0 %v2259
    %2283 = vmatprep.subr.bf16.mxu0 0
    %2284 = vmatpush1.bf16.msra.mxu0 %v2260
    %2285 = vmatprep.subr.bf16.mxu0 0
    %2286 = vmatpush1.bf16.msra.mxu0 0
    %2287 = vmatprep.subr.bf16.mxu0 0
    %2288 = vmatpush1.bf16.msra.mxu0 0
    %2289 = vmatprep.subr.bf16.mxu0 0
    %2290 = vmatpush1.bf16.msra.mxu0 0
    %2291 = vmatprep.subr.bf16.mxu0 0
    %2292 = vmatpush1.bf16.msra.mxu0 0
    %2293 = vmatprep.subr.bf16.mxu0 0
    %2294 = vmatpush1.bf16.msra.mxu0 0
    %2295 = vmatprep.subr.bf16.mxu0 0
    %2296 = vmatpush1.bf16.msra.mxu0 0
    %2297 = vmatprep.subr.bf16.mxu0 0
    %2298 = vmatpush1.bf16.msra.mxu0 0
    %2299 = vmatprep.subr.bf16.mxu0 0
    %2300 = vmatpush1.bf16.msra.mxu0 0
    %2301 = vmatprep.mubr.bf16.mxu0 0
    %2302 = vmatmul.mubr.bf16.gmra.mrb[0].mxu0 %v2190
    %v2303 = vpop.f32.mrb[0].mxu0
    %v2304 = vadd.f32 %v2219, %v2303
    %v2305 = vpop.f32.mrb[0].mxu0
    %v2306 = vpop.f32.mrb[0].mxu0
    %v2307 = vadd.f32 %v2219, %v2306
    %v2308 = vpop.f32.mrb[0].mxu0
    %2309 = vmatprep.mubr.bf16.mxu0 0
    %2310 = vmatmul.mubr.bf16.gmra.mrb[0].mxu0 %v2191
    %v2311 = vpop.f32.mrb[0].mxu0
    %v2312 = vadd.f32 %v2219, %v2311
    %v2313 = vpop.f32.mrb[0].mxu0
    %v2314 = vpop.f32.mrb[0].mxu0
    %v2315 = vadd.f32 %v2219, %v2314
    %v2316 = vpop.f32.mrb[0].mxu0
    %2317 = vmatprep.mubr.bf16.mxu0 0
    %2318 = vmatmul.mubr.bf16.gmra.mrb[0].mxu0 %v2192
    %v2319 = vpop.f32.mrb[0].mxu0
    %v2320 = vadd.f32 %v2219, %v2319
    %v2321 = vpop.f32.mrb[0].mxu0
    %v2322 = vpop.f32.mrb[0].mxu0
    %v2323 = vadd.f32 %v2219, %v2322
    %v2324 = vpop.f32.mrb[0].mxu0
    %2325 = vmatprep.mubr.bf16.mxu0 0
    %2326 = vmatmul.mubr.bf16.gmra.mrb[0].mxu0 %v2193
    %v2327 = vpop.f32.mrb[0].mxu0
    %v2328 = vadd.f32 %v2219, %v2327
    %v2329 = vpop.f32.mrb[0].mxu0
    %v2330 = vpop.f32.mrb[0].mxu0
    %v2331 = vadd.f32 %v2219, %v2330
    %v2332 = vpop.f32.mrb[0].mxu0
    %2333 = vmatprep.mubr.bf16.mxu0 0
    %2334 = vmatmul.mubr.bf16.gmra.mrb[0].mxu0 %v2194
    %v2335 = vpop.f32.mrb[0].mxu0
    %v2336 = vadd.f32 %v2219, %v2335
    %v2337 = vpop.f32.mrb[0].mxu0
    %v2338 = vpop.f32.mrb[0].mxu0
    %v2339 = vadd.f32 %v2219, %v2338
    %v2340 = vpop.f32.mrb[0].mxu0
    %2341 = vmatprep.mubr.bf16.mxu0 0
    %2342 = vmatmul.mubr.bf16.gmra.mrb[0].mxu0 %v2195
    %v2343 = vpop.f32.mrb[0].mxu0
    %v2344 = vadd.f32 %v2219, %v2343
    %v2345 = vpop.f32.mrb[0].mxu0
    %v2346 = vpop.f32.mrb[0].mxu0
    %v2347 = vadd.f32 %v2219, %v2346
    %v2348 = vpop.f32.mrb[0].mxu0
    %2349 = vmatprep.mubr.bf16.mxu0 0
    %2350 = vmatmul.mubr.bf16.gmra.mrb[0].mxu0 %v2196
    %v2351 = vpop.f32.mrb[0].mxu0
    %v2352 = vadd.f32 %v2219, %v2351
    %v2353 = vpop.f32.mrb[0].mxu0
    %v2354 = vpop.f32.mrb[0].mxu0
    %v2355 = vadd.f32 %v2219, %v2354
    %v2356 = vpop.f32.mrb[0].mxu0
    %2357 = vmatprep.mubr.bf16.mxu0 0
    %2358 = vmatmul.mubr.bf16.gmra.mrb[0].mxu0 %v2197
    %v2359 = vpop.f32.mrb[0].mxu0
    %v2360 = vadd.f32 %v2219, %v2359
    %v2361 = vpop.f32.mrb[0].mxu0
    %v2362 = vpop.f32.mrb[0].mxu0
    %v2363 = vadd.f32 %v2219, %v2362
    %v2364 = vpop.f32.mrb[0].mxu0
    %2365 = vdwg.mxu0
    %v2366 = vmax.f32 %v2304, 0.0
    %v2367 = vmax.f32 %v2307, 0.0
    %v2368 = vmax.f32 %v2312, 0.0
    %v2369 = vmax.f32 %v2315, 0.0
    %v2370 = vmax.f32 %v2320, 0.0
    %v2371 = vmax.f32 %v2323, 0.0
    %v2372 = vmax.f32 %v2328, 0.0
    %v2373 = vmax.f32 %v2331, 0.0
    %v2374 = vmax.f32 %v2336, 0.0
    %v2375 = vmax.f32 %v2339, 0.0
    %v2376 = vmax.f32 %v2344, 0.0
    %v2377 = vmax.f32 %v2347, 0.0
    %v2378 = vmax.f32 %v2352, 0.0
    %v2379 = vmax.f32 %v2355, 0.0
    %v2380 = vmax.f32 %v2360, 0.0
    %v2381 = vmax.f32 %v2363, 0.0
    %v2382 = vpack.c.bf16 %v2367, %v2366
    %v2383 = vpack.c.bf16 %v2369, %v2368
    %v2384 = vpack.c.bf16 %v2371, %v2370
    %v2385 = vpack.c.bf16 %v2373, %v2372
    %v2386 = vpack.c.bf16 %v2375, %v2374
    %v2387 = vpack.c.bf16 %v2377, %v2376
    %v2388 = vpack.c.bf16 %v2379, %v2378
    %v2389 = vpack.c.bf16 %v2381, %v2380
    %v2390 = vld [vmem:[#allocation8 + $0x28] sm:$0xf]
    %v2391 = vld [vmem:[#allocation8 + $0x6c] sm:$0xf]
    %v2392 = vld [vmem:[#allocation8 + $0xb0] sm:$0xf]
    %v2393 = vld [vmem:[#allocation8 + $0xf4] sm:$0xf]
    %v2394 = vld [vmem:[#allocation8 + $0x138] sm:$0xf]
    %v2395 = vld [vmem:[#allocation8 + $0x17c] sm:$0xf]
    %v2396 = vld [vmem:[#allocation8 + $0x1c0] sm:$0xf]
    %v2397 = vld [vmem:[#allocation8 + $0x204] sm:$0xf]
    %v2398 = vld [vmem:[#allocation8 + $0x248] sm:$0xf]
    %v2399 = vld [vmem:[#allocation8 + $0x28c] sm:$0xf]
    %v2400 = vld [vmem:[#allocation8 + $0x2d0] sm:$0xf]
    %v2401 = vld [vmem:[#allocation8 + $0x314] sm:$0xf]
    %v2402 = vld [vmem:[#allocation8 + $0x358] sm:$0xf]
    %v2403 = vld [vmem:[#allocation8 + $0x39c] sm:$0xf]
    %v2404 = vld [vmem:[#allocation8 + $0x3e0] sm:$0xf]
    %v2405 = vld [vmem:[#allocation8 + $0x424] sm:$0xf]
    %v2406 = vld [vmem:[#allocation8 + $0x2c] sm:$0xf]
    %v2407 = vld [vmem:[#allocation8 + $0x70] sm:$0xf]
    %v2408 = vld [vmem:[#allocation8 + $0xb4] sm:$0xf]
    %v2409 = vld [vmem:[#allocation8 + $0xf8] sm:$0xf]
    %v2410 = vld [vmem:[#allocation8 + $0x13c] sm:$0xf]
    %v2411 = vld [vmem:[#allocation8 + $0x180] sm:$0xf]
    %v2412 = vld [vmem:[#allocation8 + $0x1c4] sm:$0xf]
    %v2413 = vld [vmem:[#allocation8 + $0x208] sm:$0xf]
    %v2414 = vld [vmem:[#allocation8 + $0x24c] sm:$0xf]
    %v2415 = vld [vmem:[#allocation8 + $0x290] sm:$0xf]
    %v2416 = vld [vmem:[#allocation8 + $0x2d4] sm:$0xf]
    %v2417 = vld [vmem:[#allocation8 + $0x318] sm:$0xf]
    %v2418 = vld [vmem:[#allocation8 + $0x35c] sm:$0xf]
    %v2419 = vld [vmem:[#allocation8 + $0x3a0] sm:$0xf]
    %v2420 = vld [vmem:[#allocation8 + $0x3e4] sm:$0xf]
    %v2421 = vld [vmem:[#allocation8 + $0x428] sm:$0xf]
    %v2438 = vunpack.c.l.b16 %v2406
    %v2439 = vunpack.c.l.b16 %v2407
    %v2440 = vunpack.c.l.b16 %v2408
    %v2441 = vunpack.c.l.b16 %v2409
    %v2442 = vunpack.c.l.b16 %v2410
    %v2443 = vunpack.c.l.b16 %v2411
    %v2444 = vunpack.c.l.b16 %v2412
    %v2445 = vunpack.c.l.b16 %v2413
    %v2446 = vunpack.c.l.b16 %v2414
    %v2447 = vunpack.c.l.b16 %v2415
    %v2448 = vunpack.c.l.b16 %v2416
    %v2449 = vunpack.c.l.b16 %v2417
    %v2450 = vunpack.c.l.b16 %v2418
    %v2451 = vunpack.c.l.b16 %v2419
    %v2452 = vunpack.c.l.b16 %v2420
    %v2453 = vunpack.c.l.b16 %v2421
    %v2454 = vpack.c.b16 %v2439, %v2438
    %v2455 = vpack.c.b16 %v2441, %v2440
    %v2456 = vpack.c.b16 %v2443, %v2442
    %v2457 = vpack.c.b16 %v2445, %v2444
    %v2458 = vpack.c.b16 %v2447, %v2446
    %v2459 = vpack.c.b16 %v2449, %v2448
    %v2460 = vpack.c.b16 %v2451, %v2450
    %v2461 = vpack.c.b16 %v2453, %v2452
    %2470 = vmatprep.subr.bf16.mxu0 0
    %2471 = vmatpush1.bf16.msra.mxu0 %v2454
    %2472 = vmatprep.subr.bf16.mxu0 0
    %2473 = vmatpush1.bf16.msra.mxu0 %v2455
    %2474 = vmatprep.subr.bf16.mxu0 0
    %2475 = vmatpush1.bf16.msra.mxu0 %v2456
    %2476 = vmatprep.subr.bf16.mxu0 0
    %2477 = vmatpush1.bf16.msra.mxu0 %v2457
    %2478 = vmatprep.subr.bf16.mxu0 0
    %2479 = vmatpush1.bf16.msra.mxu0 %v2458
    %2480 = vmatprep.subr.bf16.mxu0 0
    %2481 = vmatpush1.bf16.msra.mxu0 %v2459
    %2482 = vmatprep.subr.bf16.mxu0 0
    %2483 = vmatpush1.bf16.msra.mxu0 %v2460
    %2484 = vmatprep.subr.bf16.mxu0 0
    %2485 = vmatpush1.bf16.msra.mxu0 %v2461
    %2486 = vmatprep.subr.bf16.mxu0 0
    %2487 = vmatpush1.bf16.msra.mxu0 0
    %2488 = vmatprep.subr.bf16.mxu0 0
    %2489 = vmatpush1.bf16.msra.mxu0 0
    %2490 = vmatprep.subr.bf16.mxu0 0
    %2491 = vmatpush1.bf16.msra.mxu0 0
    %2492 = vmatprep.subr.bf16.mxu0 0
    %2493 = vmatpush1.bf16.msra.mxu0 0
    %2494 = vmatprep.subr.bf16.mxu0 0
    %2495 = vmatpush1.bf16.msra.mxu0 0
    %2496 = vmatprep.subr.bf16.mxu0 0
    %2497 = vmatpush1.bf16.msra.mxu0 0
    %2498 = vmatprep.subr.bf16.mxu0 0
    %2499 = vmatpush1.bf16.msra.mxu0 0
    %2500 = vmatprep.subr.bf16.mxu0 0
    %2501 = vmatpush1.bf16.msra.mxu0 0
    %2502 = vmatprep.mubr.bf16.mxu0 0
    %2503 = vmatmul.mubr.bf16.gmra.mrb[0].mxu0 %v1731
    %v2504 = vpop.f32.mrb[0].mxu0
    %v2505 = vadd.f32 0.0, %v2504
    %v2506 = vpop.f32.mrb[0].mxu0
    %v2507 = vpop.f32.mrb[0].mxu0
    %v2508 = vadd.f32 0.0, %v2507
    %v2509 = vpop.f32.mrb[0].mxu0
    %2510 = vmatprep.mubr.bf16.mxu0 0
    %2511 = vmatmul.mubr.bf16.gmra.mrb[0].mxu0 %v1732
    %v2512 = vpop.f32.mrb[0].mxu0
    %v2513 = vadd.f32 0.0, %v2512
    %v2514 = vpop.f32.mrb[0].mxu0
    %v2515 = vpop.f32.mrb[0].mxu0
    %v2516 = vadd.f32 0.0, %v2515
    %v2517 = vpop.f32.mrb[0].mxu0
    %2518 = vmatprep.mubr.bf16.mxu0 0
    %2519 = vmatmul.mubr.bf16.gmra.mrb[0].mxu0 %v1733
    %v2520 = vpop.f32.mrb[0].mxu0
    %v2521 = vadd.f32 0.0, %v2520
    %v2522 = vpop.f32.mrb[0].mxu0
    %v2523 = vpop.f32.mrb[0].mxu0
    %v2524 = vadd.f32 0.0, %v2523
    %v2525 = vpop.f32.mrb[0].mxu0
    %2526 = vmatprep.mubr.bf16.mxu0 0
    %2527 = vmatmul.mubr.bf16.gmra.mrb[0].mxu0 %v1734
    %v2528 = vpop.f32.mrb[0].mxu0
    %v2529 = vadd.f32 0.0, %v2528
    %v2530 = vpop.f32.mrb[0].mxu0
    %v2531 = vpop.f32.mrb[0].mxu0
    %v2532 = vadd.f32 0.0, %v2531
    %v2533 = vpop.f32.mrb[0].mxu0
    %2534 = vmatprep.mubr.bf16.mxu0 0
    %2535 = vmatmul.mubr.bf16.gmra.mrb[0].mxu0 %v1735
    %v2536 = vpop.f32.mrb[0].mxu0
    %v2537 = vadd.f32 0.0, %v2536
    %v2538 = vpop.f32.mrb[0].mxu0
    %v2539 = vpop.f32.mrb[0].mxu0
    %v2540 = vadd.f32 0.0, %v2539
    %v2541 = vpop.f32.mrb[0].mxu0
    %2542 = vmatprep.mubr.bf16.mxu0 0
    %2543 = vmatmul.mubr.bf16.gmra.mrb[0].mxu0 %v1736
    %v2544 = vpop.f32.mrb[0].mxu0
    %v2545 = vadd.f32 0.0, %v2544
    %v2546 = vpop.f32.mrb[0].mxu0
    %v2547 = vpop.f32.mrb[0].mxu0
    %v2548 = vadd.f32 0.0, %v2547
    %v2549 = vpop.f32.mrb[0].mxu0
    %2550 = vmatprep.mubr.bf16.mxu0 0
    %2551 = vmatmul.mubr.bf16.gmra.mrb[0].mxu0 %v1737
    %v2552 = vpop.f32.mrb[0].mxu0
    %v2553 = vadd.f32 0.0, %v2552
    %v2554 = vpop.f32.mrb[0].mxu0
    %v2555 = vpop.f32.mrb[0].mxu0
    %v2556 = vadd.f32 0.0, %v2555
    %v2557 = vpop.f32.mrb[0].mxu0
    %2558 = vmatprep.mubr.bf16.mxu0 0
    %2559 = vmatmul.mubr.bf16.gmra.mrb[0].mxu0 %v1738
    %v2560 = vpop.f32.mrb[0].mxu0
    %v2561 = vadd.f32 0.0, %v2560
    %v2562 = vpop.f32.mrb[0].mxu0
    %v2563 = vpop.f32.mrb[0].mxu0
    %v2564 = vadd.f32 0.0, %v2563
    %v2565 = vpop.f32.mrb[0].mxu0
    %2566 = vdwg.mxu0
    %v2583 = vunpack.c.l.b16 %v2390
    %v2584 = vunpack.c.l.b16 %v2391
    %v2585 = vunpack.c.l.b16 %v2392
    %v2586 = vunpack.c.l.b16 %v2393
    %v2587 = vunpack.c.l.b16 %v2394
    %v2588 = vunpack.c.l.b16 %v2395
    %v2589 = vunpack.c.l.b16 %v2396
    %v2590 = vunpack.c.l.b16 %v2397
    %v2591 = vunpack.c.l.b16 %v2398
    %v2592 = vunpack.c.l.b16 %v2399
    %v2593 = vunpack.c.l.b16 %v2400
    %v2594 = vunpack.c.l.b16 %v2401
    %v2595 = vunpack.c.l.b16 %v2402
    %v2596 = vunpack.c.l.b16 %v2403
    %v2597 = vunpack.c.l.b16 %v2404
    %v2598 = vunpack.c.l.b16 %v2405
    %v2599 = vpack.c.b16 %v2584, %v2583
    %v2600 = vpack.c.b16 %v2586, %v2585
    %v2601 = vpack.c.b16 %v2588, %v2587
    %v2602 = vpack.c.b16 %v2590, %v2589
    %v2603 = vpack.c.b16 %v2592, %v2591
    %v2604 = vpack.c.b16 %v2594, %v2593
    %v2605 = vpack.c.b16 %v2596, %v2595
    %v2606 = vpack.c.b16 %v2598, %v2597
    %2615 = vmatprep.subr.bf16.mxu0 0
    %2616 = vmatpush1.bf16.msra.mxu0 %v2599
    %2617 = vmatprep.subr.bf16.mxu0 0
    %2618 = vmatpush1.bf16.msra.mxu0 %v2600
    %2619 = vmatprep.subr.bf16.mxu0 0
    %2620 = vmatpush1.bf16.msra.mxu0 %v2601
    %2621 = vmatprep.subr.bf16.mxu0 0
    %2622 = vmatpush1.bf16.msra.mxu0 %v2602
    %2623 = vmatprep.subr.bf16.mxu0 0
    %2624 = vmatpush1.bf16.msra.mxu0 %v2603
    %2625 = vmatprep.subr.bf16.mxu0 0
    %2626 = vmatpush1.bf16.msra.mxu0 %v2604
    %2627 = vmatprep.subr.bf16.mxu0 0
    %2628 = vmatpush1.bf16.msra.mxu0 %v2605
    %2629 = vmatprep.subr.bf16.mxu0 0
    %2630 = vmatpush1.bf16.msra.mxu0 %v2606
    %2631 = vmatprep.subr.bf16.mxu0 0
    %2632 = vmatpush1.bf16.msra.mxu0 0
    %2633 = vmatprep.subr.bf16.mxu0 0
    %2634 = vmatpush1.bf16.msra.mxu0 0
    %2635 = vmatprep.subr.bf16.mxu0 0
    %2636 = vmatpush1.bf16.msra.mxu0 0
    %2637 = vmatprep.subr.bf16.mxu0 0
    %2638 = vmatpush1.bf16.msra.mxu0 0
    %2639 = vmatprep.subr.bf16.mxu0 0
    %2640 = vmatpush1.bf16.msra.mxu0 0
    %2641 = vmatprep.subr.bf16.mxu0 0
    %2642 = vmatpush1.bf16.msra.mxu0 0
    %2643 = vmatprep.subr.bf16.mxu0 0
    %2644 = vmatpush1.bf16.msra.mxu0 0
    %2645 = vmatprep.subr.bf16.mxu0 0
    %2646 = vmatpush1.bf16.msra.mxu0 0
    %2647 = vmatprep.mubr.bf16.mxu0 0
    %2648 = vmatmul.mubr.bf16.gmra.mrb[0].mxu0 %v1462
    %v2649 = vpop.f32.mrb[0].mxu0
    %v2650 = vadd.f32 %v2505, %v2649
    %v2651 = vpop.f32.mrb[0].mxu0
    %v2652 = vpop.f32.mrb[0].mxu0
    %v2653 = vadd.f32 %v2508, %v2652
    %v2654 = vpop.f32.mrb[0].mxu0
    %2655 = vmatprep.mubr.bf16.mxu0 0
    %2656 = vmatmul.mubr.bf16.gmra.mrb[0].mxu0 %v1463
    %v2657 = vpop.f32.mrb[0].mxu0
    %v2658 = vadd.f32 %v2513, %v2657
    %v2659 = vpop.f32.mrb[0].mxu0
    %v2660 = vpop.f32.mrb[0].mxu0
    %v2661 = vadd.f32 %v2516, %v2660
    %v2662 = vpop.f32.mrb[0].mxu0
    %2663 = vmatprep.mubr.bf16.mxu0 0
    %2664 = vmatmul.mubr.bf16.gmra.mrb[0].mxu0 %v1464
    %v2665 = vpop.f32.mrb[0].mxu0
    %v2666 = vadd.f32 %v2521, %v2665
    %v2667 = vpop.f32.mrb[0].mxu0
    %v2668 = vpop.f32.mrb[0].mxu0
    %v2669 = vadd.f32 %v2524, %v2668
    %v2670 = vpop.f32.mrb[0].mxu0
    %2671 = vmatprep.mubr.bf16.mxu0 0
    %2672 = vmatmul.mubr.bf16.gmra.mrb[0].mxu0 %v1465
    %v2673 = vpop.f32.mrb[0].mxu0
    %v2674 = vadd.f32 %v2529, %v2673
    %v2675 = vpop.f32.mrb[0].mxu0
    %v2676 = vpop.f32.mrb[0].mxu0
    %v2677 = vadd.f32 %v2532, %v2676
    %v2678 = vpop.f32.mrb[0].mxu0
    %2679 = vmatprep.mubr.bf16.mxu0 0
    %2680 = vmatmul.mubr.bf16.gmra.mrb[0].mxu0 %v1466
    %v2681 = vpop.f32.mrb[0].mxu0
    %v2682 = vadd.f32 %v2537, %v2681
    %v2683 = vpop.f32.mrb[0].mxu0
    %v2684 = vpop.f32.mrb[0].mxu0
    %v2685 = vadd.f32 %v2540, %v2684
    %v2686 = vpop.f32.mrb[0].mxu0
    %2687 = vmatprep.mubr.bf16.mxu0 0
    %2688 = vmatmul.mubr.bf16.gmra.mrb[0].mxu0 %v1467
    %v2689 = vpop.f32.mrb[0].mxu0
    %v2690 = vadd.f32 %v2545, %v2689
    %v2691 = vpop.f32.mrb[0].mxu0
    %v2692 = vpop.f32.mrb[0].mxu0
    %v2693 = vadd.f32 %v2548, %v2692
    %v2694 = vpop.f32.mrb[0].mxu0
    %2695 = vmatprep.mubr.bf16.mxu0 0
    %2696 = vmatmul.mubr.bf16.gmra.mrb[0].mxu0 %v1468
    %v2697 = vpop.f32.mrb[0].mxu0
    %v2698 = vadd.f32 %v2553, %v2697
    %v2699 = vpop.f32.mrb[0].mxu0
    %v2700 = vpop.f32.mrb[0].mxu0
    %v2701 = vadd.f32 %v2556, %v2700
    %v2702 = vpop.f32.mrb[0].mxu0
    %2703 = vmatprep.mubr.bf16.mxu0 0
    %2704 = vmatmul.mubr.bf16.gmra.mrb[0].mxu0 %v1469
    %v2705 = vpop.f32.mrb[0].mxu0
    %v2706 = vadd.f32 %v2561, %v2705
    %v2707 = vpop.f32.mrb[0].mxu0
    %v2708 = vpop.f32.mrb[0].mxu0
    %v2709 = vadd.f32 %v2564, %v2708
    %v2710 = vpop.f32.mrb[0].mxu0
    %2711 = vdwg.mxu0
    %v2712 = vld [vmem:[#allocation8 + $0x30] sm:$0xf]
    %v2713 = vld [vmem:[#allocation8 + $0x74] sm:$0xf]
    %v2714 = vld [vmem:[#allocation8 + $0xb8] sm:$0xf]
    %v2715 = vld [vmem:[#allocation8 + $0xfc] sm:$0xf]
    %v2716 = vld [vmem:[#allocation8 + $0x140] sm:$0xf]
    %v2717 = vld [vmem:[#allocation8 + $0x184] sm:$0xf]
    %v2718 = vld [vmem:[#allocation8 + $0x1c8] sm:$0xf]
    %v2719 = vld [vmem:[#allocation8 + $0x20c] sm:$0xf]
    %v2720 = vld [vmem:[#allocation8 + $0x250] sm:$0xf]
    %v2721 = vld [vmem:[#allocation8 + $0x294] sm:$0xf]
    %v2722 = vld [vmem:[#allocation8 + $0x2d8] sm:$0xf]
    %v2723 = vld [vmem:[#allocation8 + $0x31c] sm:$0xf]
    %v2724 = vld [vmem:[#allocation8 + $0x360] sm:$0xf]
    %v2725 = vld [vmem:[#allocation8 + $0x3a4] sm:$0xf]
    %v2726 = vld [vmem:[#allocation8 + $0x3e8] sm:$0xf]
    %v2727 = vld [vmem:[#allocation8 + $0x42c] sm:$0xf]
    %v2744 = vunpack.c.l.b16 %v2712
    %v2745 = vunpack.c.l.b16 %v2713
    %v2746 = vunpack.c.l.b16 %v2714
    %v2747 = vunpack.c.l.b16 %v2715
    %v2748 = vunpack.c.l.b16 %v2716
    %v2749 = vunpack.c.l.b16 %v2717
    %v2750 = vunpack.c.l.b16 %v2718
    %v2751 = vunpack.c.l.b16 %v2719
    %v2752 = vunpack.c.l.b16 %v2720
    %v2753 = vunpack.c.l.b16 %v2721
    %v2754 = vunpack.c.l.b16 %v2722
    %v2755 = vunpack.c.l.b16 %v2723
    %v2756 = vunpack.c.l.b16 %v2724
    %v2757 = vunpack.c.l.b16 %v2725
    %v2758 = vunpack.c.l.b16 %v2726
    %v2759 = vunpack.c.l.b16 %v2727
    %v2760 = vpack.c.b16 %v2745, %v2744
    %v2761 = vpack.c.b16 %v2747, %v2746
    %v2762 = vpack.c.b16 %v2749, %v2748
    %v2763 = vpack.c.b16 %v2751, %v2750
    %v2764 = vpack.c.b16 %v2753, %v2752
    %v2765 = vpack.c.b16 %v2755, %v2754
    %v2766 = vpack.c.b16 %v2757, %v2756
    %v2767 = vpack.c.b16 %v2759, %v2758
    %2776 = vmatprep.subr.bf16.mxu0 0
    %2777 = vmatpush1.bf16.msra.mxu0 %v2760
    %2778 = vmatprep.subr.bf16.mxu0 0
    %2779 = vmatpush1.bf16.msra.mxu0 %v2761
    %2780 = vmatprep.subr.bf16.mxu0 0
    %2781 = vmatpush1.bf16.msra.mxu0 %v2762
    %2782 = vmatprep.subr.bf16.mxu0 0
    %2783 = vmatpush1.bf16.msra.mxu0 %v2763
    %2784 = vmatprep.subr.bf16.mxu0 0
    %2785 = vmatpush1.bf16.msra.mxu0 %v2764
    %2786 = vmatprep.subr.bf16.mxu0 0
    %2787 = vmatpush1.bf16.msra.mxu0 %v2765
    %2788 = vmatprep.subr.bf16.mxu0 0
    %2789 = vmatpush1.bf16.msra.mxu0 %v2766
    %2790 = vmatprep.subr.bf16.mxu0 0
    %2791 = vmatpush1.bf16.msra.mxu0 %v2767
    %2792 = vmatprep.subr.bf16.mxu0 0
    %2793 = vmatpush1.bf16.msra.mxu0 0
    %2794 = vmatprep.subr.bf16.mxu0 0
    %2795 = vmatpush1.bf16.msra.mxu0 0
    %2796 = vmatprep.subr.bf16.mxu0 0
    %2797 = vmatpush1.bf16.msra.mxu0 0
    %2798 = vmatprep.subr.bf16.mxu0 0
    %2799 = vmatpush1.bf16.msra.mxu0 0
    %2800 = vmatprep.subr.bf16.mxu0 0
    %2801 = vmatpush1.bf16.msra.mxu0 0
    %2802 = vmatprep.subr.bf16.mxu0 0
    %2803 = vmatpush1.bf16.msra.mxu0 0
    %2804 = vmatprep.subr.bf16.mxu0 0
    %2805 = vmatpush1.bf16.msra.mxu0 0
    %2806 = vmatprep.subr.bf16.mxu0 0
    %2807 = vmatpush1.bf16.msra.mxu0 0
    %2808 = vmatprep.mubr.bf16.mxu0 0
    %2809 = vmatmul.mubr.bf16.gmra.mrb[0].mxu0 %v2190
    %v2810 = vpop.f32.mrb[0].mxu0
    %v2811 = vadd.f32 0.0, %v2810
    %v2812 = vpop.f32.mrb[0].mxu0
    %v2813 = vpop.f32.mrb[0].mxu0
    %v2814 = vadd.f32 0.0, %v2813
    %v2815 = vpop.f32.mrb[0].mxu0
    %2816 = vmatprep.mubr.bf16.mxu0 0
    %2817 = vmatmul.mubr.bf16.gmra.mrb[0].mxu0 %v2191
    %v2818 = vpop.f32.mrb[0].mxu0
    %v2819 = vadd.f32 0.0, %v2818
    %v2820 = vpop.f32.mrb[0].mxu0
    %v2821 = vpop.f32.mrb[0].mxu0
    %v2822 = vadd.f32 0.0, %v2821
    %v2823 = vpop.f32.mrb[0].mxu0
    %2824 = vmatprep.mubr.bf16.mxu0 0
    %2825 = vmatmul.mubr.bf16.gmra.mrb[0].mxu0 %v2192
    %v2826 = vpop.f32.mrb[0].mxu0
    %v2827 = vadd.f32 0.0, %v2826
    %v2828 = vpop.f32.mrb[0].mxu0
    %v2829 = vpop.f32.mrb[0].mxu0
    %v2830 = vadd.f32 0.0, %v2829
    %v2831 = vpop.f32.mrb[0].mxu0
    %2832 = vmatprep.mubr.bf16.mxu0 0
    %2833 = vmatmul.mubr.bf16.gmra.mrb[0].mxu0 %v2193
    %v2834 = vpop.f32.mrb[0].mxu0
    %v2835 = vadd.f32 0.0, %v2834
    %v2836 = vpop.f32.mrb[0].mxu0
    %v2837 = vpop.f32.mrb[0].mxu0
    %v2838 = vadd.f32 0.0, %v2837
    %v2839 = vpop.f32.mrb[0].mxu0
    %2840 = vmatprep.mubr.bf16.mxu0 0
    %2841 = vmatmul.mubr.bf16.gmra.mrb[0].mxu0 %v2194
    %v2842 = vpop.f32.mrb[0].mxu0
    %v2843 = vadd.f32 0.0, %v2842
    %v2844 = vpop.f32.mrb[0].mxu0
    %v2845 = vpop.f32.mrb[0].mxu0
    %v2846 = vadd.f32 0.0, %v2845
    %v2847 = vpop.f32.mrb[0].mxu0
    %2848 = vmatprep.mubr.bf16.mxu0 0
    %2849 = vmatmul.mubr.bf16.gmra.mrb[0].mxu0 %v2195
    %v2850 = vpop.f32.mrb[0].mxu0
    %v2851 = vadd.f32 0.0, %v2850
    %v2852 = vpop.f32.mrb[0].mxu0
    %v2853 = vpop.f32.mrb[0].mxu0
    %v2854 = vadd.f32 0.0, %v2853
    %v2855 = vpop.f32.mrb[0].mxu0
    %2856 = vmatprep.mubr.bf16.mxu0 0
    %2857 = vmatmul.mubr.bf16.gmra.mrb[0].mxu0 %v2196
    %v2858 = vpop.f32.mrb[0].mxu0
    %v2859 = vadd.f32 0.0, %v2858
    %v2860 = vpop.f32.mrb[0].mxu0
    %v2861 = vpop.f32.mrb[0].mxu0
    %v2862 = vadd.f32 0.0, %v2861
    %v2863 = vpop.f32.mrb[0].mxu0
    %2864 = vmatprep.mubr.bf16.mxu0 0
    %2865 = vmatmul.mubr.bf16.gmra.mrb[0].mxu0 %v2197
    %v2866 = vpop.f32.mrb[0].mxu0
    %v2867 = vadd.f32 0.0, %v2866
    %v2868 = vpop.f32.mrb[0].mxu0
    %v2869 = vpop.f32.mrb[0].mxu0
    %v2870 = vadd.f32 0.0, %v2869
    %v2871 = vpop.f32.mrb[0].mxu0
    %2872 = vdwg.mxu0
    %v2873 = vadd.f32 %v2650, %v2811
    %v2874 = vadd.f32 %v2653, %v2814
    %v2875 = vadd.f32 %v2658, %v2819
    %v2876 = vadd.f32 %v2661, %v2822
    %v2877 = vadd.f32 %v2666, %v2827
    %v2878 = vadd.f32 %v2669, %v2830
    %v2879 = vadd.f32 %v2674, %v2835
    %v2880 = vadd.f32 %v2677, %v2838
    %v2881 = vadd.f32 %v2682, %v2843
    %v2882 = vadd.f32 %v2685, %v2846
    %v2883 = vadd.f32 %v2690, %v2851
    %v2884 = vadd.f32 %v2693, %v2854
    %v2885 = vadd.f32 %v2698, %v2859
    %v2886 = vadd.f32 %v2701, %v2862
    %v2887 = vadd.f32 %v2706, %v2867
    %v2888 = vadd.f32 %v2709, %v2870
    %v2889 = vld [vmem:[%s4 + $0xb] sm:$0x1]
    %v2891 = vlaneseq
    %v2892 = vshrl.u32 %v2891, 7
    %v2893 = vsub.s32 0, %v2892
    %v2894 = vrot.slane %v2889, %v2893
    %v2896 = vadd.f32 %v2873, %v2894
    %v2897 = vadd.f32 %v2874, %v2894
    %v2898 = vadd.f32 %v2875, %v2894
    %v2899 = vadd.f32 %v2876, %v2894
    %v2900 = vadd.f32 %v2877, %v2894
    %v2901 = vadd.f32 %v2878, %v2894
    %v2902 = vadd.f32 %v2879, %v2894
    %v2903 = vadd.f32 %v2880, %v2894
    %v2904 = vadd.f32 %v2881, %v2894
    %v2905 = vadd.f32 %v2882, %v2894
    %v2906 = vadd.f32 %v2883, %v2894
    %v2907 = vadd.f32 %v2884, %v2894
    %v2908 = vadd.f32 %v2885, %v2894
    %v2909 = vadd.f32 %v2886, %v2894
    %v2910 = vadd.f32 %v2887, %v2894
    %v2911 = vadd.f32 %v2888, %v2894
    %v2912 = vld [vmem:[#allocation8 + $0x34] sm:$0xf]
    %v2913 = vld [vmem:[#allocation8 + $0x78] sm:$0xf]
    %v2914 = vld [vmem:[#allocation8 + $0xbc] sm:$0xf]
    %v2915 = vld [vmem:[#allocation8 + $0x100] sm:$0xf]
    %v2916 = vld [vmem:[#allocation8 + $0x144] sm:$0xf]
    %v2917 = vld [vmem:[#allocation8 + $0x188] sm:$0xf]
    %v2918 = vld [vmem:[#allocation8 + $0x1cc] sm:$0xf]
    %v2919 = vld [vmem:[#allocation8 + $0x210] sm:$0xf]
    %v2920 = vld [vmem:[#allocation8 + $0x254] sm:$0xf]
    %v2921 = vld [vmem:[#allocation8 + $0x298] sm:$0xf]
    %v2922 = vld [vmem:[#allocation8 + $0x2dc] sm:$0xf]
    %v2923 = vld [vmem:[#allocation8 + $0x320] sm:$0xf]
    %v2924 = vld [vmem:[#allocation8 + $0x364] sm:$0xf]
    %v2925 = vld [vmem:[#allocation8 + $0x3a8] sm:$0xf]
    %v2926 = vld [vmem:[#allocation8 + $0x3ec] sm:$0xf]
    %v2927 = vld [vmem:[#allocation8 + $0x430] sm:$0xf]
    %v2928 = vld [vmem:[#allocation8 + $0x38] sm:$0xf]
    %v2929 = vld [vmem:[#allocation8 + $0x7c] sm:$0xf]
    %v2930 = vld [vmem:[#allocation8 + $0xc0] sm:$0xf]
    %v2931 = vld [vmem:[#allocation8 + $0x104] sm:$0xf]
    %v2932 = vld [vmem:[#allocation8 + $0x148] sm:$0xf]
    %v2933 = vld [vmem:[#allocation8 + $0x18c] sm:$0xf]
    %v2934 = vld [vmem:[#allocation8 + $0x1d0] sm:$0xf]
    %v2935 = vld [vmem:[#allocation8 + $0x214] sm:$0xf]
    %v2936 = vld [vmem:[#allocation8 + $0x258] sm:$0xf]
    %v2937 = vld [vmem:[#allocation8 + $0x29c] sm:$0xf]
    %v2938 = vld [vmem:[#allocation8 + $0x2e0] sm:$0xf]
    %v2939 = vld [vmem:[#allocation8 + $0x324] sm:$0xf]
    %v2940 = vld [vmem:[#allocation8 + $0x368] sm:$0xf]
    %v2941 = vld [vmem:[#allocation8 + $0x3ac] sm:$0xf]
    %v2942 = vld [vmem:[#allocation8 + $0x3f0] sm:$0xf]
    %v2943 = vld [vmem:[#allocation8 + $0x434] sm:$0xf]
    %v2960 = vunpack.c.l.b16 %v2928
    %v2961 = vunpack.c.l.b16 %v2929
    %v2962 = vunpack.c.l.b16 %v2930
    %v2963 = vunpack.c.l.b16 %v2931
    %v2964 = vunpack.c.l.b16 %v2932
    %v2965 = vunpack.c.l.b16 %v2933
    %v2966 = vunpack.c.l.b16 %v2934
    %v2967 = vunpack.c.l.b16 %v2935
    %v2968 = vunpack.c.l.b16 %v2936
    %v2969 = vunpack.c.l.b16 %v2937
    %v2970 = vunpack.c.l.b16 %v2938
    %v2971 = vunpack.c.l.b16 %v2939
    %v2972 = vunpack.c.l.b16 %v2940
    %v2973 = vunpack.c.l.b16 %v2941
    %v2974 = vunpack.c.l.b16 %v2942
    %v2975 = vunpack.c.l.b16 %v2943
    %v2976 = vpack.c.b16 %v2961, %v2960
    %v2977 = vpack.c.b16 %v2963, %v2962
    %v2978 = vpack.c.b16 %v2965, %v2964
    %v2979 = vpack.c.b16 %v2967, %v2966
    %v2980 = vpack.c.b16 %v2969, %v2968
    %v2981 = vpack.c.b16 %v2971, %v2970
    %v2982 = vpack.c.b16 %v2973, %v2972
    %v2983 = vpack.c.b16 %v2975, %v2974
    %2992 = vmatprep.subr.bf16.mxu0 0
    %2993 = vmatpush1.bf16.msra.mxu0 %v2976
    %2994 = vmatprep.subr.bf16.mxu0 0
    %2995 = vmatpush1.bf16.msra.mxu0 %v2977
    %2996 = vmatprep.subr.bf16.mxu0 0
    %2997 = vmatpush1.bf16.msra.mxu0 %v2978
    %2998 = vmatprep.subr.bf16.mxu0 0
    %2999 = vmatpush1.bf16.msra.mxu0 %v2979
    %3000 = vmatprep.subr.bf16.mxu0 0
    %3001 = vmatpush1.bf16.msra.mxu0 %v2980
    %3002 = vmatprep.subr.bf16.mxu0 0
    %3003 = vmatpush1.bf16.msra.mxu0 %v2981
    %3004 = vmatprep.subr.bf16.mxu0 0
    %3005 = vmatpush1.bf16.msra.mxu0 %v2982
    %3006 = vmatprep.subr.bf16.mxu0 0
    %3007 = vmatpush1.bf16.msra.mxu0 %v2983
    %3008 = vmatprep.subr.bf16.mxu0 0
    %3009 = vmatpush1.bf16.msra.mxu0 0
    %3010 = vmatprep.subr.bf16.mxu0 0
    %3011 = vmatpush1.bf16.msra.mxu0 0
    %3012 = vmatprep.subr.bf16.mxu0 0
    %3013 = vmatpush1.bf16.msra.mxu0 0
    %3014 = vmatprep.subr.bf16.mxu0 0
    %3015 = vmatpush1.bf16.msra.mxu0 0
    %3016 = vmatprep.subr.bf16.mxu0 0
    %3017 = vmatpush1.bf16.msra.mxu0 0
    %3018 = vmatprep.subr.bf16.mxu0 0
    %3019 = vmatpush1.bf16.msra.mxu0 0
    %3020 = vmatprep.subr.bf16.mxu0 0
    %3021 = vmatpush1.bf16.msra.mxu0 0
    %3022 = vmatprep.subr.bf16.mxu0 0
    %3023 = vmatpush1.bf16.msra.mxu0 0
    %3024 = vmatprep.mubr.bf16.mxu0 0
    %3025 = vmatmul.mubr.bf16.gmra.mrb[0].mxu0 %v2158
    %v3026 = vpop.f32.mrb[0].mxu0
    %v3027 = vadd.f32 0.0, %v3026
    %v3028 = vpop.f32.mrb[0].mxu0
    %v3029 = vpop.f32.mrb[0].mxu0
    %v3030 = vadd.f32 0.0, %v3029
    %v3031 = vpop.f32.mrb[0].mxu0
    %3032 = vmatprep.mubr.bf16.mxu0 0
    %3033 = vmatmul.mubr.bf16.gmra.mrb[0].mxu0 %v2159
    %v3034 = vpop.f32.mrb[0].mxu0
    %v3035 = vadd.f32 0.0, %v3034
    %v3036 = vpop.f32.mrb[0].mxu0
    %v3037 = vpop.f32.mrb[0].mxu0
    %v3038 = vadd.f32 0.0, %v3037
    %v3039 = vpop.f32.mrb[0].mxu0
    %3040 = vmatprep.mubr.bf16.mxu0 0
    %3041 = vmatmul.mubr.bf16.gmra.mrb[0].mxu0 %v2160
    %v3042 = vpop.f32.mrb[0].mxu0
    %v3043 = vadd.f32 0.0, %v3042
    %v3044 = vpop.f32.mrb[0].mxu0
    %v3045 = vpop.f32.mrb[0].mxu0
    %v3046 = vadd.f32 0.0, %v3045
    %v3047 = vpop.f32.mrb[0].mxu0
    %3048 = vmatprep.mubr.bf16.mxu0 0
    %3049 = vmatmul.mubr.bf16.gmra.mrb[0].mxu0 %v2161
    %v3050 = vpop.f32.mrb[0].mxu0
    %v3051 = vadd.f32 0.0, %v3050
    %v3052 = vpop.f32.mrb[0].mxu0
    %v3053 = vpop.f32.mrb[0].mxu0
    %v3054 = vadd.f32 0.0, %v3053
    %v3055 = vpop.f32.mrb[0].mxu0
    %3056 = vmatprep.mubr.bf16.mxu0 0
    %3057 = vmatmul.mubr.bf16.gmra.mrb[0].mxu0 %v2162
    %v3058 = vpop.f32.mrb[0].mxu0
    %v3059 = vadd.f32 0.0, %v3058
    %v3060 = vpop.f32.mrb[0].mxu0
    %v3061 = vpop.f32.mrb[0].mxu0
    %v3062 = vadd.f32 0.0, %v3061
    %v3063 = vpop.f32.mrb[0].mxu0
    %3064 = vmatprep.mubr.bf16.mxu0 0
    %3065 = vmatmul.mubr.bf16.gmra.mrb[0].mxu0 %v2163
    %v3066 = vpop.f32.mrb[0].mxu0
    %v3067 = vadd.f32 0.0, %v3066
    %v3068 = vpop.f32.mrb[0].mxu0
    %v3069 = vpop.f32.mrb[0].mxu0
    %v3070 = vadd.f32 0.0, %v3069
    %v3071 = vpop.f32.mrb[0].mxu0
    %3072 = vmatprep.mubr.bf16.mxu0 0
    %3073 = vmatmul.mubr.bf16.gmra.mrb[0].mxu0 %v2164
    %v3074 = vpop.f32.mrb[0].mxu0
    %v3075 = vadd.f32 0.0, %v3074
    %v3076 = vpop.f32.mrb[0].mxu0
    %v3077 = vpop.f32.mrb[0].mxu0
    %v3078 = vadd.f32 0.0, %v3077
    %v3079 = vpop.f32.mrb[0].mxu0
    %3080 = vmatprep.mubr.bf16.mxu0 0
    %3081 = vmatmul.mubr.bf16.gmra.mrb[0].mxu0 %v2165
    %v3082 = vpop.f32.mrb[0].mxu0
    %v3083 = vadd.f32 0.0, %v3082
    %v3084 = vpop.f32.mrb[0].mxu0
    %v3085 = vpop.f32.mrb[0].mxu0
    %v3086 = vadd.f32 0.0, %v3085
    %v3087 = vpop.f32.mrb[0].mxu0
    %3088 = vdwg.mxu0
    %v3105 = vunpack.c.l.b16 %v2912
    %v3106 = vunpack.c.l.b16 %v2913
    %v3107 = vunpack.c.l.b16 %v2914
    %v3108 = vunpack.c.l.b16 %v2915
    %v3109 = vunpack.c.l.b16 %v2916
    %v3110 = vunpack.c.l.b16 %v2917
    %v3111 = vunpack.c.l.b16 %v2918
    %v3112 = vunpack.c.l.b16 %v2919
    %v3113 = vunpack.c.l.b16 %v2920
    %v3114 = vunpack.c.l.b16 %v2921
    %v3115 = vunpack.c.l.b16 %v2922
    %v3116 = vunpack.c.l.b16 %v2923
    %v3117 = vunpack.c.l.b16 %v2924
    %v3118 = vunpack.c.l.b16 %v2925
    %v3119 = vunpack.c.l.b16 %v2926
    %v3120 = vunpack.c.l.b16 %v2927
    %v3121 = vpack.c.b16 %v3106, %v3105
    %v3122 = vpack.c.b16 %v3108, %v3107
    %v3123 = vpack.c.b16 %v3110, %v3109
    %v3124 = vpack.c.b16 %v3112, %v3111
    %v3125 = vpack.c.b16 %v3114, %v3113
    %v3126 = vpack.c.b16 %v3116, %v3115
    %v3127 = vpack.c.b16 %v3118, %v3117
    %v3128 = vpack.c.b16 %v3120, %v3119
    %3137 = vmatprep.subr.bf16.mxu0 0
    %3138 = vmatpush1.bf16.msra.mxu0 %v3121
    %3139 = vmatprep.subr.bf16.mxu0 0
    %3140 = vmatpush1.bf16.msra.mxu0 %v3122
    %3141 = vmatprep.subr.bf16.mxu0 0
    %3142 = vmatpush1.bf16.msra.mxu0 %v3123
    %3143 = vmatprep.subr.bf16.mxu0 0
    %3144 = vmatpush1.bf16.msra.mxu0 %v3124
    %3145 = vmatprep.subr.bf16.mxu0 0
    %3146 = vmatpush1.bf16.msra.mxu0 %v3125
    %3147 = vmatprep.subr.bf16.mxu0 0
    %3148 = vmatpush1.bf16.msra.mxu0 %v3126
    %3149 = vmatprep.subr.bf16.mxu0 0
    %3150 = vmatpush1.bf16.msra.mxu0 %v3127
    %3151 = vmatprep.subr.bf16.mxu0 0
    %3152 = vmatpush1.bf16.msra.mxu0 %v3128
    %3153 = vmatprep.subr.bf16.mxu0 0
    %3154 = vmatpush1.bf16.msra.mxu0 0
    %3155 = vmatprep.subr.bf16.mxu0 0
    %3156 = vmatpush1.bf16.msra.mxu0 0
    %3157 = vmatprep.subr.bf16.mxu0 0
    %3158 = vmatpush1.bf16.msra.mxu0 0
    %3159 = vmatprep.subr.bf16.mxu0 0
    %3160 = vmatpush1.bf16.msra.mxu0 0
    %3161 = vmatprep.subr.bf16.mxu0 0
    %3162 = vmatpush1.bf16.msra.mxu0 0
    %3163 = vmatprep.subr.bf16.mxu0 0
    %3164 = vmatpush1.bf16.msra.mxu0 0
    %3165 = vmatprep.subr.bf16.mxu0 0
    %3166 = vmatpush1.bf16.msra.mxu0 0
    %3167 = vmatprep.subr.bf16.mxu0 0
    %3168 = vmatpush1.bf16.msra.mxu0 0
    %3169 = vmatprep.mubr.bf16.mxu0 0
    %3170 = vmatmul.mubr.bf16.gmra.mrb[0].mxu0 %v1723
    %v3171 = vpop.f32.mrb[0].mxu0
    %v3172 = vadd.f32 %v3027, %v3171
    %v3173 = vpop.f32.mrb[0].mxu0
    %v3174 = vpop.f32.mrb[0].mxu0
    %v3175 = vadd.f32 %v3030, %v3174
    %v3176 = vpop.f32.mrb[0].mxu0
    %3177 = vmatprep.mubr.bf16.mxu0 0
    %3178 = vmatmul.mubr.bf16.gmra.mrb[0].mxu0 %v1724
    %v3179 = vpop.f32.mrb[0].mxu0
    %v3180 = vadd.f32 %v3035, %v3179
    %v3181 = vpop.f32.mrb[0].mxu0
    %v3182 = vpop.f32.mrb[0].mxu0
    %v3183 = vadd.f32 %v3038, %v3182
    %v3184 = vpop.f32.mrb[0].mxu0
    %3185 = vmatprep.mubr.bf16.mxu0 0
    %3186 = vmatmul.mubr.bf16.gmra.mrb[0].mxu0 %v1725
    %v3187 = vpop.f32.mrb[0].mxu0
    %v3188 = vadd.f32 %v3043, %v3187
    %v3189 = vpop.f32.mrb[0].mxu0
    %v3190 = vpop.f32.mrb[0].mxu0
    %v3191 = vadd.f32 %v3046, %v3190
    %v3192 = vpop.f32.mrb[0].mxu0
    %3193 = vmatprep.mubr.bf16.mxu0 0
    %3194 = vmatmul.mubr.bf16.gmra.mrb[0].mxu0 %v1726
    %v3195 = vpop.f32.mrb[0].mxu0
    %v3196 = vadd.f32 %v3051, %v3195
    %v3197 = vpop.f32.mrb[0].mxu0
    %v3198 = vpop.f32.mrb[0].mxu0
    %v3199 = vadd.f32 %v3054, %v3198
    %v3200 = vpop.f32.mrb[0].mxu0
    %3201 = vmatprep.mubr.bf16.mxu0 0
    %3202 = vmatmul.mubr.bf16.gmra.mrb[0].mxu0 %v1727
    %v3203 = vpop.f32.mrb[0].mxu0
    %v3204 = vadd.f32 %v3059, %v3203
    %v3205 = vpop.f32.mrb[0].mxu0
    %v3206 = vpop.f32.mrb[0].mxu0
    %v3207 = vadd.f32 %v3062, %v3206
    %v3208 = vpop.f32.mrb[0].mxu0
    %3209 = vmatprep.mubr.bf16.mxu0 0
    %3210 = vmatmul.mubr.bf16.gmra.mrb[0].mxu0 %v1728
    %v3211 = vpop.f32.mrb[0].mxu0
    %v3212 = vadd.f32 %v3067, %v3211
    %v3213 = vpop.f32.mrb[0].mxu0
    %v3214 = vpop.f32.mrb[0].mxu0
    %v3215 = vadd.f32 %v3070, %v3214
    %v3216 = vpop.f32.mrb[0].mxu0
    %3217 = vmatprep.mubr.bf16.mxu0 0
    %3218 = vmatmul.mubr.bf16.gmra.mrb[0].mxu0 %v1729
    %v3219 = vpop.f32.mrb[0].mxu0
    %v3220 = vadd.f32 %v3075, %v3219
    %v3221 = vpop.f32.mrb[0].mxu0
    %v3222 = vpop.f32.mrb[0].mxu0
    %v3223 = vadd.f32 %v3078, %v3222
    %v3224 = vpop.f32.mrb[0].mxu0
    %3225 = vmatprep.mubr.bf16.mxu0 0
    %3226 = vmatmul.mubr.bf16.gmra.mrb[0].mxu0 %v1730
    %v3227 = vpop.f32.mrb[0].mxu0
    %v3228 = vadd.f32 %v3083, %v3227
    %v3229 = vpop.f32.mrb[0].mxu0
    %v3230 = vpop.f32.mrb[0].mxu0
    %v3231 = vadd.f32 %v3086, %v3230
    %v3232 = vpop.f32.mrb[0].mxu0
    %3233 = vdwg.mxu0
    %v3234 = vld [vmem:[#allocation8 + $0x3c] sm:$0xf]
    %v3235 = vld [vmem:[#allocation8 + $0x80] sm:$0xf]
    %v3236 = vld [vmem:[#allocation8 + $0xc4] sm:$0xf]
    %v3237 = vld [vmem:[#allocation8 + $0x108] sm:$0xf]
    %v3238 = vld [vmem:[#allocation8 + $0x14c] sm:$0xf]
    %v3239 = vld [vmem:[#allocation8 + $0x190] sm:$0xf]
    %v3240 = vld [vmem:[#allocation8 + $0x1d4] sm:$0xf]
    %v3241 = vld [vmem:[#allocation8 + $0x218] sm:$0xf]
    %v3242 = vld [vmem:[#allocation8 + $0x25c] sm:$0xf]
    %v3243 = vld [vmem:[#allocation8 + $0x2a0] sm:$0xf]
    %v3244 = vld [vmem:[#allocation8 + $0x2e4] sm:$0xf]
    %v3245 = vld [vmem:[#allocation8 + $0x328] sm:$0xf]
    %v3246 = vld [vmem:[#allocation8 + $0x36c] sm:$0xf]
    %v3247 = vld [vmem:[#allocation8 + $0x3b0] sm:$0xf]
    %v3248 = vld [vmem:[#allocation8 + $0x3f4] sm:$0xf]
    %v3249 = vld [vmem:[#allocation8 + $0x438] sm:$0xf]
    %v3266 = vunpack.c.l.b16 %v3234
    %v3267 = vunpack.c.l.b16 %v3235
    %v3268 = vunpack.c.l.b16 %v3236
    %v3269 = vunpack.c.l.b16 %v3237
    %v3270 = vunpack.c.l.b16 %v3238
    %v3271 = vunpack.c.l.b16 %v3239
    %v3272 = vunpack.c.l.b16 %v3240
    %v3273 = vunpack.c.l.b16 %v3241
    %v3274 = vunpack.c.l.b16 %v3242
    %v3275 = vunpack.c.l.b16 %v3243
    %v3276 = vunpack.c.l.b16 %v3244
    %v3277 = vunpack.c.l.b16 %v3245
    %v3278 = vunpack.c.l.b16 %v3246
    %v3279 = vunpack.c.l.b16 %v3247
    %v3280 = vunpack.c.l.b16 %v3248
    %v3281 = vunpack.c.l.b16 %v3249
    %v3282 = vpack.c.b16 %v3267, %v3266
    %v3283 = vpack.c.b16 %v3269, %v3268
    %v3284 = vpack.c.b16 %v3271, %v3270
    %v3285 = vpack.c.b16 %v3273, %v3272
    %v3286 = vpack.c.b16 %v3275, %v3274
    %v3287 = vpack.c.b16 %v3277, %v3276
    %v3288 = vpack.c.b16 %v3279, %v3278
    %v3289 = vpack.c.b16 %v3281, %v3280
    %3298 = vmatprep.subr.bf16.mxu0 0
    %3299 = vmatpush1.bf16.msra.mxu0 %v3282
    %3300 = vmatprep.subr.bf16.mxu0 0
    %3301 = vmatpush1.bf16.msra.mxu0 %v3283
    %3302 = vmatprep.subr.bf16.mxu0 0
    %3303 = vmatpush1.bf16.msra.mxu0 %v3284
    %3304 = vmatprep.subr.bf16.mxu0 0
    %3305 = vmatpush1.bf16.msra.mxu0 %v3285
    %3306 = vmatprep.subr.bf16.mxu0 0
    %3307 = vmatpush1.bf16.msra.mxu0 %v3286
    %3308 = vmatprep.subr.bf16.mxu0 0
    %3309 = vmatpush1.bf16.msra.mxu0 %v3287
    %3310 = vmatprep.subr.bf16.mxu0 0
    %3311 = vmatpush1.bf16.msra.mxu0 %v3288
    %3312 = vmatprep.subr.bf16.mxu0 0
    %3313 = vmatpush1.bf16.msra.mxu0 %v3289
    %3314 = vmatprep.subr.bf16.mxu0 0
    %3315 = vmatpush1.bf16.msra.mxu0 0
    %3316 = vmatprep.subr.bf16.mxu0 0
    %3317 = vmatpush1.bf16.msra.mxu0 0
    %3318 = vmatprep.subr.bf16.mxu0 0
    %3319 = vmatpush1.bf16.msra.mxu0 0
    %3320 = vmatprep.subr.bf16.mxu0 0
    %3321 = vmatpush1.bf16.msra.mxu0 0
    %3322 = vmatprep.subr.bf16.mxu0 0
    %3323 = vmatpush1.bf16.msra.mxu0 0
    %3324 = vmatprep.subr.bf16.mxu0 0
    %3325 = vmatpush1.bf16.msra.mxu0 0
    %3326 = vmatprep.subr.bf16.mxu0 0
    %3327 = vmatpush1.bf16.msra.mxu0 0
    %3328 = vmatprep.subr.bf16.mxu0 0
    %3329 = vmatpush1.bf16.msra.mxu0 0
    %3330 = vmatprep.mubr.bf16.mxu0 0
    %3331 = vmatmul.mubr.bf16.gmra.mrb[0].mxu0 %v2382
    %v3332 = vpop.f32.mrb[0].mxu0
    %v3333 = vadd.f32 0.0, %v3332
    %v3334 = vpop.f32.mrb[0].mxu0
    %v3335 = vpop.f32.mrb[0].mxu0
    %v3336 = vadd.f32 0.0, %v3335
    %v3337 = vpop.f32.mrb[0].mxu0
    %3338 = vmatprep.mubr.bf16.mxu0 0
    %3339 = vmatmul.mubr.bf16.gmra.mrb[0].mxu0 %v2383
    %v3340 = vpop.f32.mrb[0].mxu0
    %v3341 = vadd.f32 0.0, %v3340
    %v3342 = vpop.f32.mrb[0].mxu0
    %v3343 = vpop.f32.mrb[0].mxu0
    %v3344 = vadd.f32 0.0, %v3343
    %v3345 = vpop.f32.mrb[0].mxu0
    %3346 = vmatprep.mubr.bf16.mxu0 0
    %3347 = vmatmul.mubr.bf16.gmra.mrb[0].mxu0 %v2384
    %v3348 = vpop.f32.mrb[0].mxu0
    %v3349 = vadd.f32 0.0, %v3348
    %v3350 = vpop.f32.mrb[0].mxu0
    %v3351 = vpop.f32.mrb[0].mxu0
    %v3352 = vadd.f32 0.0, %v3351
    %v3353 = vpop.f32.mrb[0].mxu0
    %3354 = vmatprep.mubr.bf16.mxu0 0
    %3355 = vmatmul.mubr.bf16.gmra.mrb[0].mxu0 %v2385
    %v3356 = vpop.f32.mrb[0].mxu0
    %v3357 = vadd.f32 0.0, %v3356
    %v3358 = vpop.f32.mrb[0].mxu0
    %v3359 = vpop.f32.mrb[0].mxu0
    %v3360 = vadd.f32 0.0, %v3359
    %v3361 = vpop.f32.mrb[0].mxu0
    %3362 = vmatprep.mubr.bf16.mxu0 0
    %3363 = vmatmul.mubr.bf16.gmra.mrb[0].mxu0 %v2386
    %v3364 = vpop.f32.mrb[0].mxu0
    %v3365 = vadd.f32 0.0, %v3364
    %v3366 = vpop.f32.mrb[0].mxu0
    %v3367 = vpop.f32.mrb[0].mxu0
    %v3368 = vadd.f32 0.0, %v3367
    %v3369 = vpop.f32.mrb[0].mxu0
    %3370 = vmatprep.mubr.bf16.mxu0 0
    %3371 = vmatmul.mubr.bf16.gmra.mrb[0].mxu0 %v2387
    %v3372 = vpop.f32.mrb[0].mxu0
    %v3373 = vadd.f32 0.0, %v3372
    %v3374 = vpop.f32.mrb[0].mxu0
    %v3375 = vpop.f32.mrb[0].mxu0
    %v3376 = vadd.f32 0.0, %v3375
    %v3377 = vpop.f32.mrb[0].mxu0
    %3378 = vmatprep.mubr.bf16.mxu0 0
    %3379 = vmatmul.mubr.bf16.gmra.mrb[0].mxu0 %v2388
    %v3380 = vpop.f32.mrb[0].mxu0
    %v3381 = vadd.f32 0.0, %v3380
    %v3382 = vpop.f32.mrb[0].mxu0
    %v3383 = vpop.f32.mrb[0].mxu0
    %v3384 = vadd.f32 0.0, %v3383
    %v3385 = vpop.f32.mrb[0].mxu0
    %3386 = vmatprep.mubr.bf16.mxu0 0
    %3387 = vmatmul.mubr.bf16.gmra.mrb[0].mxu0 %v2389
    %v3388 = vpop.f32.mrb[0].mxu0
    %v3389 = vadd.f32 0.0, %v3388
    %v3390 = vpop.f32.mrb[0].mxu0
    %v3391 = vpop.f32.mrb[0].mxu0
    %v3392 = vadd.f32 0.0, %v3391
    %v3393 = vpop.f32.mrb[0].mxu0
    %3394 = vdwg.mxu0
    %v3395 = vadd.f32 %v3172, %v3333
    %v3396 = vadd.f32 %v3175, %v3336
    %v3397 = vadd.f32 %v3180, %v3341
    %v3398 = vadd.f32 %v3183, %v3344
    %v3399 = vadd.f32 %v3188, %v3349
    %v3400 = vadd.f32 %v3191, %v3352
    %v3401 = vadd.f32 %v3196, %v3357
    %v3402 = vadd.f32 %v3199, %v3360
    %v3403 = vadd.f32 %v3204, %v3365
    %v3404 = vadd.f32 %v3207, %v3368
    %v3405 = vadd.f32 %v3212, %v3373
    %v3406 = vadd.f32 %v3215, %v3376
    %v3407 = vadd.f32 %v3220, %v3381
    %v3408 = vadd.f32 %v3223, %v3384
    %v3409 = vadd.f32 %v3228, %v3389
    %v3410 = vadd.f32 %v3231, %v3392
    %v3411 = vld [vmem:[#allocation8 + $0x40] sm:$0xf]
    %v3412 = vld [vmem:[#allocation8 + $0x84] sm:$0xf]
    %v3413 = vld [vmem:[#allocation8 + $0xc8] sm:$0xf]
    %v3414 = vld [vmem:[#allocation8 + $0x10c] sm:$0xf]
    %v3415 = vld [vmem:[#allocation8 + $0x150] sm:$0xf]
    %v3416 = vld [vmem:[#allocation8 + $0x194] sm:$0xf]
    %v3417 = vld [vmem:[#allocation8 + $0x1d8] sm:$0xf]
    %v3418 = vld [vmem:[#allocation8 + $0x21c] sm:$0xf]
    %v3419 = vld [vmem:[#allocation8 + $0x260] sm:$0xf]
    %v3420 = vld [vmem:[#allocation8 + $0x2a4] sm:$0xf]
    %v3421 = vld [vmem:[#allocation8 + $0x2e8] sm:$0xf]
    %v3422 = vld [vmem:[#allocation8 + $0x32c] sm:$0xf]
    %v3423 = vld [vmem:[#allocation8 + $0x370] sm:$0xf]
    %v3424 = vld [vmem:[#allocation8 + $0x3b4] sm:$0xf]
    %v3425 = vld [vmem:[#allocation8 + $0x3f8] sm:$0xf]
    %v3426 = vld [vmem:[#allocation8 + $0x43c] sm:$0xf]
    %v3443 = vunpack.c.l.b16 %v3411
    %v3444 = vunpack.c.l.b16 %v3412
    %v3445 = vunpack.c.l.b16 %v3413
    %v3446 = vunpack.c.l.b16 %v3414
    %v3447 = vunpack.c.l.b16 %v3415
    %v3448 = vunpack.c.l.b16 %v3416
    %v3449 = vunpack.c.l.b16 %v3417
    %v3450 = vunpack.c.l.b16 %v3418
    %v3451 = vunpack.c.l.b16 %v3419
    %v3452 = vunpack.c.l.b16 %v3420
    %v3453 = vunpack.c.l.b16 %v3421
    %v3454 = vunpack.c.l.b16 %v3422
    %v3455 = vunpack.c.l.b16 %v3423
    %v3456 = vunpack.c.l.b16 %v3424
    %v3457 = vunpack.c.l.b16 %v3425
    %v3458 = vunpack.c.l.b16 %v3426
    %v3459 = vpack.c.b16 %v3444, %v3443
    %v3460 = vpack.c.b16 %v3446, %v3445
    %v3461 = vpack.c.b16 %v3448, %v3447
    %v3462 = vpack.c.b16 %v3450, %v3449
    %v3463 = vpack.c.b16 %v3452, %v3451
    %v3464 = vpack.c.b16 %v3454, %v3453
    %v3465 = vpack.c.b16 %v3456, %v3455
    %v3466 = vpack.c.b16 %v3458, %v3457
    %3475 = vmatprep.subr.bf16.mxu0 0
    %3476 = vmatpush1.bf16.msra.mxu0 %v3459
    %3477 = vmatprep.subr.bf16.mxu0 0
    %3478 = vmatpush1.bf16.msra.mxu0 %v3460
    %3479 = vmatprep.subr.bf16.mxu0 0
    %3480 = vmatpush1.bf16.msra.mxu0 %v3461
    %3481 = vmatprep.subr.bf16.mxu0 0
    %3482 = vmatpush1.bf16.msra.mxu0 %v3462
    %3483 = vmatprep.subr.bf16.mxu0 0
    %3484 = vmatpush1.bf16.msra.mxu0 %v3463
    %3485 = vmatprep.subr.bf16.mxu0 0
    %3486 = vmatpush1.bf16.msra.mxu0 %v3464
    %3487 = vmatprep.subr.bf16.mxu0 0
    %3488 = vmatpush1.bf16.msra.mxu0 %v3465
    %3489 = vmatprep.subr.bf16.mxu0 0
    %3490 = vmatpush1.bf16.msra.mxu0 %v3466
    %3491 = vmatprep.subr.bf16.mxu0 0
    %3492 = vmatpush1.bf16.msra.mxu0 0
    %3493 = vmatprep.subr.bf16.mxu0 0
    %3494 = vmatpush1.bf16.msra.mxu0 0
    %3495 = vmatprep.subr.bf16.mxu0 0
    %3496 = vmatpush1.bf16.msra.mxu0 0
    %3497 = vmatprep.subr.bf16.mxu0 0
    %3498 = vmatpush1.bf16.msra.mxu0 0
    %3499 = vmatprep.subr.bf16.mxu0 0
    %3500 = vmatpush1.bf16.msra.mxu0 0
    %3501 = vmatprep.subr.bf16.mxu0 0
    %3502 = vmatpush1.bf16.msra.mxu0 0
    %3503 = vmatprep.subr.bf16.mxu0 0
    %3504 = vmatpush1.bf16.msra.mxu0 0
    %3505 = vmatprep.subr.bf16.mxu0 0
    %3506 = vmatpush1.bf16.msra.mxu0 0
    %3507 = vmatprep.mubr.bf16.mxu0 0
    %3508 = vmatmul.mubr.bf16.gmra.mrb[0].mxu0 %v2182
    %v3509 = vpop.f32.mrb[0].mxu0
    %v3510 = vadd.f32 0.0, %v3509
    %v3511 = vpop.f32.mrb[0].mxu0
    %v3512 = vpop.f32.mrb[0].mxu0
    %v3513 = vadd.f32 0.0, %v3512
    %v3514 = vpop.f32.mrb[0].mxu0
    %3515 = vmatprep.mubr.bf16.mxu0 0
    %3516 = vmatmul.mubr.bf16.gmra.mrb[0].mxu0 %v2183
    %v3517 = vpop.f32.mrb[0].mxu0
    %v3518 = vadd.f32 0.0, %v3517
    %v3519 = vpop.f32.mrb[0].mxu0
    %v3520 = vpop.f32.mrb[0].mxu0
    %v3521 = vadd.f32 0.0, %v3520
    %v3522 = vpop.f32.mrb[0].mxu0
    %3523 = vmatprep.mubr.bf16.mxu0 0
    %3524 = vmatmul.mubr.bf16.gmra.mrb[0].mxu0 %v2184
    %v3525 = vpop.f32.mrb[0].mxu0
    %v3526 = vadd.f32 0.0, %v3525
    %v3527 = vpop.f32.mrb[0].mxu0
    %v3528 = vpop.f32.mrb[0].mxu0
    %v3529 = vadd.f32 0.0, %v3528
    %v3530 = vpop.f32.mrb[0].mxu0
    %3531 = vmatprep.mubr.bf16.mxu0 0
    %3532 = vmatmul.mubr.bf16.gmra.mrb[0].mxu0 %v2185
    %v3533 = vpop.f32.mrb[0].mxu0
    %v3534 = vadd.f32 0.0, %v3533
    %v3535 = vpop.f32.mrb[0].mxu0
    %v3536 = vpop.f32.mrb[0].mxu0
    %v3537 = vadd.f32 0.0, %v3536
    %v3538 = vpop.f32.mrb[0].mxu0
    %3539 = vmatprep.mubr.bf16.mxu0 0
    %3540 = vmatmul.mubr.bf16.gmra.mrb[0].mxu0 %v2186
    %v3541 = vpop.f32.mrb[0].mxu0
    %v3542 = vadd.f32 0.0, %v3541
    %v3543 = vpop.f32.mrb[0].mxu0
    %v3544 = vpop.f32.mrb[0].mxu0
    %v3545 = vadd.f32 0.0, %v3544
    %v3546 = vpop.f32.mrb[0].mxu0
    %3547 = vmatprep.mubr.bf16.mxu0 0
    %3548 = vmatmul.mubr.bf16.gmra.mrb[0].mxu0 %v2187
    %v3549 = vpop.f32.mrb[0].mxu0
    %v3550 = vadd.f32 0.0, %v3549
    %v3551 = vpop.f32.mrb[0].mxu0
    %v3552 = vpop.f32.mrb[0].mxu0
    %v3553 = vadd.f32 0.0, %v3552
    %v3554 = vpop.f32.mrb[0].mxu0
    %3555 = vmatprep.mubr.bf16.mxu0 0
    %3556 = vmatmul.mubr.bf16.gmra.mrb[0].mxu0 %v2188
    %v3557 = vpop.f32.mrb[0].mxu0
    %v3558 = vadd.f32 0.0, %v3557
    %v3559 = vpop.f32.mrb[0].mxu0
    %v3560 = vpop.f32.mrb[0].mxu0
    %v3561 = vadd.f32 0.0, %v3560
    %v3562 = vpop.f32.mrb[0].mxu0
    %3563 = vmatprep.mubr.bf16.mxu0 0
    %3564 = vmatmul.mubr.bf16.gmra.mrb[0].mxu0 %v2189
    %v3565 = vpop.f32.mrb[0].mxu0
    %v3566 = vadd.f32 0.0, %v3565
    %v3567 = vpop.f32.mrb[0].mxu0
    %v3568 = vpop.f32.mrb[0].mxu0
    %v3569 = vadd.f32 0.0, %v3568
    %v3570 = vpop.f32.mrb[0].mxu0
    %3571 = vdwg.mxu0
    %v3572 = vadd.f32 %v3395, %v3510
    %v3573 = vadd.f32 %v3396, %v3513
    %v3574 = vadd.f32 %v3397, %v3518
    %v3575 = vadd.f32 %v3398, %v3521
    %v3576 = vadd.f32 %v3399, %v3526
    %v3577 = vadd.f32 %v3400, %v3529
    %v3578 = vadd.f32 %v3401, %v3534
    %v3579 = vadd.f32 %v3402, %v3537
    %v3580 = vadd.f32 %v3403, %v3542
    %v3581 = vadd.f32 %v3404, %v3545
    %v3582 = vadd.f32 %v3405, %v3550
    %v3583 = vadd.f32 %v3406, %v3553
    %v3584 = vadd.f32 %v3407, %v3558
    %v3585 = vadd.f32 %v3408, %v3561
    %v3586 = vadd.f32 %v3409, %v3566
    %v3587 = vadd.f32 %v3410, %v3569
    %v3588 = vld [vmem:[%s4 + $0xc] sm:$0x1]
    %v3590 = vlaneseq
    %v3591 = vshrl.u32 %v3590, 7
    %v3592 = vsub.s32 0, %v3591
    %v3593 = vrot.slane %v3588, %v3592
    %v3595 = vadd.f32 %v3572, %v3593
    %v3596 = vadd.f32 %v3573, %v3593
    %v3597 = vadd.f32 %v3574, %v3593
    %v3598 = vadd.f32 %v3575, %v3593
    %v3599 = vadd.f32 %v3576, %v3593
    %v3600 = vadd.f32 %v3577, %v3593
    %v3601 = vadd.f32 %v3578, %v3593
    %v3602 = vadd.f32 %v3579, %v3593
    %v3603 = vadd.f32 %v3580, %v3593
    %v3604 = vadd.f32 %v3581, %v3593
    %v3605 = vadd.f32 %v3582, %v3593
    %v3606 = vadd.f32 %v3583, %v3593
    %v3607 = vadd.f32 %v3584, %v3593
    %v3608 = vadd.f32 %v3585, %v3593
    %v3609 = vadd.f32 %v3586, %v3593
    %v3610 = vadd.f32 %v3587, %v3593
    %v3611 = vld [vmem:[#allocation5] sm:$0xff]
    %v3612 = vld [vmem:[#allocation5 + $0x8] sm:$0xff]
    %v3613 = vld [vmem:[#allocation5 + $0x10] sm:$0xff]
    %v3614 = vld [vmem:[#allocation5 + $0x18] sm:$0xff]
    %v3615 = vld [vmem:[#allocation5 + $0x20] sm:$0xff]
    %v3616 = vld [vmem:[#allocation5 + $0x28] sm:$0xff]
    %v3617 = vld [vmem:[#allocation5 + $0x30] sm:$0xff]
    %v3618 = vld [vmem:[#allocation5 + $0x38] sm:$0xff]
    %v3619 = vld [vmem:[#allocation5 + $0x40] sm:$0xff]
    %v3620 = vld [vmem:[#allocation5 + $0x48] sm:$0xff]
    %v3621 = vld [vmem:[#allocation5 + $0x50] sm:$0xff]
    %v3622 = vld [vmem:[#allocation5 + $0x58] sm:$0xff]
    %v3623 = vld [vmem:[#allocation5 + $0x60] sm:$0xff]
    %v3624 = vld [vmem:[#allocation5 + $0x68] sm:$0xff]
    %v3625 = vld [vmem:[#allocation5 + $0x70] sm:$0xff]
    %v3626 = vld [vmem:[#allocation5 + $0x78] sm:$0xff]
    %vm3627 = vcmp.gt.f32.partialorder %v3611, 0.5
    %vm3628 = vcmp.gt.f32.partialorder %v3612, 0.5
    %vm3629 = vcmp.gt.f32.partialorder %v3613, 0.5
    %vm3630 = vcmp.gt.f32.partialorder %v3614, 0.5
    %vm3631 = vcmp.gt.f32.partialorder %v3615, 0.5
    %vm3632 = vcmp.gt.f32.partialorder %v3616, 0.5
    %vm3633 = vcmp.gt.f32.partialorder %v3617, 0.5
    %vm3634 = vcmp.gt.f32.partialorder %v3618, 0.5
    %vm3635 = vcmp.gt.f32.partialorder %v3619, 0.5
    %vm3636 = vcmp.gt.f32.partialorder %v3620, 0.5
    %vm3637 = vcmp.gt.f32.partialorder %v3621, 0.5
    %vm3638 = vcmp.gt.f32.partialorder %v3622, 0.5
    %vm3639 = vcmp.gt.f32.partialorder %v3623, 0.5
    %vm3640 = vcmp.gt.f32.partialorder %v3624, 0.5
    %vm3641 = vcmp.gt.f32.partialorder %v3625, 0.5
    %vm3642 = vcmp.gt.f32.partialorder %v3626, 0.5
    %v3643 = vsel %vm3627, %v2896, -1e+30
    %v3644 = vsel %vm3628, %v2897, -1e+30
    %v3645 = vsel %vm3629, %v2898, -1e+30
    %v3646 = vsel %vm3630, %v2899, -1e+30
    %v3647 = vsel %vm3631, %v2900, -1e+30
    %v3648 = vsel %vm3632, %v2901, -1e+30
    %v3649 = vsel %vm3633, %v2902, -1e+30
    %v3650 = vsel %vm3634, %v2903, -1e+30
    %v3651 = vsel %vm3635, %v2904, -1e+30
    %v3652 = vsel %vm3636, %v2905, -1e+30
    %v3653 = vsel %vm3637, %v2906, -1e+30
    %v3654 = vsel %vm3638, %v2907, -1e+30
    %v3655 = vsel %vm3639, %v2908, -1e+30
    %v3656 = vsel %vm3640, %v2909, -1e+30
    %v3657 = vsel %vm3641, %v2910, -1e+30
    %v3658 = vsel %vm3642, %v2911, -1e+30
    %v3659 = vlaneseq
    %v3660 = vand.u32 %v3659, 127
    %vm3661 = vcmp.ge.s32.totalorder %v3660, 0
    %vm3662 = vcmp.lt.s32.totalorder %v3660, 3
    %vm3663 = vmand %vm3661, %vm3662
    %v3664 = vsel %vm3663, %v3643, -1e+30
    %v3665 = vsel %vm3663, %v3644, -1e+30
    %v3666 = vsel %vm3663, %v3645, -1e+30
    %v3667 = vsel %vm3663, %v3646, -1e+30
    %v3668 = vsel %vm3663, %v3647, -1e+30
    %v3669 = vsel %vm3663, %v3648, -1e+30
    %v3670 = vsel %vm3663, %v3649, -1e+30
    %v3671 = vsel %vm3663, %v3650, -1e+30
    %v3672 = vsel %vm3663, %v3651, -1e+30
    %v3673 = vsel %vm3663, %v3652, -1e+30
    %v3674 = vsel %vm3663, %v3653, -1e+30
    %v3675 = vsel %vm3663, %v3654, -1e+30
    %v3676 = vsel %vm3663, %v3655, -1e+30
    %v3677 = vsel %vm3663, %v3656, -1e+30
    %v3678 = vsel %vm3663, %v3657, -1e+30
    %v3679 = vsel %vm3663, %v3658, -1e+30
    %3680 = vmax.xlane.f32.xlu0 %v3664
    %v3681 = vpop.xlane.xlu0 %3680
    %3682 = vmax.xlane.f32.xlu0 %v3665
    %v3683 = vpop.xlane.xlu0 %3682
    %3684 = vmax.xlane.f32.xlu0 %v3666
    %v3685 = vpop.xlane.xlu0 %3684
    %3686 = vmax.xlane.f32.xlu0 %v3667
    %v3687 = vpop.xlane.xlu0 %3686
    %3688 = vmax.xlane.f32.xlu0 %v3668
    %v3689 = vpop.xlane.xlu0 %3688
    %3690 = vmax.xlane.f32.xlu0 %v3669
    %v3691 = vpop.xlane.xlu0 %3690
    %3692 = vmax.xlane.f32.xlu0 %v3670
    %v3693 = vpop.xlane.xlu0 %3692
    %3694 = vmax.xlane.f32.xlu0 %v3671
    %v3695 = vpop.xlane.xlu0 %3694
    %3696 = vmax.xlane.f32.xlu0 %v3672
    %v3697 = vpop.xlane.xlu0 %3696
    %3698 = vmax.xlane.f32.xlu0 %v3673
    %v3699 = vpop.xlane.xlu0 %3698
    %3700 = vmax.xlane.f32.xlu0 %v3674
    %v3701 = vpop.xlane.xlu0 %3700
    %3702 = vmax.xlane.f32.xlu0 %v3675
    %v3703 = vpop.xlane.xlu0 %3702
    %3704 = vmax.xlane.f32.xlu0 %v3676
    %v3705 = vpop.xlane.xlu0 %3704
    %3706 = vmax.xlane.f32.xlu0 %v3677
    %v3707 = vpop.xlane.xlu0 %3706
    %3708 = vmax.xlane.f32.xlu0 %v3678
    %v3709 = vpop.xlane.xlu0 %3708
    %3710 = vmax.xlane.f32.xlu0 %v3679
    %v3711 = vpop.xlane.xlu0 %3710
    %vm3712 = vmand %vm3663, %vm3627
    %vm3713 = vmand %vm3663, %vm3628
    %vm3714 = vmand %vm3663, %vm3629
    %vm3715 = vmand %vm3663, %vm3630
    %vm3716 = vmand %vm3663, %vm3631
    %vm3717 = vmand %vm3663, %vm3632
    %vm3718 = vmand %vm3663, %vm3633
    %vm3719 = vmand %vm3663, %vm3634
    %vm3720 = vmand %vm3663, %vm3635
    %vm3721 = vmand %vm3663, %vm3636
    %vm3722 = vmand %vm3663, %vm3637
    %vm3723 = vmand %vm3663, %vm3638
    %vm3724 = vmand %vm3663, %vm3639
    %vm3725 = vmand %vm3663, %vm3640
    %vm3726 = vmand %vm3663, %vm3641
    %vm3727 = vmand %vm3663, %vm3642
    %v3728 = vsub.f32 %v3643, %v3681
    %v3729 = vsub.f32 %v3644, %v3683
    %v3730 = vsub.f32 %v3645, %v3685
    %v3731 = vsub.f32 %v3646, %v3687
    %v3732 = vsub.f32 %v3647, %v3689
    %v3733 = vsub.f32 %v3648, %v3691
    %v3734 = vsub.f32 %v3649, %v3693
    %v3735 = vsub.f32 %v3650, %v3695
    %v3736 = vsub.f32 %v3651, %v3697
    %v3737 = vsub.f32 %v3652, %v3699
    %v3738 = vsub.f32 %v3653, %v3701
    %v3739 = vsub.f32 %v3654, %v3703
    %v3740 = vsub.f32 %v3655, %v3705
    %v3741 = vsub.f32 %v3656, %v3707
    %v3742 = vsub.f32 %v3657, %v3709
    %v3743 = vsub.f32 %v3658, %v3711
    %v3744 = vmul.f32 %v3728, 1.442695
    %v3745 = vpow.pop %v3744
    %v3746 = vmul.f32 %v3729, 1.442695
    %v3747 = vpow.pop %v3746
    %v3748 = vmul.f32 %v3730, 1.442695
    %v3749 = vpow.pop %v3748
    %v3750 = vmul.f32 %v3731, 1.442695
    %v3751 = vpow.pop %v3750
    %v3752 = vmul.f32 %v3732, 1.442695
    %v3753 = vpow.pop %v3752
    %v3754 = vmul.f32 %v3733, 1.442695
    %v3755 = vpow.pop %v3754
    %v3756 = vmul.f32 %v3734, 1.442695
    %v3757 = vpow.pop %v3756
    %v3758 = vmul.f32 %v3735, 1.442695
    %v3759 = vpow.pop %v3758
    %v3760 = vmul.f32 %v3736, 1.442695
    %v3761 = vpow.pop %v3760
    %v3762 = vmul.f32 %v3737, 1.442695
    %v3763 = vpow.pop %v3762
    %v3764 = vmul.f32 %v3738, 1.442695
    %v3765 = vpow.pop %v3764
    %v3766 = vmul.f32 %v3739, 1.442695
    %v3767 = vpow.pop %v3766
    %v3768 = vmul.f32 %v3740, 1.442695
    %v3769 = vpow.pop %v3768
    %v3770 = vmul.f32 %v3741, 1.442695
    %v3771 = vpow.pop %v3770
    %v3772 = vmul.f32 %v3742, 1.442695
    %v3773 = vpow.pop %v3772
    %v3774 = vmul.f32 %v3743, 1.442695
    %v3775 = vpow.pop %v3774
    %v3776 = vsel %vm3712, %v3745, 0.0
    %v3777 = vsel %vm3713, %v3747, 0.0
    %v3778 = vsel %vm3714, %v3749, 0.0
    %v3779 = vsel %vm3715, %v3751, 0.0
    %v3780 = vsel %vm3716, %v3753, 0.0
    %v3781 = vsel %vm3717, %v3755, 0.0
    %v3782 = vsel %vm3718, %v3757, 0.0
    %v3783 = vsel %vm3719, %v3759, 0.0
    %v3784 = vsel %vm3720, %v3761, 0.0
    %v3785 = vsel %vm3721, %v3763, 0.0
    %v3786 = vsel %vm3722, %v3765, 0.0
    %v3787 = vsel %vm3723, %v3767, 0.0
    %v3788 = vsel %vm3724, %v3769, 0.0
    %v3789 = vsel %vm3725, %v3771, 0.0
    %v3790 = vsel %vm3726, %v3773, 0.0
    %v3791 = vsel %vm3727, %v3775, 0.0
    %3792 = vadd.xlane.f32.xlu0 %v3776
    %v3793 = vpop.xlane.xlu0 %3792
    %3794 = vadd.xlane.f32.xlu0 %v3777
    %v3795 = vpop.xlane.xlu0 %3794
    %3796 = vadd.xlane.f32.xlu0 %v3778
    %v3797 = vpop.xlane.xlu0 %3796
    %3798 = vadd.xlane.f32.xlu0 %v3779
    %v3799 = vpop.xlane.xlu0 %3798
    %3800 = vadd.xlane.f32.xlu0 %v3780
    %v3801 = vpop.xlane.xlu0 %3800
    %3802 = vadd.xlane.f32.xlu0 %v3781
    %v3803 = vpop.xlane.xlu0 %3802
    %3804 = vadd.xlane.f32.xlu0 %v3782
    %v3805 = vpop.xlane.xlu0 %3804
    %3806 = vadd.xlane.f32.xlu0 %v3783
    %v3807 = vpop.xlane.xlu0 %3806
    %3808 = vadd.xlane.f32.xlu0 %v3784
    %v3809 = vpop.xlane.xlu0 %3808
    %3810 = vadd.xlane.f32.xlu0 %v3785
    %v3811 = vpop.xlane.xlu0 %3810
    %3812 = vadd.xlane.f32.xlu0 %v3786
    %v3813 = vpop.xlane.xlu0 %3812
    %3814 = vadd.xlane.f32.xlu0 %v3787
    %v3815 = vpop.xlane.xlu0 %3814
    %3816 = vadd.xlane.f32.xlu0 %v3788
    %v3817 = vpop.xlane.xlu0 %3816
    %3818 = vadd.xlane.f32.xlu0 %v3789
    %v3819 = vpop.xlane.xlu0 %3818
    %3820 = vadd.xlane.f32.xlu0 %v3790
    %v3821 = vpop.xlane.xlu0 %3820
    %3822 = vadd.xlane.f32.xlu0 %v3791
    %v3823 = vpop.xlane.xlu0 %3822
    %v3824 = vlog2.pop %v3793
    %v3825 = vmul.f32 %v3824, 0.6931472
    %v3826 = vlog2.pop %v3795
    %v3827 = vmul.f32 %v3826, 0.6931472
    %v3828 = vlog2.pop %v3797
    %v3829 = vmul.f32 %v3828, 0.6931472
    %v3830 = vlog2.pop %v3799
    %v3831 = vmul.f32 %v3830, 0.6931472
    %v3832 = vlog2.pop %v3801
    %v3833 = vmul.f32 %v3832, 0.6931472
    %v3834 = vlog2.pop %v3803
    %v3835 = vmul.f32 %v3834, 0.6931472
    %v3836 = vlog2.pop %v3805
    %v3837 = vmul.f32 %v3836, 0.6931472
    %v3838 = vlog2.pop %v3807
    %v3839 = vmul.f32 %v3838, 0.6931472
    %v3840 = vlog2.pop %v3809
    %v3841 = vmul.f32 %v3840, 0.6931472
    %v3842 = vlog2.pop %v3811
    %v3843 = vmul.f32 %v3842, 0.6931472
    %v3844 = vlog2.pop %v3813
    %v3845 = vmul.f32 %v3844, 0.6931472
    %v3846 = vlog2.pop %v3815
    %v3847 = vmul.f32 %v3846, 0.6931472
    %v3848 = vlog2.pop %v3817
    %v3849 = vmul.f32 %v3848, 0.6931472
    %v3850 = vlog2.pop %v3819
    %v3851 = vmul.f32 %v3850, 0.6931472
    %v3852 = vlog2.pop %v3821
    %v3853 = vmul.f32 %v3852, 0.6931472
    %v3854 = vlog2.pop %v3823
    %v3855 = vmul.f32 %v3854, 0.6931472
    %v3856 = vadd.f32 %v3825, %v3681
    %v3857 = vadd.f32 %v3827, %v3683
    %v3858 = vadd.f32 %v3829, %v3685
    %v3859 = vadd.f32 %v3831, %v3687
    %v3860 = vadd.f32 %v3833, %v3689
    %v3861 = vadd.f32 %v3835, %v3691
    %v3862 = vadd.f32 %v3837, %v3693
    %v3863 = vadd.f32 %v3839, %v3695
    %v3864 = vadd.f32 %v3841, %v3697
    %v3865 = vadd.f32 %v3843, %v3699
    %v3866 = vadd.f32 %v3845, %v3701
    %v3867 = vadd.f32 %v3847, %v3703
    %v3868 = vadd.f32 %v3849, %v3705
    %v3869 = vadd.f32 %v3851, %v3707
    %v3870 = vadd.f32 %v3853, %v3709
    %v3871 = vadd.f32 %v3855, %v3711
    %v3872 = vsel %vm3663, %v3856, 0.0
    %v3873 = vsel %vm3663, %v3857, 0.0
    %v3874 = vsel %vm3663, %v3858, 0.0
    %v3875 = vsel %vm3663, %v3859, 0.0
    %v3876 = vsel %vm3663, %v3860, 0.0
    %v3877 = vsel %vm3663, %v3861, 0.0
    %v3878 = vsel %vm3663, %v3862, 0.0
    %v3879 = vsel %vm3663, %v3863, 0.0
    %v3880 = vsel %vm3663, %v3864, 0.0
    %v3881 = vsel %vm3663, %v3865, 0.0
    %v3882 = vsel %vm3663, %v3866, 0.0
    %v3883 = vsel %vm3663, %v3867, 0.0
    %v3884 = vsel %vm3663, %v3868, 0.0
    %v3885 = vsel %vm3663, %v3869, 0.0
    %v3886 = vsel %vm3663, %v3870, 0.0
    %v3887 = vsel %vm3663, %v3871, 0.0
    %vm3888 = vcmp.ge.s32.totalorder %v3660, 3
    %vm3889 = vcmp.lt.s32.totalorder %v3660, 8
    %vm3890 = vmand %vm3888, %vm3889
    %v3891 = vsel %vm3890, %v3643, -1e+30
    %v3892 = vsel %vm3890, %v3644, -1e+30
    %v3893 = vsel %vm3890, %v3645, -1e+30
    %v3894 = vsel %vm3890, %v3646, -1e+30
    %v3895 = vsel %vm3890, %v3647, -1e+30
    %v3896 = vsel %vm3890, %v3648, -1e+30
    %v3897 = vsel %vm3890, %v3649, -1e+30
    %v3898 = vsel %vm3890, %v3650, -1e+30
    %v3899 = vsel %vm3890, %v3651, -1e+30
    %v3900 = vsel %vm3890, %v3652, -1e+30
    %v3901 = vsel %vm3890, %v3653, -1e+30
    %v3902 = vsel %vm3890, %v3654, -1e+30
    %v3903 = vsel %vm3890, %v3655, -1e+30
    %v3904 = vsel %vm3890, %v3656, -1e+30
    %v3905 = vsel %vm3890, %v3657, -1e+30
    %v3906 = vsel %vm3890, %v3658, -1e+30
    %3907 = vmax.xlane.f32.xlu0 %v3891
    %v3908 = vpop.xlane.xlu0 %3907
    %3909 = vmax.xlane.f32.xlu0 %v3892
    %v3910 = vpop.xlane.xlu0 %3909
    %3911 = vmax.xlane.f32.xlu0 %v3893
    %v3912 = vpop.xlane.xlu0 %3911
    %3913 = vmax.xlane.f32.xlu0 %v3894
    %v3914 = vpop.xlane.xlu0 %3913
    %3915 = vmax.xlane.f32.xlu0 %v3895
    %v3916 = vpop.xlane.xlu0 %3915
    %3917 = vmax.xlane.f32.xlu0 %v3896
    %v3918 = vpop.xlane.xlu0 %3917
    %3919 = vmax.xlane.f32.xlu0 %v3897
    %v3920 = vpop.xlane.xlu0 %3919
    %3921 = vmax.xlane.f32.xlu0 %v3898
    %v3922 = vpop.xlane.xlu0 %3921
    %3923 = vmax.xlane.f32.xlu0 %v3899
    %v3924 = vpop.xlane.xlu0 %3923
    %3925 = vmax.xlane.f32.xlu0 %v3900
    %v3926 = vpop.xlane.xlu0 %3925
    %3927 = vmax.xlane.f32.xlu0 %v3901
    %v3928 = vpop.xlane.xlu0 %3927
    %3929 = vmax.xlane.f32.xlu0 %v3902
    %v3930 = vpop.xlane.xlu0 %3929
    %3931 = vmax.xlane.f32.xlu0 %v3903
    %v3932 = vpop.xlane.xlu0 %3931
    %3933 = vmax.xlane.f32.xlu0 %v3904
    %v3934 = vpop.xlane.xlu0 %3933
    %3935 = vmax.xlane.f32.xlu0 %v3905
    %v3936 = vpop.xlane.xlu0 %3935
    %3937 = vmax.xlane.f32.xlu0 %v3906
    %v3938 = vpop.xlane.xlu0 %3937
    %vm3939 = vmand %vm3890, %vm3627
    %vm3940 = vmand %vm3890, %vm3628
    %vm3941 = vmand %vm3890, %vm3629
    %vm3942 = vmand %vm3890, %vm3630
    %vm3943 = vmand %vm3890, %vm3631
    %vm3944 = vmand %vm3890, %vm3632
    %vm3945 = vmand %vm3890, %vm3633
    %vm3946 = vmand %vm3890, %vm3634
    %vm3947 = vmand %vm3890, %vm3635
    %vm3948 = vmand %vm3890, %vm3636
    %vm3949 = vmand %vm3890, %vm3637
    %vm3950 = vmand %vm3890, %vm3638
    %vm3951 = vmand %vm3890, %vm3639
    %vm3952 = vmand %vm3890, %vm3640
    %vm3953 = vmand %vm3890, %vm3641
    %vm3954 = vmand %vm3890, %vm3642
    %v3955 = vsub.f32 %v3643, %v3908
    %v3956 = vsub.f32 %v3644, %v3910
    %v3957 = vsub.f32 %v3645, %v3912
    %v3958 = vsub.f32 %v3646, %v3914
    %v3959 = vsub.f32 %v3647, %v3916
    %v3960 = vsub.f32 %v3648, %v3918
    %v3961 = vsub.f32 %v3649, %v3920
    %v3962 = vsub.f32 %v3650, %v3922
    %v3963 = vsub.f32 %v3651, %v3924
    %v3964 = vsub.f32 %v3652, %v3926
    %v3965 = vsub.f32 %v3653, %v3928
    %v3966 = vsub.f32 %v3654, %v3930
    %v3967 = vsub.f32 %v3655, %v3932
    %v3968 = vsub.f32 %v3656, %v3934
    %v3969 = vsub.f32 %v3657, %v3936
    %v3970 = vsub.f32 %v3658, %v3938
    %v3971 = vmul.f32 %v3955, 1.442695
    %v3972 = vpow.pop %v3971
    %v3973 = vmul.f32 %v3956, 1.442695
    %v3974 = vpow.pop %v3973
    %v3975 = vmul.f32 %v3957, 1.442695
    %v3976 = vpow.pop %v3975
    %v3977 = vmul.f32 %v3958, 1.442695
    %v3978 = vpow.pop %v3977
    %v3979 = vmul.f32 %v3959, 1.442695
    %v3980 = vpow.pop %v3979
    %v3981 = vmul.f32 %v3960, 1.442695
    %v3982 = vpow.pop %v3981
    %v3983 = vmul.f32 %v3961, 1.442695
    %v3984 = vpow.pop %v3983
    %v3985 = vmul.f32 %v3962, 1.442695
    %v3986 = vpow.pop %v3985
    %v3987 = vmul.f32 %v3963, 1.442695
    %v3988 = vpow.pop %v3987
    %v3989 = vmul.f32 %v3964, 1.442695
    %v3990 = vpow.pop %v3989
    %v3991 = vmul.f32 %v3965, 1.442695
    %v3992 = vpow.pop %v3991
    %v3993 = vmul.f32 %v3966, 1.442695
    %v3994 = vpow.pop %v3993
    %v3995 = vmul.f32 %v3967, 1.442695
    %v3996 = vpow.pop %v3995
    %v3997 = vmul.f32 %v3968, 1.442695
    %v3998 = vpow.pop %v3997
    %v3999 = vmul.f32 %v3969, 1.442695
    %v4000 = vpow.pop %v3999
    %v4001 = vmul.f32 %v3970, 1.442695
    %v4002 = vpow.pop %v4001
    %v4003 = vsel %vm3939, %v3972, 0.0
    %v4004 = vsel %vm3940, %v3974, 0.0
    %v4005 = vsel %vm3941, %v3976, 0.0
    %v4006 = vsel %vm3942, %v3978, 0.0
    %v4007 = vsel %vm3943, %v3980, 0.0
    %v4008 = vsel %vm3944, %v3982, 0.0
    %v4009 = vsel %vm3945, %v3984, 0.0
    %v4010 = vsel %vm3946, %v3986, 0.0
    %v4011 = vsel %vm3947, %v3988, 0.0
    %v4012 = vsel %vm3948, %v3990, 0.0
    %v4013 = vsel %vm3949, %v3992, 0.0
    %v4014 = vsel %vm3950, %v3994, 0.0
    %v4015 = vsel %vm3951, %v3996, 0.0
    %v4016 = vsel %vm3952, %v3998, 0.0
    %v4017 = vsel %vm3953, %v4000, 0.0
    %v4018 = vsel %vm3954, %v4002, 0.0
    %4019 = vadd.xlane.f32.xlu0 %v4003
    %v4020 = vpop.xlane.xlu0 %4019
    %4021 = vadd.xlane.f32.xlu0 %v4004
    %v4022 = vpop.xlane.xlu0 %4021
    %4023 = vadd.xlane.f32.xlu0 %v4005
    %v4024 = vpop.xlane.xlu0 %4023
    %4025 = vadd.xlane.f32.xlu0 %v4006
    %v4026 = vpop.xlane.xlu0 %4025
    %4027 = vadd.xlane.f32.xlu0 %v4007
    %v4028 = vpop.xlane.xlu0 %4027
    %4029 = vadd.xlane.f32.xlu0 %v4008
    %v4030 = vpop.xlane.xlu0 %4029
    %4031 = vadd.xlane.f32.xlu0 %v4009
    %v4032 = vpop.xlane.xlu0 %4031
    %4033 = vadd.xlane.f32.xlu0 %v4010
    %v4034 = vpop.xlane.xlu0 %4033
    %4035 = vadd.xlane.f32.xlu0 %v4011
    %v4036 = vpop.xlane.xlu0 %4035
    %4037 = vadd.xlane.f32.xlu0 %v4012
    %v4038 = vpop.xlane.xlu0 %4037
    %4039 = vadd.xlane.f32.xlu0 %v4013
    %v4040 = vpop.xlane.xlu0 %4039
    %4041 = vadd.xlane.f32.xlu0 %v4014
    %v4042 = vpop.xlane.xlu0 %4041
    %4043 = vadd.xlane.f32.xlu0 %v4015
    %v4044 = vpop.xlane.xlu0 %4043
    %4045 = vadd.xlane.f32.xlu0 %v4016
    %v4046 = vpop.xlane.xlu0 %4045
    %4047 = vadd.xlane.f32.xlu0 %v4017
    %v4048 = vpop.xlane.xlu0 %4047
    %4049 = vadd.xlane.f32.xlu0 %v4018
    %v4050 = vpop.xlane.xlu0 %4049
    %v4051 = vlog2.pop %v4020
    %v4052 = vmul.f32 %v4051, 0.6931472
    %v4053 = vlog2.pop %v4022
    %v4054 = vmul.f32 %v4053, 0.6931472
    %v4055 = vlog2.pop %v4024
    %v4056 = vmul.f32 %v4055, 0.6931472
    %v4057 = vlog2.pop %v4026
    %v4058 = vmul.f32 %v4057, 0.6931472
    %v4059 = vlog2.pop %v4028
    %v4060 = vmul.f32 %v4059, 0.6931472
    %v4061 = vlog2.pop %v4030
    %v4062 = vmul.f32 %v4061, 0.6931472
    %v4063 = vlog2.pop %v4032
    %v4064 = vmul.f32 %v4063, 0.6931472
    %v4065 = vlog2.pop %v4034
    %v4066 = vmul.f32 %v4065, 0.6931472
    %v4067 = vlog2.pop %v4036
    %v4068 = vmul.f32 %v4067, 0.6931472
    %v4069 = vlog2.pop %v4038
    %v4070 = vmul.f32 %v4069, 0.6931472
    %v4071 = vlog2.pop %v4040
    %v4072 = vmul.f32 %v4071, 0.6931472
    %v4073 = vlog2.pop %v4042
    %v4074 = vmul.f32 %v4073, 0.6931472
    %v4075 = vlog2.pop %v4044
    %v4076 = vmul.f32 %v4075, 0.6931472
    %v4077 = vlog2.pop %v4046
    %v4078 = vmul.f32 %v4077, 0.6931472
    %v4079 = vlog2.pop %v4048
    %v4080 = vmul.f32 %v4079, 0.6931472
    %v4081 = vlog2.pop %v4050
    %v4082 = vmul.f32 %v4081, 0.6931472
    %v4083 = vadd.f32 %v4052, %v3908
    %v4084 = vadd.f32 %v4054, %v3910
    %v4085 = vadd.f32 %v4056, %v3912
    %v4086 = vadd.f32 %v4058, %v3914
    %v4087 = vadd.f32 %v4060, %v3916
    %v4088 = vadd.f32 %v4062, %v3918
    %v4089 = vadd.f32 %v4064, %v3920
    %v4090 = vadd.f32 %v4066, %v3922
    %v4091 = vadd.f32 %v4068, %v3924
    %v4092 = vadd.f32 %v4070, %v3926
    %v4093 = vadd.f32 %v4072, %v3928
    %v4094 = vadd.f32 %v4074, %v3930
    %v4095 = vadd.f32 %v4076, %v3932
    %v4096 = vadd.f32 %v4078, %v3934
    %v4097 = vadd.f32 %v4080, %v3936
    %v4098 = vadd.f32 %v4082, %v3938
    %v4099 = vsel %vm3890, %v4083, %v3872
    %v4100 = vsel %vm3890, %v4084, %v3873
    %v4101 = vsel %vm3890, %v4085, %v3874
    %v4102 = vsel %vm3890, %v4086, %v3875
    %v4103 = vsel %vm3890, %v4087, %v3876
    %v4104 = vsel %vm3890, %v4088, %v3877
    %v4105 = vsel %vm3890, %v4089, %v3878
    %v4106 = vsel %vm3890, %v4090, %v3879
    %v4107 = vsel %vm3890, %v4091, %v3880
    %v4108 = vsel %vm3890, %v4092, %v3881
    %v4109 = vsel %vm3890, %v4093, %v3882
    %v4110 = vsel %vm3890, %v4094, %v3883
    %v4111 = vsel %vm3890, %v4095, %v3884
    %v4112 = vsel %vm3890, %v4096, %v3885
    %v4113 = vsel %vm3890, %v4097, %v3886
    %v4114 = vsel %vm3890, %v4098, %v3887
    %vm4115 = vcmp.ge.s32.totalorder %v3660, 8
    %vm4116 = vcmp.lt.s32.totalorder %v3660, 14
    %vm4117 = vmand %vm4115, %vm4116
    %v4118 = vsel %vm4117, %v3643, -1e+30
    %v4119 = vsel %vm4117, %v3644, -1e+30
    %v4120 = vsel %vm4117, %v3645, -1e+30
    %v4121 = vsel %vm4117, %v3646, -1e+30
    %v4122 = vsel %vm4117, %v3647, -1e+30
    %v4123 = vsel %vm4117, %v3648, -1e+30
    %v4124 = vsel %vm4117, %v3649, -1e+30
    %v4125 = vsel %vm4117, %v3650, -1e+30
    %v4126 = vsel %vm4117, %v3651, -1e+30
    %v4127 = vsel %vm4117, %v3652, -1e+30
    %v4128 = vsel %vm4117, %v3653, -1e+30
    %v4129 = vsel %vm4117, %v3654, -1e+30
    %v4130 = vsel %vm4117, %v3655, -1e+30
    %v4131 = vsel %vm4117, %v3656, -1e+30
    %v4132 = vsel %vm4117, %v3657, -1e+30
    %v4133 = vsel %vm4117, %v3658, -1e+30
    %4134 = vmax.xlane.f32.xlu0 %v4118
    %v4135 = vpop.xlane.xlu0 %4134
    %4136 = vmax.xlane.f32.xlu0 %v4119
    %v4137 = vpop.xlane.xlu0 %4136
    %4138 = vmax.xlane.f32.xlu0 %v4120
    %v4139 = vpop.xlane.xlu0 %4138
    %4140 = vmax.xlane.f32.xlu0 %v4121
    %v4141 = vpop.xlane.xlu0 %4140
    %4142 = vmax.xlane.f32.xlu0 %v4122
    %v4143 = vpop.xlane.xlu0 %4142
    %4144 = vmax.xlane.f32.xlu0 %v4123
    %v4145 = vpop.xlane.xlu0 %4144
    %4146 = vmax.xlane.f32.xlu0 %v4124
    %v4147 = vpop.xlane.xlu0 %4146
    %4148 = vmax.xlane.f32.xlu0 %v4125
    %v4149 = vpop.xlane.xlu0 %4148
    %4150 = vmax.xlane.f32.xlu0 %v4126
    %v4151 = vpop.xlane.xlu0 %4150
    %4152 = vmax.xlane.f32.xlu0 %v4127
    %v4153 = vpop.xlane.xlu0 %4152
    %4154 = vmax.xlane.f32.xlu0 %v4128
    %v4155 = vpop.xlane.xlu0 %4154
    %4156 = vmax.xlane.f32.xlu0 %v4129
    %v4157 = vpop.xlane.xlu0 %4156
    %4158 = vmax.xlane.f32.xlu0 %v4130
    %v4159 = vpop.xlane.xlu0 %4158
    %4160 = vmax.xlane.f32.xlu0 %v4131
    %v4161 = vpop.xlane.xlu0 %4160
    %4162 = vmax.xlane.f32.xlu0 %v4132
    %v4163 = vpop.xlane.xlu0 %4162
    %4164 = vmax.xlane.f32.xlu0 %v4133
    %v4165 = vpop.xlane.xlu0 %4164
    %vm4166 = vmand %vm4117, %vm3627
    %vm4167 = vmand %vm4117, %vm3628
    %vm4168 = vmand %vm4117, %vm3629
    %vm4169 = vmand %vm4117, %vm3630
    %vm4170 = vmand %vm4117, %vm3631
    %vm4171 = vmand %vm4117, %vm3632
    %vm4172 = vmand %vm4117, %vm3633
    %vm4173 = vmand %vm4117, %vm3634
    %vm4174 = vmand %vm4117, %vm3635
    %vm4175 = vmand %vm4117, %vm3636
    %vm4176 = vmand %vm4117, %vm3637
    %vm4177 = vmand %vm4117, %vm3638
    %vm4178 = vmand %vm4117, %vm3639
    %vm4179 = vmand %vm4117, %vm3640
    %vm4180 = vmand %vm4117, %vm3641
    %vm4181 = vmand %vm4117, %vm3642
    %v4182 = vsub.f32 %v3643, %v4135
    %v4183 = vsub.f32 %v3644, %v4137
    %v4184 = vsub.f32 %v3645, %v4139
    %v4185 = vsub.f32 %v3646, %v4141
    %v4186 = vsub.f32 %v3647, %v4143
    %v4187 = vsub.f32 %v3648, %v4145
    %v4188 = vsub.f32 %v3649, %v4147
    %v4189 = vsub.f32 %v3650, %v4149
    %v4190 = vsub.f32 %v3651, %v4151
    %v4191 = vsub.f32 %v3652, %v4153
    %v4192 = vsub.f32 %v3653, %v4155
    %v4193 = vsub.f32 %v3654, %v4157
    %v4194 = vsub.f32 %v3655, %v4159
    %v4195 = vsub.f32 %v3656, %v4161
    %v4196 = vsub.f32 %v3657, %v4163
    %v4197 = vsub.f32 %v3658, %v4165
    %v4198 = vmul.f32 %v4182, 1.442695
    %v4199 = vpow.pop %v4198
    %v4200 = vmul.f32 %v4183, 1.442695
    %v4201 = vpow.pop %v4200
    %v4202 = vmul.f32 %v4184, 1.442695
    %v4203 = vpow.pop %v4202
    %v4204 = vmul.f32 %v4185, 1.442695
    %v4205 = vpow.pop %v4204
    %v4206 = vmul.f32 %v4186, 1.442695
    %v4207 = vpow.pop %v4206
    %v4208 = vmul.f32 %v4187, 1.442695
    %v4209 = vpow.pop %v4208
    %v4210 = vmul.f32 %v4188, 1.442695
    %v4211 = vpow.pop %v4210
    %v4212 = vmul.f32 %v4189, 1.442695
    %v4213 = vpow.pop %v4212
    %v4214 = vmul.f32 %v4190, 1.442695
    %v4215 = vpow.pop %v4214
    %v4216 = vmul.f32 %v4191, 1.442695
    %v4217 = vpow.pop %v4216
    %v4218 = vmul.f32 %v4192, 1.442695
    %v4219 = vpow.pop %v4218
    %v4220 = vmul.f32 %v4193, 1.442695
    %v4221 = vpow.pop %v4220
    %v4222 = vmul.f32 %v4194, 1.442695
    %v4223 = vpow.pop %v4222
    %v4224 = vmul.f32 %v4195, 1.442695
    %v4225 = vpow.pop %v4224
    %v4226 = vmul.f32 %v4196, 1.442695
    %v4227 = vpow.pop %v4226
    %v4228 = vmul.f32 %v4197, 1.442695
    %v4229 = vpow.pop %v4228
    %v4230 = vsel %vm4166, %v4199, 0.0
    %v4231 = vsel %vm4167, %v4201, 0.0
    %v4232 = vsel %vm4168, %v4203, 0.0
    %v4233 = vsel %vm4169, %v4205, 0.0
    %v4234 = vsel %vm4170, %v4207, 0.0
    %v4235 = vsel %vm4171, %v4209, 0.0
    %v4236 = vsel %vm4172, %v4211, 0.0
    %v4237 = vsel %vm4173, %v4213, 0.0
    %v4238 = vsel %vm4174, %v4215, 0.0
    %v4239 = vsel %vm4175, %v4217, 0.0
    %v4240 = vsel %vm4176, %v4219, 0.0
    %v4241 = vsel %vm4177, %v4221, 0.0
    %v4242 = vsel %vm4178, %v4223, 0.0
    %v4243 = vsel %vm4179, %v4225, 0.0
    %v4244 = vsel %vm4180, %v4227, 0.0
    %v4245 = vsel %vm4181, %v4229, 0.0
    %4246 = vadd.xlane.f32.xlu0 %v4230
    %v4247 = vpop.xlane.xlu0 %4246
    %4248 = vadd.xlane.f32.xlu0 %v4231
    %v4249 = vpop.xlane.xlu0 %4248
    %4250 = vadd.xlane.f32.xlu0 %v4232
    %v4251 = vpop.xlane.xlu0 %4250
    %4252 = vadd.xlane.f32.xlu0 %v4233
    %v4253 = vpop.xlane.xlu0 %4252
    %4254 = vadd.xlane.f32.xlu0 %v4234
    %v4255 = vpop.xlane.xlu0 %4254
    %4256 = vadd.xlane.f32.xlu0 %v4235
    %v4257 = vpop.xlane.xlu0 %4256
    %4258 = vadd.xlane.f32.xlu0 %v4236
    %v4259 = vpop.xlane.xlu0 %4258
    %4260 = vadd.xlane.f32.xlu0 %v4237
    %v4261 = vpop.xlane.xlu0 %4260
    %4262 = vadd.xlane.f32.xlu0 %v4238
    %v4263 = vpop.xlane.xlu0 %4262
    %4264 = vadd.xlane.f32.xlu0 %v4239
    %v4265 = vpop.xlane.xlu0 %4264
    %4266 = vadd.xlane.f32.xlu0 %v4240
    %v4267 = vpop.xlane.xlu0 %4266
    %4268 = vadd.xlane.f32.xlu0 %v4241
    %v4269 = vpop.xlane.xlu0 %4268
    %4270 = vadd.xlane.f32.xlu0 %v4242
    %v4271 = vpop.xlane.xlu0 %4270
    %4272 = vadd.xlane.f32.xlu0 %v4243
    %v4273 = vpop.xlane.xlu0 %4272
    %4274 = vadd.xlane.f32.xlu0 %v4244
    %v4275 = vpop.xlane.xlu0 %4274
    %4276 = vadd.xlane.f32.xlu0 %v4245
    %v4277 = vpop.xlane.xlu0 %4276
    %v4278 = vlog2.pop %v4247
    %v4279 = vmul.f32 %v4278, 0.6931472
    %v4280 = vlog2.pop %v4249
    %v4281 = vmul.f32 %v4280, 0.6931472
    %v4282 = vlog2.pop %v4251
    %v4283 = vmul.f32 %v4282, 0.6931472
    %v4284 = vlog2.pop %v4253
    %v4285 = vmul.f32 %v4284, 0.6931472
    %v4286 = vlog2.pop %v4255
    %v4287 = vmul.f32 %v4286, 0.6931472
    %v4288 = vlog2.pop %v4257
    %v4289 = vmul.f32 %v4288, 0.6931472
    %v4290 = vlog2.pop %v4259
    %v4291 = vmul.f32 %v4290, 0.6931472
    %v4292 = vlog2.pop %v4261
    %v4293 = vmul.f32 %v4292, 0.6931472
    %v4294 = vlog2.pop %v4263
    %v4295 = vmul.f32 %v4294, 0.6931472
    %v4296 = vlog2.pop %v4265
    %v4297 = vmul.f32 %v4296, 0.6931472
    %v4298 = vlog2.pop %v4267
    %v4299 = vmul.f32 %v4298, 0.6931472
    %v4300 = vlog2.pop %v4269
    %v4301 = vmul.f32 %v4300, 0.6931472
    %v4302 = vlog2.pop %v4271
    %v4303 = vmul.f32 %v4302, 0.6931472
    %v4304 = vlog2.pop %v4273
    %v4305 = vmul.f32 %v4304, 0.6931472
    %v4306 = vlog2.pop %v4275
    %v4307 = vmul.f32 %v4306, 0.6931472
    %v4308 = vlog2.pop %v4277
    %v4309 = vmul.f32 %v4308, 0.6931472
    %v4310 = vadd.f32 %v4279, %v4135
    %v4311 = vadd.f32 %v4281, %v4137
    %v4312 = vadd.f32 %v4283, %v4139
    %v4313 = vadd.f32 %v4285, %v4141
    %v4314 = vadd.f32 %v4287, %v4143
    %v4315 = vadd.f32 %v4289, %v4145
    %v4316 = vadd.f32 %v4291, %v4147
    %v4317 = vadd.f32 %v4293, %v4149
    %v4318 = vadd.f32 %v4295, %v4151
    %v4319 = vadd.f32 %v4297, %v4153
    %v4320 = vadd.f32 %v4299, %v4155
    %v4321 = vadd.f32 %v4301, %v4157
    %v4322 = vadd.f32 %v4303, %v4159
    %v4323 = vadd.f32 %v4305, %v4161
    %v4324 = vadd.f32 %v4307, %v4163
    %v4325 = vadd.f32 %v4309, %v4165
    %v4326 = vsel %vm4117, %v4310, %v4099
    %v4327 = vsel %vm4117, %v4311, %v4100
    %v4328 = vsel %vm4117, %v4312, %v4101
    %v4329 = vsel %vm4117, %v4313, %v4102
    %v4330 = vsel %vm4117, %v4314, %v4103
    %v4331 = vsel %vm4117, %v4315, %v4104
    %v4332 = vsel %vm4117, %v4316, %v4105
    %v4333 = vsel %vm4117, %v4317, %v4106
    %v4334 = vsel %vm4117, %v4318, %v4107
    %v4335 = vsel %vm4117, %v4319, %v4108
    %v4336 = vsel %vm4117, %v4320, %v4109
    %v4337 = vsel %vm4117, %v4321, %v4110
    %v4338 = vsel %vm4117, %v4322, %v4111
    %v4339 = vsel %vm4117, %v4323, %v4112
    %v4340 = vsel %vm4117, %v4324, %v4113
    %v4341 = vsel %vm4117, %v4325, %v4114
    %vm4342 = vcmp.ge.s32.totalorder %v3660, 14
    %vm4343 = vcmp.lt.s32.totalorder %v3660, 18
    %vm4344 = vmand %vm4342, %vm4343
    %v4345 = vsel %vm4344, %v3643, -1e+30
    %v4346 = vsel %vm4344, %v3644, -1e+30
    %v4347 = vsel %vm4344, %v3645, -1e+30
    %v4348 = vsel %vm4344, %v3646, -1e+30
    %v4349 = vsel %vm4344, %v3647, -1e+30
    %v4350 = vsel %vm4344, %v3648, -1e+30
    %v4351 = vsel %vm4344, %v3649, -1e+30
    %v4352 = vsel %vm4344, %v3650, -1e+30
    %v4353 = vsel %vm4344, %v3651, -1e+30
    %v4354 = vsel %vm4344, %v3652, -1e+30
    %v4355 = vsel %vm4344, %v3653, -1e+30
    %v4356 = vsel %vm4344, %v3654, -1e+30
    %v4357 = vsel %vm4344, %v3655, -1e+30
    %v4358 = vsel %vm4344, %v3656, -1e+30
    %v4359 = vsel %vm4344, %v3657, -1e+30
    %v4360 = vsel %vm4344, %v3658, -1e+30
    %4361 = vmax.xlane.f32.xlu0 %v4345
    %v4362 = vpop.xlane.xlu0 %4361
    %4363 = vmax.xlane.f32.xlu0 %v4346
    %v4364 = vpop.xlane.xlu0 %4363
    %4365 = vmax.xlane.f32.xlu0 %v4347
    %v4366 = vpop.xlane.xlu0 %4365
    %4367 = vmax.xlane.f32.xlu0 %v4348
    %v4368 = vpop.xlane.xlu0 %4367
    %4369 = vmax.xlane.f32.xlu0 %v4349
    %v4370 = vpop.xlane.xlu0 %4369
    %4371 = vmax.xlane.f32.xlu0 %v4350
    %v4372 = vpop.xlane.xlu0 %4371
    %4373 = vmax.xlane.f32.xlu0 %v4351
    %v4374 = vpop.xlane.xlu0 %4373
    %4375 = vmax.xlane.f32.xlu0 %v4352
    %v4376 = vpop.xlane.xlu0 %4375
    %4377 = vmax.xlane.f32.xlu0 %v4353
    %v4378 = vpop.xlane.xlu0 %4377
    %4379 = vmax.xlane.f32.xlu0 %v4354
    %v4380 = vpop.xlane.xlu0 %4379
    %4381 = vmax.xlane.f32.xlu0 %v4355
    %v4382 = vpop.xlane.xlu0 %4381
    %4383 = vmax.xlane.f32.xlu0 %v4356
    %v4384 = vpop.xlane.xlu0 %4383
    %4385 = vmax.xlane.f32.xlu0 %v4357
    %v4386 = vpop.xlane.xlu0 %4385
    %4387 = vmax.xlane.f32.xlu0 %v4358
    %v4388 = vpop.xlane.xlu0 %4387
    %4389 = vmax.xlane.f32.xlu0 %v4359
    %v4390 = vpop.xlane.xlu0 %4389
    %4391 = vmax.xlane.f32.xlu0 %v4360
    %v4392 = vpop.xlane.xlu0 %4391
    %vm4393 = vmand %vm4344, %vm3627
    %vm4394 = vmand %vm4344, %vm3628
    %vm4395 = vmand %vm4344, %vm3629
    %vm4396 = vmand %vm4344, %vm3630
    %vm4397 = vmand %vm4344, %vm3631
    %vm4398 = vmand %vm4344, %vm3632
    %vm4399 = vmand %vm4344, %vm3633
    %vm4400 = vmand %vm4344, %vm3634
    %vm4401 = vmand %vm4344, %vm3635
    %vm4402 = vmand %vm4344, %vm3636
    %vm4403 = vmand %vm4344, %vm3637
    %vm4404 = vmand %vm4344, %vm3638
    %vm4405 = vmand %vm4344, %vm3639
    %vm4406 = vmand %vm4344, %vm3640
    %vm4407 = vmand %vm4344, %vm3641
    %vm4408 = vmand %vm4344, %vm3642
    %v4409 = vsub.f32 %v3643, %v4362
    %v4410 = vsub.f32 %v3644, %v4364
    %v4411 = vsub.f32 %v3645, %v4366
    %v4412 = vsub.f32 %v3646, %v4368
    %v4413 = vsub.f32 %v3647, %v4370
    %v4414 = vsub.f32 %v3648, %v4372
    %v4415 = vsub.f32 %v3649, %v4374
    %v4416 = vsub.f32 %v3650, %v4376
    %v4417 = vsub.f32 %v3651, %v4378
    %v4418 = vsub.f32 %v3652, %v4380
    %v4419 = vsub.f32 %v3653, %v4382
    %v4420 = vsub.f32 %v3654, %v4384
    %v4421 = vsub.f32 %v3655, %v4386
    %v4422 = vsub.f32 %v3656, %v4388
    %v4423 = vsub.f32 %v3657, %v4390
    %v4424 = vsub.f32 %v3658, %v4392
    %v4425 = vmul.f32 %v4409, 1.442695
    %v4426 = vpow.pop %v4425
    %v4427 = vmul.f32 %v4410, 1.442695
    %v4428 = vpow.pop %v4427
    %v4429 = vmul.f32 %v4411, 1.442695
    %v4430 = vpow.pop %v4429
    %v4431 = vmul.f32 %v4412, 1.442695
    %v4432 = vpow.pop %v4431
    %v4433 = vmul.f32 %v4413, 1.442695
    %v4434 = vpow.pop %v4433
    %v4435 = vmul.f32 %v4414, 1.442695
    %v4436 = vpow.pop %v4435
    %v4437 = vmul.f32 %v4415, 1.442695
    %v4438 = vpow.pop %v4437
    %v4439 = vmul.f32 %v4416, 1.442695
    %v4440 = vpow.pop %v4439
    %v4441 = vmul.f32 %v4417, 1.442695
    %v4442 = vpow.pop %v4441
    %v4443 = vmul.f32 %v4418, 1.442695
    %v4444 = vpow.pop %v4443
    %v4445 = vmul.f32 %v4419, 1.442695
    %v4446 = vpow.pop %v4445
    %v4447 = vmul.f32 %v4420, 1.442695
    %v4448 = vpow.pop %v4447
    %v4449 = vmul.f32 %v4421, 1.442695
    %v4450 = vpow.pop %v4449
    %v4451 = vmul.f32 %v4422, 1.442695
    %v4452 = vpow.pop %v4451
    %v4453 = vmul.f32 %v4423, 1.442695
    %v4454 = vpow.pop %v4453
    %v4455 = vmul.f32 %v4424, 1.442695
    %v4456 = vpow.pop %v4455
    %v4457 = vsel %vm4393, %v4426, 0.0
    %v4458 = vsel %vm4394, %v4428, 0.0
    %v4459 = vsel %vm4395, %v4430, 0.0
    %v4460 = vsel %vm4396, %v4432, 0.0
    %v4461 = vsel %vm4397, %v4434, 0.0
    %v4462 = vsel %vm4398, %v4436, 0.0
    %v4463 = vsel %vm4399, %v4438, 0.0
    %v4464 = vsel %vm4400, %v4440, 0.0
    %v4465 = vsel %vm4401, %v4442, 0.0
    %v4466 = vsel %vm4402, %v4444, 0.0
    %v4467 = vsel %vm4403, %v4446, 0.0
    %v4468 = vsel %vm4404, %v4448, 0.0
    %v4469 = vsel %vm4405, %v4450, 0.0
    %v4470 = vsel %vm4406, %v4452, 0.0
    %v4471 = vsel %vm4407, %v4454, 0.0
    %v4472 = vsel %vm4408, %v4456, 0.0
    %4473 = vadd.xlane.f32.xlu0 %v4457
    %v4474 = vpop.xlane.xlu0 %4473
    %4475 = vadd.xlane.f32.xlu0 %v4458
    %v4476 = vpop.xlane.xlu0 %4475
    %4477 = vadd.xlane.f32.xlu0 %v4459
    %v4478 = vpop.xlane.xlu0 %4477
    %4479 = vadd.xlane.f32.xlu0 %v4460
    %v4480 = vpop.xlane.xlu0 %4479
    %4481 = vadd.xlane.f32.xlu0 %v4461
    %v4482 = vpop.xlane.xlu0 %4481
    %4483 = vadd.xlane.f32.xlu0 %v4462
    %v4484 = vpop.xlane.xlu0 %4483
    %4485 = vadd.xlane.f32.xlu0 %v4463
    %v4486 = vpop.xlane.xlu0 %4485
    %4487 = vadd.xlane.f32.xlu0 %v4464
    %v4488 = vpop.xlane.xlu0 %4487
    %4489 = vadd.xlane.f32.xlu0 %v4465
    %v4490 = vpop.xlane.xlu0 %4489
    %4491 = vadd.xlane.f32.xlu0 %v4466
    %v4492 = vpop.xlane.xlu0 %4491
    %4493 = vadd.xlane.f32.xlu0 %v4467
    %v4494 = vpop.xlane.xlu0 %4493
    %4495 = vadd.xlane.f32.xlu0 %v4468
    %v4496 = vpop.xlane.xlu0 %4495
    %4497 = vadd.xlane.f32.xlu0 %v4469
    %v4498 = vpop.xlane.xlu0 %4497
    %4499 = vadd.xlane.f32.xlu0 %v4470
    %v4500 = vpop.xlane.xlu0 %4499
    %4501 = vadd.xlane.f32.xlu0 %v4471
    %v4502 = vpop.xlane.xlu0 %4501
    %4503 = vadd.xlane.f32.xlu0 %v4472
    %v4504 = vpop.xlane.xlu0 %4503
    %v4505 = vlog2.pop %v4474
    %v4506 = vmul.f32 %v4505, 0.6931472
    %v4507 = vlog2.pop %v4476
    %v4508 = vmul.f32 %v4507, 0.6931472
    %v4509 = vlog2.pop %v4478
    %v4510 = vmul.f32 %v4509, 0.6931472
    %v4511 = vlog2.pop %v4480
    %v4512 = vmul.f32 %v4511, 0.6931472
    %v4513 = vlog2.pop %v4482
    %v4514 = vmul.f32 %v4513, 0.6931472
    %v4515 = vlog2.pop %v4484
    %v4516 = vmul.f32 %v4515, 0.6931472
    %v4517 = vlog2.pop %v4486
    %v4518 = vmul.f32 %v4517, 0.6931472
    %v4519 = vlog2.pop %v4488
    %v4520 = vmul.f32 %v4519, 0.6931472
    %v4521 = vlog2.pop %v4490
    %v4522 = vmul.f32 %v4521, 0.6931472
    %v4523 = vlog2.pop %v4492
    %v4524 = vmul.f32 %v4523, 0.6931472
    %v4525 = vlog2.pop %v4494
    %v4526 = vmul.f32 %v4525, 0.6931472
    %v4527 = vlog2.pop %v4496
    %v4528 = vmul.f32 %v4527, 0.6931472
    %v4529 = vlog2.pop %v4498
    %v4530 = vmul.f32 %v4529, 0.6931472
    %v4531 = vlog2.pop %v4500
    %v4532 = vmul.f32 %v4531, 0.6931472
    %v4533 = vlog2.pop %v4502
    %v4534 = vmul.f32 %v4533, 0.6931472
    %v4535 = vlog2.pop %v4504
    %v4536 = vmul.f32 %v4535, 0.6931472
    %v4537 = vadd.f32 %v4506, %v4362
    %v4538 = vadd.f32 %v4508, %v4364
    %v4539 = vadd.f32 %v4510, %v4366
    %v4540 = vadd.f32 %v4512, %v4368
    %v4541 = vadd.f32 %v4514, %v4370
    %v4542 = vadd.f32 %v4516, %v4372
    %v4543 = vadd.f32 %v4518, %v4374
    %v4544 = vadd.f32 %v4520, %v4376
    %v4545 = vadd.f32 %v4522, %v4378
    %v4546 = vadd.f32 %v4524, %v4380
    %v4547 = vadd.f32 %v4526, %v4382
    %v4548 = vadd.f32 %v4528, %v4384
    %v4549 = vadd.f32 %v4530, %v4386
    %v4550 = vadd.f32 %v4532, %v4388
    %v4551 = vadd.f32 %v4534, %v4390
    %v4552 = vadd.f32 %v4536, %v4392
    %v4553 = vsel %vm4344, %v4537, %v4326
    %v4554 = vsel %vm4344, %v4538, %v4327
    %v4555 = vsel %vm4344, %v4539, %v4328
    %v4556 = vsel %vm4344, %v4540, %v4329
    %v4557 = vsel %vm4344, %v4541, %v4330
    %v4558 = vsel %vm4344, %v4542, %v4331
    %v4559 = vsel %vm4344, %v4543, %v4332
    %v4560 = vsel %vm4344, %v4544, %v4333
    %v4561 = vsel %vm4344, %v4545, %v4334
    %v4562 = vsel %vm4344, %v4546, %v4335
    %v4563 = vsel %vm4344, %v4547, %v4336
    %v4564 = vsel %vm4344, %v4548, %v4337
    %v4565 = vsel %vm4344, %v4549, %v4338
    %v4566 = vsel %vm4344, %v4550, %v4339
    %v4567 = vsel %vm4344, %v4551, %v4340
    %v4568 = vsel %vm4344, %v4552, %v4341
    %v4569 = vsub.f32 %v2896, %v4553
    %v4570 = vsub.f32 %v2897, %v4554
    %v4571 = vsub.f32 %v2898, %v4555
    %v4572 = vsub.f32 %v2899, %v4556
    %v4573 = vsub.f32 %v2900, %v4557
    %v4574 = vsub.f32 %v2901, %v4558
    %v4575 = vsub.f32 %v2902, %v4559
    %v4576 = vsub.f32 %v2903, %v4560
    %v4577 = vsub.f32 %v2904, %v4561
    %v4578 = vsub.f32 %v2905, %v4562
    %v4579 = vsub.f32 %v2906, %v4563
    %v4580 = vsub.f32 %v2907, %v4564
    %v4581 = vsub.f32 %v2908, %v4565
    %v4582 = vsub.f32 %v2909, %v4566
    %v4583 = vsub.f32 %v2910, %v4567
    %v4584 = vsub.f32 %v2911, %v4568
    %v4585 = vsel %vm3627, %v4569, 0.0
    %v4586 = vsel %vm3628, %v4570, 0.0
    %v4587 = vsel %vm3629, %v4571, 0.0
    %v4588 = vsel %vm3630, %v4572, 0.0
    %v4589 = vsel %vm3631, %v4573, 0.0
    %v4590 = vsel %vm3632, %v4574, 0.0
    %v4591 = vsel %vm3633, %v4575, 0.0
    %v4592 = vsel %vm3634, %v4576, 0.0
    %v4593 = vsel %vm3635, %v4577, 0.0
    %v4594 = vsel %vm3636, %v4578, 0.0
    %v4595 = vsel %vm3637, %v4579, 0.0
    %v4596 = vsel %vm3638, %v4580, 0.0
    %v4597 = vsel %vm3639, %v4581, 0.0
    %v4598 = vsel %vm3640, %v4582, 0.0
    %v4599 = vsel %vm3641, %v4583, 0.0
    %v4600 = vsel %vm3642, %v4584, 0.0
    %4601 = vst [vmem:[#allocation10] sm:$0xff] %v2896
    %4602 = vst [vmem:[#allocation10 + $0x28] sm:$0xff] %v2897
    %4603 = vst [vmem:[#allocation10 + $0x50] sm:$0xff] %v2898
    %4604 = vst [vmem:[#allocation10 + $0x78] sm:$0xff] %v2899
    %4605 = vst [vmem:[#allocation10 + $0xa0] sm:$0xff] %v2900
    %4606 = vst [vmem:[#allocation10 + $0xc8] sm:$0xff] %v2901
    %4607 = vst [vmem:[#allocation10 + $0xf0] sm:$0xff] %v2902
    %4608 = vst [vmem:[#allocation10 + $0x118] sm:$0xff] %v2903
    %4609 = vst [vmem:[#allocation10 + $0x140] sm:$0xff] %v2904
    %4610 = vst [vmem:[#allocation10 + $0x168] sm:$0xff] %v2905
    %4611 = vst [vmem:[#allocation10 + $0x190] sm:$0xff] %v2906
    %4612 = vst [vmem:[#allocation10 + $0x1b8] sm:$0xff] %v2907
    %4613 = vst [vmem:[#allocation10 + $0x1e0] sm:$0xff] %v2908
    %4614 = vst [vmem:[#allocation10 + $0x208] sm:$0xff] %v2909
    %4615 = vst [vmem:[#allocation10 + $0x230] sm:$0xff] %v2910
    %4616 = vst [vmem:[#allocation10 + $0x258] sm:$0xff] %v2911
    %4617 = vst [vmem:[#allocation10 + $0x8] sm:$0xff] %v4585
    %4618 = vst [vmem:[#allocation10 + $0x30] sm:$0xff] %v4586
    %4619 = vst [vmem:[#allocation10 + $0x58] sm:$0xff] %v4587
    %4620 = vst [vmem:[#allocation10 + $0x80] sm:$0xff] %v4588
    %4621 = vst [vmem:[#allocation10 + $0xa8] sm:$0xff] %v4589
    %4622 = vst [vmem:[#allocation10 + $0xd0] sm:$0xff] %v4590
    %4623 = vst [vmem:[#allocation10 + $0xf8] sm:$0xff] %v4591
    %4624 = vst [vmem:[#allocation10 + $0x120] sm:$0xff] %v4592
    %4625 = vst [vmem:[#allocation10 + $0x148] sm:$0xff] %v4593
    %4626 = vst [vmem:[#allocation10 + $0x170] sm:$0xff] %v4594
    %4627 = vst [vmem:[#allocation10 + $0x198] sm:$0xff] %v4595
    %4628 = vst [vmem:[#allocation10 + $0x1c0] sm:$0xff] %v4596
    %4629 = vst [vmem:[#allocation10 + $0x1e8] sm:$0xff] %v4597
    %4630 = vst [vmem:[#allocation10 + $0x210] sm:$0xff] %v4598
    %4631 = vst [vmem:[#allocation10 + $0x238] sm:$0xff] %v4599
    %4632 = vst [vmem:[#allocation10 + $0x260] sm:$0xff] %v4600
    %4633 = vst [vmem:[#allocation10 + $0x10] sm:$0xff] %v3595
    %4634 = vst [vmem:[#allocation10 + $0x38] sm:$0xff] %v3596
    %4635 = vst [vmem:[#allocation10 + $0x60] sm:$0xff] %v3597
    %4636 = vst [vmem:[#allocation10 + $0x88] sm:$0xff] %v3598
    %4637 = vst [vmem:[#allocation10 + $0xb0] sm:$0xff] %v3599
    %4638 = vst [vmem:[#allocation10 + $0xd8] sm:$0xff] %v3600
    %4639 = vst [vmem:[#allocation10 + $0x100] sm:$0xff] %v3601
    %4640 = vst [vmem:[#allocation10 + $0x128] sm:$0xff] %v3602
    %4641 = vst [vmem:[#allocation10 + $0x150] sm:$0xff] %v3603
    %4642 = vst [vmem:[#allocation10 + $0x178] sm:$0xff] %v3604
    %4643 = vst [vmem:[#allocation10 + $0x1a0] sm:$0xff] %v3605
    %4644 = vst [vmem:[#allocation10 + $0x1c8] sm:$0xff] %v3606
    %4645 = vst [vmem:[#allocation10 + $0x1f0] sm:$0xff] %v3607
    %4646 = vst [vmem:[#allocation10 + $0x218] sm:$0xff] %v3608
    %4647 = vst [vmem:[#allocation10 + $0x240] sm:$0xff] %v3609
    %4648 = vst [vmem:[#allocation10 + $0x268] sm:$0xff] %v3610
    %4649 = vst [vmem:[#allocation10 + $0x18] sm:$0xff] %v1691
    %4650 = vst [vmem:[#allocation10 + $0x40] sm:$0xff] %v1692
    %4651 = vst [vmem:[#allocation10 + $0x68] sm:$0xff] %v1693
    %4652 = vst [vmem:[#allocation10 + $0x90] sm:$0xff] %v1694
    %4653 = vst [vmem:[#allocation10 + $0xb8] sm:$0xff] %v1695
    %4654 = vst [vmem:[#allocation10 + $0xe0] sm:$0xff] %v1696
    %4655 = vst [vmem:[#allocation10 + $0x108] sm:$0xff] %v1697
    %4656 = vst [vmem:[#allocation10 + $0x130] sm:$0xff] %v1698
    %4657 = vst [vmem:[#allocation10 + $0x158] sm:$0xff] %v1699
    %4658 = vst [vmem:[#allocation10 + $0x180] sm:$0xff] %v1700
    %4659 = vst [vmem:[#allocation10 + $0x1a8] sm:$0xff] %v1701
    %4660 = vst [vmem:[#allocation10 + $0x1d0] sm:$0xff] %v1702
    %4661 = vst [vmem:[#allocation10 + $0x1f8] sm:$0xff] %v1703
    %4662 = vst [vmem:[#allocation10 + $0x220] sm:$0xff] %v1704
    %4663 = vst [vmem:[#allocation10 + $0x248] sm:$0xff] %v1705
    %4664 = vst [vmem:[#allocation10 + $0x270] sm:$0xff] %v1706
    %4665 = vst [vmem:[#allocation10 + $0x20] sm:$0xff] %v2126
    %4666 = vst [vmem:[#allocation10 + $0x48] sm:$0xff] %v2127
    %4667 = vst [vmem:[#allocation10 + $0x70] sm:$0xff] %v2128
    %4668 = vst [vmem:[#allocation10 + $0x98] sm:$0xff] %v2129
    %4669 = vst [vmem:[#allocation10 + $0xc0] sm:$0xff] %v2130
    %4670 = vst [vmem:[#allocation10 + $0xe8] sm:$0xff] %v2131
    %4671 = vst [vmem:[#allocation10 + $0x110] sm:$0xff] %v2132
    %4672 = vst [vmem:[#allocation10 + $0x138] sm:$0xff] %v2133
    %4673 = vst [vmem:[#allocation10 + $0x160] sm:$0xff] %v2134
    %4674 = vst [vmem:[#allocation10 + $0x188] sm:$0xff] %v2135
    %4675 = vst [vmem:[#allocation10 + $0x1b0] sm:$0xff] %v2136
    %4676 = vst [vmem:[#allocation10 + $0x1d8] sm:$0xff] %v2137
    %4677 = vst [vmem:[#allocation10 + $0x200] sm:$0xff] %v2138
    %4678 = vst [vmem:[#allocation10 + $0x228] sm:$0xff] %v2139
    %4679 = vst [vmem:[#allocation10 + $0x250] sm:$0xff] %v2140
    %4680 = vst [vmem:[#allocation10 + $0x278] sm:$0xff] %v2141
    // Predicated region
    $region38: #{tpu_custom_call.1} parent=1 // pred_check
      _
    $region39: #{tpu_custom_call.1} parent=1 // pred_check_branch
      %4682 = sbr.rel (0) target = $region41
    $region40: #{tpu_custom_call.1} parent=1 // pred_region
      %s4684 = ssub.s32 10240, 10240
      %4685 = vsyncadd [#allocation4], %s4684
      %s4686 = sshll.u32 [#allocation10], 4
      %s4687 = int_to_ptr.vmem [resolvable:$true] %s4686
      %4692 = dma.vmem_to_hbm [thread:$0]  %s4687, 10240, %s5, [#allocation4], 640, 640, 40
    $region41: #{tpu_custom_call.1} parent=1 // pred_fallthru
      _
    // Predicated region
    $region42: #{tpu_custom_call.1} parent=1 // pred_check
      _
    $region43: #{tpu_custom_call.1} parent=1 // pred_check_branch
      %4694 = sbr.rel (0) target = $region45
    $region44: #{tpu_custom_call.1} parent=1 // pred_region
      %4695 = dma.done [#allocation4], 10240
    $region45: #{tpu_custom_call.1} parent=1 // pred_fallthru
      _
    %4696 = vsyncpa [#allocation3], 1
    %4697 = vsyncpa [#allocation6], 1
    %4698 = vsyncpa [#allocation9], 1
    %4699 = vsyncpa [#allocation4], 1

</llo_original>
